<compile_context>
chip_gen: v5e
topology: v5e:2x2
jax: 0.10.0
libtpu: 0.0.40
codegen_flags: <defaults>
</compile_context>

<pallas_src>
import functools

import jax
import jax.numpy as jnp
from jax.experimental import pallas as pl
from jax.experimental.pallas import tpu as pltpu


_EPS = 1e-6
_NEG = -1e9


# ----------------------------- in-kernel helpers ----------------------------


def _rms_norm(x, w):
    # T5 LayerNorm: RMS only, no mean subtraction, no bias.  f32 vector math.
    var = jnp.mean(x * x, axis=-1, keepdims=True)
    return x * jax.lax.rsqrt(var + _EPS) * w


def _mxu(a, w_bf16):
    # activation cast to bf16 at the MXU boundary, weight already bf16,
    # f32 accumulation.
    return jnp.dot(a.astype(jnp.bfloat16), w_bf16,
                   preferred_element_type=jnp.float32)


def _bmm(a, b_bf16):
    # head-batched matmul (H, M, K) x (H, K, N) -> (H, M, N), f32 accumulate.
    return jnp.einsum('hmk,hkn->hmn', a.astype(jnp.bfloat16), b_bf16,
                      preferred_element_type=jnp.float32)


def _softmax(s):
    # f32 softmax; approx reciprocal goes to the EUP slot.
    s = s - jnp.max(s, axis=-1, keepdims=True)
    p = jnp.exp(s)
    return p * pl.reciprocal(jnp.sum(p, axis=-1, keepdims=True), approx=True)


def _attend(q, k, v, bias):
    # q/k/v: [H, Nq|Nk, dk] f32 (head-major); bias broadcastable to [H, Nq, Nk].
    # T5 convention: NO 1/sqrt(d_kv) scaling of the logits.
    s = jnp.einsum('hqd,hkd->hqk', q.astype(jnp.bfloat16),
                   k.astype(jnp.bfloat16),
                   preferred_element_type=jnp.float32)
    p = _softmax(s + bias)
    return jnp.einsum('hqk,hkd->hqd', p.astype(jnp.bfloat16),
                      v.astype(jnp.bfloat16),
                      preferred_element_type=jnp.float32)


def _mha_out(ctx, wo3_bf16):
    # fused output projection: one batched matmul + sum over heads.
    return jnp.sum(_bmm(ctx, wo3_bf16), axis=0)


def _embed_lookup(ids_col, embed_bf16, N, V):
    # one-hot (N, V) @ (V, D) on the MXU  ==  embedding gather (up to bf16).
    onehot = (ids_col == jax.lax.broadcasted_iota(jnp.int32, (N, V), 1))
    return jnp.dot(onehot.astype(jnp.bfloat16), embed_bf16,
                   preferred_element_type=jnp.float32)


# ----------------------------- fused stack kernels --------------------------


def _encoder_stack_kernel(ids_ref, embed_ref, bias_ref, fln_ref,
                          ln1_ref, wqkv_ref, woa_ref,
                          ln2_ref, wi_ref, wof_ref,
                          o_ref, x_sc, *, N, H, dk, D, V, NL):
    l = pl.program_id(0)

    @pl.when(l == 0)
    def _():  # embed tokens into the VMEM-resident residual stream
        x_sc[...] = _embed_lookup(ids_ref[...], embed_ref[...], N, V)

    x = x_sc[...]

    # ---- self-attention sub-block:  x += O(attn(RMSNorm(x))) ----
    xn = jnp.broadcast_to(_rms_norm(x, ln1_ref[0]).astype(jnp.bfloat16),
                          (H, N, D))
    qkv = _bmm(xn, wqkv_ref[0])                          # [H, N, 3*dk]
    ctx = _attend(qkv[:, :, :dk], qkv[:, :, dk:2 * dk], qkv[:, :, 2 * dk:],
                  bias_ref[...])                         # rel-pos + batch mask
    x = x + _mha_out(ctx, woa_ref[0])

    # ---- FFN sub-block:  x += relu(RMSNorm(x) @ wi) @ wo ----
    h = jnp.maximum(_mxu(_rms_norm(x, ln2_ref[0]), wi_ref[0]), 0.0)
    x = x + _mxu(h, wof_ref[0])
    x_sc[...] = x

    @pl.when(l == NL - 1)
    def _():  # encoder final RMSNorm, written once at the end of the stack
        o_ref[...] = _rms_norm(x, fln_ref[...])


def _decoder_stack_kernel(ids_ref, enc_ref, embed_ref, bias_ref, xmask_ref,
                          fln_ref, embt_ref,
                          ln1_ref, wqkv_ref, wos_ref,
                          ln2_ref, wq_ref, wkv_ref, woc_ref,
                          ln3_ref, wi_ref, wof_ref,
                          o_ref, x_sc, *, N, Nk, H, dk, D, V, NL, scale):
    l = pl.program_id(0)

    @pl.when(l == 0)
    def _():
        x_sc[...] = _embed_lookup(ids_ref[...], embed_ref[...], N, V)

    x = x_sc[...]

    # ---- causal self-attention (rel-pos + causal + batch mask in bias) ----
    xn = jnp.broadcast_to(_rms_norm(x, ln1_ref[0]).astype(jnp.bfloat16),
                          (H, N, D))
    qkv = _bmm(xn, wqkv_ref[0])
    ctx = _attend(qkv[:, :, :dk], qkv[:, :, dk:2 * dk], qkv[:, :, 2 * dk:],
                  bias_ref[...])
    x = x + _mha_out(ctx, wos_ref[0])

    # ---- cross-attention over the encoder output (zero rel-pos bias) ----
    xn = jnp.broadcast_to(_rms_norm(x, ln2_ref[0]).astype(jnp.bfloat16),
                          (H, N, D))
    enc = jnp.broadcast_to(enc_ref[...].astype(jnp.bfloat16), (H, Nk, D))
    q = _bmm(xn, wq_ref[0])                              # [H, N, dk]
    kv = _bmm(enc, wkv_ref[0])                           # [H, Nk, 2*dk]
    ctx = _attend(q, kv[:, :, :dk], kv[:, :, dk:], xmask_ref[...][None])
    x = x + _mha_out(ctx, woc_ref[0])

    # ---- FFN ----
    h = jnp.maximum(_mxu(_rms_norm(x, ln3_ref[0]), wi_ref[0]), 0.0)
    x = x + _mxu(h, wof_ref[0])
    x_sc[...] = x

    @pl.when(l == NL - 1)
    def _():  # final RMSNorm + tied-embedding rescale + LM head (lane dense)
        xf = _rms_norm(x, fln_ref[...]) * scale
        o_ref[...] = _mxu(xf, embt_ref[...])


# ----------------------------- pallas_call wrappers -------------------------


def encoder_forward(ids_col, params, cfg):
    N = ids_col.shape[0]
    D, H, dk = cfg.d_model, cfg.num_heads, cfg.d_kv
    F, V, NL = cfg.d_ff, cfg.vocab_size, cfg.num_layers
    p = params
    kern = functools.partial(_encoder_stack_kernel,
                             N=N, H=H, dk=dk, D=D, V=V, NL=NL)
    c2 = lambda l: (0, 0)
    c3 = lambda l: (0, 0, 0)
    s3 = lambda l: (l, 0, 0)
    s4 = lambda l: (l, 0, 0, 0)
    return pl.pallas_call(
        kern,
        out_shape=jax.ShapeDtypeStruct((N, D), jnp.float32),
        grid_spec=pltpu.PrefetchScalarGridSpec(
            num_scalar_prefetch=0,
            grid=(NL,),
            in_specs=[
                pl.BlockSpec((N, 1), c2),                  # token ids (int32)
                pl.BlockSpec((V, D), c2),                  # embedding (bf16)
                pl.BlockSpec((H, N, N), c3),               # rel-pos + batch bias
                pl.BlockSpec((1, D), c2),                  # final LN weight
                pl.BlockSpec((1, 1, D), s3),               # ln1   (per layer)
                pl.BlockSpec((1, H, D, 3 * dk), s4),       # wqkv  (per layer)
                pl.BlockSpec((1, H, dk, D), s4),           # wo    (per layer)
                pl.BlockSpec((1, 1, D), s3),               # ln2   (per layer)
                pl.BlockSpec((1, D, F), s3),               # ffn wi
                pl.BlockSpec((1, F, D), s3),               # ffn wo
            ],
            out_specs=pl.BlockSpec((N, D), c2),
            scratch_shapes=[pltpu.VMEM((N, D), jnp.float32)],
        ),
        compiler_params=pltpu.CompilerParams(
            dimension_semantics=("arbitrary",)),
    )(ids_col, p["embed"], p["enc_bias"], p["enc_final_ln"],
      p["enc_ln1"], p["enc_wqkv"], p["enc_wo_attn"],
      p["enc_ln2"], p["enc_wi"], p["enc_wo_ffn"])


def decoder_forward(ids_col, enc_out, params, cfg):
    N = ids_col.shape[0]
    Nk = enc_out.shape[0]
    D, H, dk = cfg.d_model, cfg.num_heads, cfg.d_kv
    F, V, NL = cfg.d_ff, cfg.vocab_size, cfg.num_layers
    p = params
    kern = functools.partial(_decoder_stack_kernel,
                             N=N, Nk=Nk, H=H, dk=dk, D=D, V=V, NL=NL,
                             scale=cfg.d_model ** -0.5)
    c2 = lambda l: (0, 0)
    c3 = lambda l: (0, 0, 0)
    s3 = lambda l: (l, 0, 0)
    s4 = lambda l: (l, 0, 0, 0)
    return pl.pallas_call(
        kern,
        out_shape=jax.ShapeDtypeStruct((N, V), jnp.float32),
        grid_spec=pltpu.PrefetchScalarGridSpec(
            num_scalar_prefetch=0,
            grid=(NL,),
            in_specs=[
                pl.BlockSpec((N, 1), c2),                  # decoder ids
                pl.BlockSpec((Nk, D), c2),                 # encoder output
                pl.BlockSpec((V, D), c2),                  # embedding (bf16)
                pl.BlockSpec((H, N, N), c3),               # self bias (+causal)
                pl.BlockSpec((N, Nk), c2),                 # cross batch mask
                pl.BlockSpec((1, D), c2),                  # final LN weight
                pl.BlockSpec((D, V), c2),                  # tied LM head (bf16)
                pl.BlockSpec((1, 1, D), s3),               # ln1
                pl.BlockSpec((1, H, D, 3 * dk), s4),       # self wqkv
                pl.BlockSpec((1, H, dk, D), s4),           # self wo
                pl.BlockSpec((1, 1, D), s3),               # ln2
                pl.BlockSpec((1, H, D, dk), s4),           # cross wq
                pl.BlockSpec((1, H, D, 2 * dk), s4),       # cross wkv
                pl.BlockSpec((1, H, dk, D), s4),           # cross wo
                pl.BlockSpec((1, 1, D), s3),               # ln3
                pl.BlockSpec((1, D, F), s3),               # ffn wi
                pl.BlockSpec((1, F, D), s3),               # ffn wo
            ],
            out_specs=pl.BlockSpec((N, V), c2),
            scratch_shapes=[pltpu.VMEM((N, D), jnp.float32)],
        ),
        compiler_params=pltpu.CompilerParams(
            dimension_semantics=("arbitrary",)),
    )(ids_col, enc_out, p["embed"], p["dec_bias"], p["cross_mask"],
      p["dec_final_ln"], p["embed_T"],
      p["dec_ln1"], p["dec_wqkv"], p["dec_wo_self"],
      p["dec_ln2"], p["dec_wq"], p["dec_wkv"], p["dec_wo_cross"],
      p["dec_ln3"], p["dec_wi"], p["dec_wo_ffn"])


def merge_t5_forward(params, input_ids, decoder_input_ids, cfg):
    B, Le = input_ids.shape
    _, Ld = decoder_input_ids.shape
    enc_ids = input_ids.reshape(B * Le, 1)
    dec_ids = decoder_input_ids.reshape(B * Ld, 1)
    enc_out = encoder_forward(enc_ids, params, cfg)           # [B*Le, D]
    logits = decoder_forward(dec_ids, enc_out, params, cfg)   # [B*Ld, V]
    return logits.reshape(B, Ld, cfg.vocab_size)


# ----------------------------- config / params ------------------------------


class Config:
    vocab_size = 128
    d_model = 32
    d_kv = 8
    num_heads = 4
    d_ff = 64
    num_layers = 2
    rel_buckets = 32
    rel_max_distance = 128


def relative_position_bucket(rel_pos, bidirectional, num_buckets, max_distance):
    ret = jnp.zeros_like(rel_pos)
    if bidirectional:
        num_buckets = num_buckets // 2
        ret = ret + (rel_pos > 0).astype(jnp.int32) * num_buckets
        rel_pos = jnp.abs(rel_pos)
    else:
        rel_pos = -jnp.minimum(rel_pos, 0)
    max_exact = num_buckets // 2
    is_small = rel_pos < max_exact
    rel_large = max_exact + (
        jnp.log(jnp.maximum(rel_pos, 1).astype(jnp.float32) / max_exact)
        / jnp.log(max_distance / max_exact)
        * (num_buckets - max_exact)
    ).astype(jnp.int32)
    rel_large = jnp.minimum(rel_large, num_buckets - 1)
    return ret + jnp.where(is_small, rel_pos, rel_large)


def compute_position_bias(Lq, Lk, table, bidirectional, cfg):
    ctx = jnp.arange(Lq, dtype=jnp.int32)[:, None]
    mem = jnp.arange(Lk, dtype=jnp.int32)[None, :]
    buckets = relative_position_bucket(mem - ctx, bidirectional,
                                       cfg.rel_buckets, cfg.rel_max_distance)
    vals = jnp.take(table, buckets, axis=0)          # [Lq, Lk, H]
    return vals.transpose(2, 0, 1)                   # [H, Lq, Lk]


def _batch_block_mask(B, Lq, Lk):
    # -1e9 between rows/cols of different batch elements (batch folded into N).
    bq = jnp.repeat(jnp.arange(B), Lq)
    bk = jnp.repeat(jnp.arange(B), Lk)
    return jnp.where(bq[:, None] == bk[None, :], 0.0, _NEG).astype(jnp.float32)


def init_params(key, cfg, B, Le, Ld):
    keys = iter(jax.random.split(key, 64))

    def nrm(shape, scale=0.05, dtype=jnp.bfloat16):
        w = scale * jax.random.normal(next(keys), shape, jnp.float32)
        return w.astype(dtype)

    D, H, dk = cfg.d_model, cfg.num_heads, cfg.d_kv
    F, V, NL = cfg.d_ff, cfg.vocab_size, cfg.num_layers
    ones3 = jnp.ones((NL, 1, D), jnp.float32)
    ones2 = jnp.ones((1, D), jnp.float32)

    # Relative-position bias tables (shared across the stack, as in HF T5 where
    # only layer 0 owns the table), expanded ONCE at init into dense f32
    # [H, B*L, B*L] additive biases with the batch block-diagonal mask (and the
    # causal mask for the decoder) folded in.  Depends only on (B, Le, Ld).
    enc_tbl = nrm((cfg.rel_buckets, H), dtype=jnp.float32)
    dec_tbl = nrm((cfg.rel_buckets, H), dtype=jnp.float32)
    enc_pos = compute_position_bias(Le, Le, enc_tbl, True, cfg)
    dec_pos = compute_position_bias(Ld, Ld, dec_tbl, False, cfg)
    causal = jnp.where(jnp.arange(Ld)[None, :] > jnp.arange(Ld)[:, None],
                       _NEG, 0.0).astype(jnp.float32)
    enc_bias = jnp.tile(enc_pos, (1, B, B)) + _batch_block_mask(B, Le, Le)[None]
    dec_bias = (jnp.tile(dec_pos + causal[None], (1, B, B))
                + _batch_block_mask(B, Ld, Ld)[None])
    cross_mask = _batch_block_mask(B, Ld, Le)

    # Tied token embedding: stored bf16 for the MXU; embed_T is the same matrix
    # pre-transposed once for the LM head (inference-only duplicate storage).
    embed_f32 = jax.random.normal(next(keys), (V, D), jnp.float32)

    return {
        "embed": embed_f32.astype(jnp.bfloat16),
        "embed_T": embed_f32.T.astype(jnp.bfloat16),
        "enc_bias": enc_bias, "dec_bias": dec_bias, "cross_mask": cross_mask,
        "enc_final_ln": ones2, "dec_final_ln": ones2,
        # encoder layers, stacked along a leading num_layers axis (bf16 weights)
        "enc_ln1": ones3,
        "enc_wqkv": nrm((NL, H, D, 3 * dk)),
        "enc_wo_attn": nrm((NL, H, dk, D)),
        "enc_ln2": ones3,
        "enc_wi": nrm((NL, D, F)),
        "enc_wo_ffn": nrm((NL, F, D)),
        # decoder layers
        "dec_ln1": ones3,
        "dec_wqkv": nrm((NL, H, D, 3 * dk)),
        "dec_wo_self": nrm((NL, H, dk, D)),
        "dec_ln2": ones3,
        "dec_wq": nrm((NL, H, D, dk)),
        "dec_wkv": nrm((NL, H, D, 2 * dk)),
        "dec_wo_cross": nrm((NL, H, dk, D)),
        "dec_ln3": ones3,
        "dec_wi": nrm((NL, D, F)),
        "dec_wo_ffn": nrm((NL, F, D)),
    }


# ----------------------------- main ------------------------------------------


if __name__ == "__main__":
    cfg = Config()
    B, Le, Ld = 2, 8, 8

    key = jax.random.PRNGKey(0)
    k_param, k_enc, k_dec = jax.random.split(key, 3)

    params = init_params(k_param, cfg, B, Le, Ld)
    input_ids = jax.random.randint(k_enc, (B, Le), 0, cfg.vocab_size,
                                   dtype=jnp.int32)
    decoder_input_ids = jax.random.randint(k_dec, (B, Ld), 0, cfg.vocab_size,
                                           dtype=jnp.int32)

    fwd = jax.jit(functools.partial(merge_t5_forward, cfg=cfg))
    logits = fwd(params, input_ids, decoder_input_ids)
    jax.block_until_ready(logits)

    assert logits.shape == (B, Ld, cfg.vocab_size)
    assert bool(jnp.all(jnp.isfinite(logits)))
    print("KERNEL_OK")
</pallas_src>

<mosaic_0001>
module attributes {stable_mosaic.version = 11 : i64} {
  func.func @_decoder_stack_kernel(%arg0: i32, %arg1: memref<16x1xi32, #tpu.memory_space<vmem>>, %arg2: memref<16x32xf32, #tpu.memory_space<vmem>>, %arg3: memref<128x32xbf16, #tpu.memory_space<vmem>>, %arg4: memref<4x16x16xf32, #tpu.memory_space<vmem>>, %arg5: memref<16x16xf32, #tpu.memory_space<vmem>>, %arg6: memref<1x32xf32, #tpu.memory_space<vmem>>, %arg7: memref<32x128xbf16, #tpu.memory_space<vmem>>, %arg8: memref<1x1x32xf32, #tpu.memory_space<vmem>>, %arg9: memref<1x4x32x24xbf16, #tpu.memory_space<vmem>>, %arg10: memref<1x4x8x32xbf16, #tpu.memory_space<vmem>>, %arg11: memref<1x1x32xf32, #tpu.memory_space<vmem>>, %arg12: memref<1x4x32x8xbf16, #tpu.memory_space<vmem>>, %arg13: memref<1x4x32x16xbf16, #tpu.memory_space<vmem>>, %arg14: memref<1x4x8x32xbf16, #tpu.memory_space<vmem>>, %arg15: memref<1x1x32xf32, #tpu.memory_space<vmem>>, %arg16: memref<1x32x64xbf16, #tpu.memory_space<vmem>>, %arg17: memref<1x64x32xbf16, #tpu.memory_space<vmem>>, %arg18: memref<16x128xf32, #tpu.memory_space<vmem>>, %arg19: memref<16x32xf32, #tpu.memory_space<vmem>>) attributes {dimension_semantics = [#tpu.dimension_semantics<arbitrary>], iteration_bounds = array<i64: 2>, scalar_prefetch = 0 : i64, scratch_operands = 1 : i64, tpu.core_type = #tpu.core_type<tc>, window_params = [{pipeline_mode = #tpu.pipeline_mode<synchronous>, transform_indices = @transform_0, window_bounds = array<i64: 16, 1>}, {pipeline_mode = #tpu.pipeline_mode<synchronous>, transform_indices = @transform_1, window_bounds = array<i64: 16, 32>}, {pipeline_mode = #tpu.pipeline_mode<synchronous>, transform_indices = @transform_2, window_bounds = array<i64: 128, 32>}, {pipeline_mode = #tpu.pipeline_mode<synchronous>, transform_indices = @transform_3, window_bounds = array<i64: 4, 16, 16>}, {pipeline_mode = #tpu.pipeline_mode<synchronous>, transform_indices = @transform_4, window_bounds = array<i64: 16, 16>}, {pipeline_mode = #tpu.pipeline_mode<synchronous>, transform_indices = @transform_5, window_bounds = array<i64: 1, 32>}, {pipeline_mode = #tpu.pipeline_mode<synchronous>, transform_indices = @transform_6, window_bounds = array<i64: 32, 128>}, {transform_indices = @transform_7, window_bounds = array<i64: 1, 1, 32>}, {transform_indices = @transform_8, window_bounds = array<i64: 1, 4, 32, 24>}, {transform_indices = @transform_9, window_bounds = array<i64: 1, 4, 8, 32>}, {transform_indices = @transform_10, window_bounds = array<i64: 1, 1, 32>}, {transform_indices = @transform_11, window_bounds = array<i64: 1, 4, 32, 8>}, {transform_indices = @transform_12, window_bounds = array<i64: 1, 4, 32, 16>}, {transform_indices = @transform_13, window_bounds = array<i64: 1, 4, 8, 32>}, {transform_indices = @transform_14, window_bounds = array<i64: 1, 1, 32>}, {transform_indices = @transform_15, window_bounds = array<i64: 1, 32, 64>}, {transform_indices = @transform_16, window_bounds = array<i64: 1, 64, 32>}, {pipeline_mode = #tpu.pipeline_mode<synchronous>, transform_indices = @transform_17, window_bounds = array<i64: 16, 128>}]} {
    %c0_i32 = arith.constant 0 : i32
    %0 = arith.cmpi eq, %arg0, %c0_i32 : i32
    %1 = arith.extui %0 : i1 to i32
    %c0_i32_0 = arith.constant 0 : i32
    %2 = arith.cmpi ne, %1, %c0_i32_0 : i32
    scf.if %2 {
      %c0_73 = arith.constant 0 : index
      %c0_74 = arith.constant 0 : index
      %135 = vector.load %arg1[%c0_73, %c0_74] : memref<16x1xi32, #tpu.memory_space<vmem>>, vector<16x1xi32>
      %c0_75 = arith.constant 0 : index
      %c0_76 = arith.constant 0 : index
      %136 = vector.load %arg3[%c0_75, %c0_76] : memref<128x32xbf16, #tpu.memory_space<vmem>>, vector<128x32xbf16>
      %137 = tpu.iota {dimensions = array<i32: 1>} : vector<16x128xi32>
      %138 = vector.broadcast %135 : vector<16x1xi32> to vector<16x128xi32>
      %139 = arith.cmpi eq, %138, %137 : vector<16x128xi32>
      %140 = arith.extui %139 : vector<16x128xi1> to vector<16x128xi32>
      %141 = arith.sitofp %140 : vector<16x128xi32> to vector<16x128xf32>
      %142 = arith.truncf %141 : vector<16x128xf32> to vector<16x128xbf16>
      %cst_77 = arith.constant dense<0.000000e+00> : vector<16x32xf32>
      %143 = tpu.matmul %142, %136, %cst_77 {dimension_numbers = #tpu.dot_dimension_numbers<[1], [0], [0], [1], [0, 0, 1, 1], [], []>} : vector<16x128xbf16>, vector<128x32xbf16>, vector<16x32xf32> -> vector<16x32xf32>
      %c0_78 = arith.constant 0 : index
      %c0_79 = arith.constant 0 : index
      %144 = vector.load %arg19[%c0_78, %c0_79] : memref<16x32xf32, #tpu.memory_space<vmem>>, vector<16x32xf32>
      tpu.vector_store %arg19[%c0_78, %c0_79], %143 {strides = array<i32>} : memref<16x32xf32, #tpu.memory_space<vmem>>, vector<16x32xf32>,
    } else {
    }
    %c0 = arith.constant 0 : index
    %c0_1 = arith.constant 0 : index
    %3 = vector.load %arg19[%c0, %c0_1] : memref<16x32xf32, #tpu.memory_space<vmem>>, vector<16x32xf32>
    %c0_2 = arith.constant 0 : index
    %c0_3 = arith.constant 0 : index
    %c0_4 = arith.constant 0 : index
    %4 = vector.load %arg8[%c0_2, %c0_3, %c0_4] : memref<1x1x32xf32, #tpu.memory_space<vmem>>, vector<1x1x32xf32>
    %5 = vector.shape_cast %4 : vector<1x1x32xf32> to vector<1x32xf32>
    %6 = arith.mulf %3, %3 : vector<16x32xf32>
    %cst = arith.constant dense<0.000000e+00> : vector<16xf32>
    %7 = vector.multi_reduction <add>, %6, %cst [1] : vector<16x32xf32> to vector<16xf32>
    %8 = vector.shape_cast %7 : vector<16xf32> to vector<16x1xf32>
    %cst_5 = arith.constant 3.200000e+01 : f32
    %9 = vector.broadcast %cst_5 : f32 to vector<16x1xf32>
    %10 = arith.divf %8, %9 : vector<16x1xf32>
    %cst_6 = arith.constant 9.99999997E-7 : f32
    %11 = vector.broadcast %cst_6 : f32 to vector<16x1xf32>
    %12 = arith.addf %10, %11 : vector<16x1xf32>
    %13 = math.rsqrt %12 : vector<16x1xf32>
    %14 = vector.broadcast %13 : vector<16x1xf32> to vector<16x32xf32>
    %15 = arith.mulf %3, %14 : vector<16x32xf32>
    %16 = vector.broadcast %5 : vector<1x32xf32> to vector<16x32xf32>
    %17 = arith.mulf %15, %16 : vector<16x32xf32>
    %18 = arith.truncf %17 : vector<16x32xf32> to vector<16x32xbf16>
    %19 = vector.shape_cast %18 : vector<16x32xbf16> to vector<1x16x32xbf16>
    %20 = vector.broadcast %19 : vector<1x16x32xbf16> to vector<4x16x32xbf16>
    %c0_7 = arith.constant 0 : index
    %c0_8 = arith.constant 0 : index
    %c0_9 = arith.constant 0 : index
    %c0_10 = arith.constant 0 : index
    %21 = vector.load %arg9[%c0_7, %c0_8, %c0_9, %c0_10] : memref<1x4x32x24xbf16, #tpu.memory_space<vmem>>, vector<1x4x32x24xbf16>
    %22 = vector.shape_cast %21 : vector<1x4x32x24xbf16> to vector<4x32x24xbf16>
    "tpu.trace_start"() <{level = 10 : i32, message = "hmk,hkn->hmn"}> : () -> ()
    %cst_11 = arith.constant dense<0.000000e+00> : vector<4x16x24xf32>
    %23 = tpu.matmul %20, %22, %cst_11 {dimension_numbers = #tpu.dot_dimension_numbers<[2], [1], [1], [2], [0, 0, 0, 1, 1, 2], [0], [0]>} : vector<4x16x32xbf16>, vector<4x32x24xbf16>, vector<4x16x24xf32> -> vector<4x16x24xf32>
    "tpu.trace_stop"() : () -> ()
    %24 = vector.extract_strided_slice %23 {offsets = [0, 0, 0], sizes = [4, 16, 8], strides = [1, 1, 1]} : vector<4x16x24xf32> to vector<4x16x8xf32>
    %25 = vector.extract_strided_slice %23 {offsets = [0, 0, 8], sizes = [4, 16, 8], strides = [1, 1, 1]} : vector<4x16x24xf32> to vector<4x16x8xf32>
    %26 = vector.extract_strided_slice %23 {offsets = [0, 0, 16], sizes = [4, 16, 8], strides = [1, 1, 1]} : vector<4x16x24xf32> to vector<4x16x8xf32>
    %c0_12 = arith.constant 0 : index
    %c0_13 = arith.constant 0 : index
    %c0_14 = arith.constant 0 : index
    %27 = vector.load %arg4[%c0_12, %c0_13, %c0_14] : memref<4x16x16xf32, #tpu.memory_space<vmem>>, vector<4x16x16xf32>
    %28 = arith.truncf %24 : vector<4x16x8xf32> to vector<4x16x8xbf16>
    %29 = arith.truncf %25 : vector<4x16x8xf32> to vector<4x16x8xbf16>
    "tpu.trace_start"() <{level = 10 : i32, message = "hqd,hkd->hqk"}> : () -> ()
    %cst_15 = arith.constant dense<0.000000e+00> : vector<4x16x16xf32>
    %30 = tpu.matmul %28, %29, %cst_15 {dimension_numbers = #tpu.dot_dimension_numbers<[2], [2], [1], [1], [0, 0, 0, 1, 1, 1], [0], [0]>} : vector<4x16x8xbf16>, vector<4x16x8xbf16>, vector<4x16x16xf32> -> vector<4x16x16xf32>
    "tpu.trace_stop"() : () -> ()
    %31 = arith.addf %30, %27 : vector<4x16x16xf32>
    %cst_16 = arith.constant dense<0xFF800000> : vector<4x16xf32>
    %32 = vector.multi_reduction <maximumf>, %31, %cst_16 [2] : vector<4x16x16xf32> to vector<4x16xf32>
    %33 = vector.shape_cast %32 : vector<4x16xf32> to vector<4x16x1xf32>
    %34 = vector.broadcast %33 : vector<4x16x1xf32> to vector<4x16x16xf32>
    %35 = arith.subf %31, %34 : vector<4x16x16xf32>
    %36 = math.exp %35 : vector<4x16x16xf32>
    %cst_17 = arith.constant dense<0.000000e+00> : vector<4x16xf32>
    %37 = vector.multi_reduction <add>, %36, %cst_17 [2] : vector<4x16x16xf32> to vector<4x16xf32>
    %38 = vector.shape_cast %37 : vector<4x16xf32> to vector<4x16x1xf32>
    %39 = tpu.reciprocal %38 {approx = true} : vector<4x16x1xf32> -> vector<4x16x1xf32>
    %40 = vector.broadcast %39 : vector<4x16x1xf32> to vector<4x16x16xf32>
    %41 = arith.mulf %36, %40 : vector<4x16x16xf32>
    %42 = arith.truncf %41 : vector<4x16x16xf32> to vector<4x16x16xbf16>
    %43 = arith.truncf %26 : vector<4x16x8xf32> to vector<4x16x8xbf16>
    "tpu.trace_start"() <{level = 10 : i32, message = "hqk,hkd->hqd"}> : () -> ()
    %cst_18 = arith.constant dense<0.000000e+00> : vector<4x16x8xf32>
    %44 = tpu.matmul %42, %43, %cst_18 {dimension_numbers = #tpu.dot_dimension_numbers<[2], [1], [1], [2], [0, 0, 0, 1, 1, 2], [0], [0]>} : vector<4x16x16xbf16>, vector<4x16x8xbf16>, vector<4x16x8xf32> -> vector<4x16x8xf32>
    "tpu.trace_stop"() : () -> ()
    %c0_19 = arith.constant 0 : index
    %c0_20 = arith.constant 0 : index
    %c0_21 = arith.constant 0 : index
    %c0_22 = arith.constant 0 : index
    %45 = vector.load %arg10[%c0_19, %c0_20, %c0_21, %c0_22] : memref<1x4x8x32xbf16, #tpu.memory_space<vmem>>, vector<1x4x8x32xbf16>
    %46 = vector.shape_cast %45 : vector<1x4x8x32xbf16> to vector<4x8x32xbf16>
    %47 = arith.truncf %44 : vector<4x16x8xf32> to vector<4x16x8xbf16>
    "tpu.trace_start"() <{level = 10 : i32, message = "hmk,hkn->hmn"}> : () -> ()
    %cst_23 = arith.constant dense<0.000000e+00> : vector<4x16x32xf32>
    %48 = tpu.matmul %47, %46, %cst_23 {dimension_numbers = #tpu.dot_dimension_numbers<[2], [1], [1], [2], [0, 0, 0, 1, 1, 2], [0], [0]>} : vector<4x16x8xbf16>, vector<4x8x32xbf16>, vector<4x16x32xf32> -> vector<4x16x32xf32>
    "tpu.trace_stop"() : () -> ()
    %cst_24 = arith.constant dense<0.000000e+00> : vector<16x32xf32>
    %49 = vector.multi_reduction <add>, %48, %cst_24 [0] : vector<4x16x32xf32> to vector<16x32xf32>
    %50 = arith.addf %3, %49 : vector<16x32xf32>
    %c0_25 = arith.constant 0 : index
    %c0_26 = arith.constant 0 : index
    %c0_27 = arith.constant 0 : index
    %51 = vector.load %arg11[%c0_25, %c0_26, %c0_27] : memref<1x1x32xf32, #tpu.memory_space<vmem>>, vector<1x1x32xf32>
    %52 = vector.shape_cast %51 : vector<1x1x32xf32> to vector<1x32xf32>
    %53 = arith.mulf %50, %50 : vector<16x32xf32>
    %cst_28 = arith.constant dense<0.000000e+00> : vector<16xf32>
    %54 = vector.multi_reduction <add>, %53, %cst_28 [1] : vector<16x32xf32> to vector<16xf32>
    %55 = vector.shape_cast %54 : vector<16xf32> to vector<16x1xf32>
    %cst_29 = arith.constant 3.200000e+01 : f32
    %56 = vector.broadcast %cst_29 : f32 to vector<16x1xf32>
    %57 = arith.divf %55, %56 : vector<16x1xf32>
    %cst_30 = arith.constant 9.99999997E-7 : f32
    %58 = vector.broadcast %cst_30 : f32 to vector<16x1xf32>
    %59 = arith.addf %57, %58 : vector<16x1xf32>
    %60 = math.rsqrt %59 : vector<16x1xf32>
    %61 = vector.broadcast %60 : vector<16x1xf32> to vector<16x32xf32>
    %62 = arith.mulf %50, %61 : vector<16x32xf32>
    %63 = vector.broadcast %52 : vector<1x32xf32> to vector<16x32xf32>
    %64 = arith.mulf %62, %63 : vector<16x32xf32>
    %65 = arith.truncf %64 : vector<16x32xf32> to vector<16x32xbf16>
    %66 = vector.shape_cast %65 : vector<16x32xbf16> to vector<1x16x32xbf16>
    %67 = vector.broadcast %66 : vector<1x16x32xbf16> to vector<4x16x32xbf16>
    %c0_31 = arith.constant 0 : index
    %c0_32 = arith.constant 0 : index
    %68 = vector.load %arg2[%c0_31, %c0_32] : memref<16x32xf32, #tpu.memory_space<vmem>>, vector<16x32xf32>
    %69 = arith.truncf %68 : vector<16x32xf32> to vector<16x32xbf16>
    %70 = vector.shape_cast %69 : vector<16x32xbf16> to vector<1x16x32xbf16>
    %71 = vector.broadcast %70 : vector<1x16x32xbf16> to vector<4x16x32xbf16>
    %c0_33 = arith.constant 0 : index
    %c0_34 = arith.constant 0 : index
    %c0_35 = arith.constant 0 : index
    %c0_36 = arith.constant 0 : index
    %72 = vector.load %arg12[%c0_33, %c0_34, %c0_35, %c0_36] : memref<1x4x32x8xbf16, #tpu.memory_space<vmem>>, vector<1x4x32x8xbf16>
    %73 = vector.shape_cast %72 : vector<1x4x32x8xbf16> to vector<4x32x8xbf16>
    "tpu.trace_start"() <{level = 10 : i32, message = "hmk,hkn->hmn"}> : () -> ()
    %cst_37 = arith.constant dense<0.000000e+00> : vector<4x16x8xf32>
    %74 = tpu.matmul %67, %73, %cst_37 {dimension_numbers = #tpu.dot_dimension_numbers<[2], [1], [1], [2], [0, 0, 0, 1, 1, 2], [0], [0]>} : vector<4x16x32xbf16>, vector<4x32x8xbf16>, vector<4x16x8xf32> -> vector<4x16x8xf32>
    "tpu.trace_stop"() : () -> ()
    %c0_38 = arith.constant 0 : index
    %c0_39 = arith.constant 0 : index
    %c0_40 = arith.constant 0 : index
    %c0_41 = arith.constant 0 : index
    %75 = vector.load %arg13[%c0_38, %c0_39, %c0_40, %c0_41] : memref<1x4x32x16xbf16, #tpu.memory_space<vmem>>, vector<1x4x32x16xbf16>
    %76 = vector.shape_cast %75 : vector<1x4x32x16xbf16> to vector<4x32x16xbf16>
    "tpu.trace_start"() <{level = 10 : i32, message = "hmk,hkn->hmn"}> : () -> ()
    %cst_42 = arith.constant dense<0.000000e+00> : vector<4x16x16xf32>
    %77 = tpu.matmul %71, %76, %cst_42 {dimension_numbers = #tpu.dot_dimension_numbers<[2], [1], [1], [2], [0, 0, 0, 1, 1, 2], [0], [0]>} : vector<4x16x32xbf16>, vector<4x32x16xbf16>, vector<4x16x16xf32> -> vector<4x16x16xf32>
    "tpu.trace_stop"() : () -> ()
    %78 = vector.extract_strided_slice %77 {offsets = [0, 0, 0], sizes = [4, 16, 8], strides = [1, 1, 1]} : vector<4x16x16xf32> to vector<4x16x8xf32>
    %79 = vector.extract_strided_slice %77 {offsets = [0, 0, 8], sizes = [4, 16, 8], strides = [1, 1, 1]} : vector<4x16x16xf32> to vector<4x16x8xf32>
    %c0_43 = arith.constant 0 : index
    %c0_44 = arith.constant 0 : index
    %80 = vector.load %arg5[%c0_43, %c0_44] : memref<16x16xf32, #tpu.memory_space<vmem>>, vector<16x16xf32>
    %81 = vector.shape_cast %80 : vector<16x16xf32> to vector<1x16x16xf32>
    %82 = arith.truncf %74 : vector<4x16x8xf32> to vector<4x16x8xbf16>
    %83 = arith.truncf %78 : vector<4x16x8xf32> to vector<4x16x8xbf16>
    "tpu.trace_start"() <{level = 10 : i32, message = "hqd,hkd->hqk"}> : () -> ()
    %cst_45 = arith.constant dense<0.000000e+00> : vector<4x16x16xf32>
    %84 = tpu.matmul %82, %83, %cst_45 {dimension_numbers = #tpu.dot_dimension_numbers<[2], [2], [1], [1], [0, 0, 0, 1, 1, 1], [0], [0]>} : vector<4x16x8xbf16>, vector<4x16x8xbf16>, vector<4x16x16xf32> -> vector<4x16x16xf32>
    "tpu.trace_stop"() : () -> ()
    %85 = vector.broadcast %81 : vector<1x16x16xf32> to vector<4x16x16xf32>
    %86 = arith.addf %84, %85 : vector<4x16x16xf32>
    %cst_46 = arith.constant dense<0xFF800000> : vector<4x16xf32>
    %87 = vector.multi_reduction <maximumf>, %86, %cst_46 [2] : vector<4x16x16xf32> to vector<4x16xf32>
    %88 = vector.shape_cast %87 : vector<4x16xf32> to vector<4x16x1xf32>
    %89 = vector.broadcast %88 : vector<4x16x1xf32> to vector<4x16x16xf32>
    %90 = arith.subf %86, %89 : vector<4x16x16xf32>
    %91 = math.exp %90 : vector<4x16x16xf32>
    %cst_47 = arith.constant dense<0.000000e+00> : vector<4x16xf32>
    %92 = vector.multi_reduction <add>, %91, %cst_47 [2] : vector<4x16x16xf32> to vector<4x16xf32>
    %93 = vector.shape_cast %92 : vector<4x16xf32> to vector<4x16x1xf32>
    %94 = tpu.reciprocal %93 {approx = true} : vector<4x16x1xf32> -> vector<4x16x1xf32>
    %95 = vector.broadcast %94 : vector<4x16x1xf32> to vector<4x16x16xf32>
    %96 = arith.mulf %91, %95 : vector<4x16x16xf32>
    %97 = arith.truncf %96 : vector<4x16x16xf32> to vector<4x16x16xbf16>
    %98 = arith.truncf %79 : vector<4x16x8xf32> to vector<4x16x8xbf16>
    "tpu.trace_start"() <{level = 10 : i32, message = "hqk,hkd->hqd"}> : () -> ()
    %cst_48 = arith.constant dense<0.000000e+00> : vector<4x16x8xf32>
    %99 = tpu.matmul %97, %98, %cst_48 {dimension_numbers = #tpu.dot_dimension_numbers<[2], [1], [1], [2], [0, 0, 0, 1, 1, 2], [0], [0]>} : vector<4x16x16xbf16>, vector<4x16x8xbf16>, vector<4x16x8xf32> -> vector<4x16x8xf32>
    "tpu.trace_stop"() : () -> ()
    %c0_49 = arith.constant 0 : index
    %c0_50 = arith.constant 0 : index
    %c0_51 = arith.constant 0 : index
    %c0_52 = arith.constant 0 : index
    %100 = vector.load %arg14[%c0_49, %c0_50, %c0_51, %c0_52] : memref<1x4x8x32xbf16, #tpu.memory_space<vmem>>, vector<1x4x8x32xbf16>
    %101 = vector.shape_cast %100 : vector<1x4x8x32xbf16> to vector<4x8x32xbf16>
    %102 = arith.truncf %99 : vector<4x16x8xf32> to vector<4x16x8xbf16>
    "tpu.trace_start"() <{level = 10 : i32, message = "hmk,hkn->hmn"}> : () -> ()
    %cst_53 = arith.constant dense<0.000000e+00> : vector<4x16x32xf32>
    %103 = tpu.matmul %102, %101, %cst_53 {dimension_numbers = #tpu.dot_dimension_numbers<[2], [1], [1], [2], [0, 0, 0, 1, 1, 2], [0], [0]>} : vector<4x16x8xbf16>, vector<4x8x32xbf16>, vector<4x16x32xf32> -> vector<4x16x32xf32>
    "tpu.trace_stop"() : () -> ()
    %cst_54 = arith.constant dense<0.000000e+00> : vector<16x32xf32>
    %104 = vector.multi_reduction <add>, %103, %cst_54 [0] : vector<4x16x32xf32> to vector<16x32xf32>
    %105 = arith.addf %50, %104 : vector<16x32xf32>
    %c0_55 = arith.constant 0 : index
    %c0_56 = arith.constant 0 : index
    %c0_57 = arith.constant 0 : index
    %106 = vector.load %arg15[%c0_55, %c0_56, %c0_57] : memref<1x1x32xf32, #tpu.memory_space<vmem>>, vector<1x1x32xf32>
    %107 = vector.shape_cast %106 : vector<1x1x32xf32> to vector<1x32xf32>
    %108 = arith.mulf %105, %105 : vector<16x32xf32>
    %cst_58 = arith.constant dense<0.000000e+00> : vector<16xf32>
    %109 = vector.multi_reduction <add>, %108, %cst_58 [1] : vector<16x32xf32> to vector<16xf32>
    %110 = vector.shape_cast %109 : vector<16xf32> to vector<16x1xf32>
    %cst_59 = arith.constant 3.200000e+01 : f32
    %111 = vector.broadcast %cst_59 : f32 to vector<16x1xf32>
    %112 = arith.divf %110, %111 : vector<16x1xf32>
    %cst_60 = arith.constant 9.99999997E-7 : f32
    %113 = vector.broadcast %cst_60 : f32 to vector<16x1xf32>
    %114 = arith.addf %112, %113 : vector<16x1xf32>
    %115 = math.rsqrt %114 : vector<16x1xf32>
    %116 = vector.broadcast %115 : vector<16x1xf32> to vector<16x32xf32>
    %117 = arith.mulf %105, %116 : vector<16x32xf32>
    %118 = vector.broadcast %107 : vector<1x32xf32> to vector<16x32xf32>
    %119 = arith.mulf %117, %118 : vector<16x32xf32>
    %c0_61 = arith.constant 0 : index
    %c0_62 = arith.constant 0 : index
    %c0_63 = arith.constant 0 : index
    %120 = vector.load %arg16[%c0_61, %c0_62, %c0_63] : memref<1x32x64xbf16, #tpu.memory_space<vmem>>, vector<1x32x64xbf16>
    %121 = vector.shape_cast %120 : vector<1x32x64xbf16> to vector<32x64xbf16>
    %122 = arith.truncf %119 : vector<16x32xf32> to vector<16x32xbf16>
    %cst_64 = arith.constant dense<0.000000e+00> : vector<16x64xf32>
    %123 = tpu.matmul %122, %121, %cst_64 {dimension_numbers = #tpu.dot_dimension_numbers<[1], [0], [0], [1], [0, 0, 1, 1], [], []>} : vector<16x32xbf16>, vector<32x64xbf16>, vector<16x64xf32> -> vector<16x64xf32>
    %cst_65 = arith.constant 0.000000e+00 : f32
    %124 = vector.broadcast %cst_65 : f32 to vector<16x64xf32>
    %125 = arith.maximumf %123, %124 : vector<16x64xf32>
    %c0_66 = arith.constant 0 : index
    %c0_67 = arith.constant 0 : index
    %c0_68 = arith.constant 0 : index
    %126 = vector.load %arg17[%c0_66, %c0_67, %c0_68] : memref<1x64x32xbf16, #tpu.memory_space<vmem>>, vector<1x64x32xbf16>
    %127 = vector.shape_cast %126 : vector<1x64x32xbf16> to vector<64x32xbf16>
    %128 = arith.truncf %125 : vector<16x64xf32> to vector<16x64xbf16>
    %cst_69 = arith.constant dense<0.000000e+00> : vector<16x32xf32>
    %129 = tpu.matmul %128, %127, %cst_69 {dimension_numbers = #tpu.dot_dimension_numbers<[1], [0], [0], [1], [0, 0, 1, 1], [], []>} : vector<16x64xbf16>, vector<64x32xbf16>, vector<16x32xf32> -> vector<16x32xf32>
    %130 = arith.addf %105, %129 : vector<16x32xf32>
    %c0_70 = arith.constant 0 : index
    %c0_71 = arith.constant 0 : index
    %131 = vector.load %arg19[%c0_70, %c0_71] : memref<16x32xf32, #tpu.memory_space<vmem>>, vector<16x32xf32>
    tpu.vector_store %arg19[%c0_70, %c0_71], %130 {strides = array<i32>} : memref<16x32xf32, #tpu.memory_space<vmem>>, vector<16x32xf32>,
    %c1_i32 = arith.constant 1 : i32
    %132 = arith.cmpi eq, %arg0, %c1_i32 : i32
    %133 = arith.extui %132 : i1 to i32
    %c0_i32_72 = arith.constant 0 : i32
    %134 = arith.cmpi ne, %133, %c0_i32_72 : i32
    scf.if %134 {
      %c0_73 = arith.constant 0 : index
      %c0_74 = arith.constant 0 : index
      %135 = vector.load %arg6[%c0_73, %c0_74] : memref<1x32xf32, #tpu.memory_space<vmem>>, vector<1x32xf32>
      %136 = arith.mulf %130, %130 : vector<16x32xf32>
      %cst_75 = arith.constant dense<0.000000e+00> : vector<16xf32>
      %137 = vector.multi_reduction <add>, %136, %cst_75 [1] : vector<16x32xf32> to vector<16xf32>
      %138 = vector.shape_cast %137 : vector<16xf32> to vector<16x1xf32>
      %cst_76 = arith.constant 3.200000e+01 : f32
      %139 = vector.broadcast %cst_76 : f32 to vector<16x1xf32>
      %140 = arith.divf %138, %139 : vector<16x1xf32>
      %cst_77 = arith.constant 9.99999997E-7 : f32
      %141 = vector.broadcast %cst_77 : f32 to vector<16x1xf32>
      %142 = arith.addf %140, %141 : vector<16x1xf32>
      %143 = math.rsqrt %142 : vector<16x1xf32>
      %144 = vector.broadcast %143 : vector<16x1xf32> to vector<16x32xf32>
      %145 = arith.mulf %130, %144 : vector<16x32xf32>
      %146 = vector.broadcast %135 : vector<1x32xf32> to vector<16x32xf32>
      %147 = arith.mulf %145, %146 : vector<16x32xf32>
      %cst_78 = arith.constant 0.176776692 : f32
      %148 = vector.broadcast %cst_78 : f32 to vector<16x32xf32>
      %149 = arith.mulf %147, %148 : vector<16x32xf32>
      %c0_79 = arith.constant 0 : index
      %c0_80 = arith.constant 0 : index
      %150 = vector.load %arg7[%c0_79, %c0_80] : memref<32x128xbf16, #tpu.memory_space<vmem>>, vector<32x128xbf16>
      %151 = arith.truncf %149 : vector<16x32xf32> to vector<16x32xbf16>
      %cst_81 = arith.constant dense<0.000000e+00> : vector<16x128xf32>
      %152 = tpu.matmul %151, %150, %cst_81 {dimension_numbers = #tpu.dot_dimension_numbers<[1], [0], [0], [1], [0, 0, 1, 1], [], []>} : vector<16x32xbf16>, vector<32x128xbf16>, vector<16x128xf32> -> vector<16x128xf32>
      %c0_82 = arith.constant 0 : index
      %c0_83 = arith.constant 0 : index
      %153 = vector.load %arg18[%c0_82, %c0_83] : memref<16x128xf32, #tpu.memory_space<vmem>>, vector<16x128xf32>
      tpu.vector_store %arg18[%c0_82, %c0_83], %152 {strides = array<i32>} : memref<16x128xf32, #tpu.memory_space<vmem>>, vector<16x128xf32>,
    } else {
    }
    return
  }
  func.func @transform_0(%arg0: i32) -> (i32, i32) {
    %c0_i32 = arith.constant 0 : i32
    %c0_i32_0 = arith.constant 0 : i32
    %c0_i32_1 = arith.constant 0 : i32
    return %c0_i32, %c0_i32_0 : i32, i32
  }
  func.func @transform_1(%arg0: i32) -> (i32, i32) {
    %c0_i32 = arith.constant 0 : i32
    %c0_i32_0 = arith.constant 0 : i32
    %c0_i32_1 = arith.constant 0 : i32
    return %c0_i32, %c0_i32_0 : i32, i32
  }
  func.func @transform_2(%arg0: i32) -> (i32, i32) {
    %c0_i32 = arith.constant 0 : i32
    %c0_i32_0 = arith.constant 0 : i32
    %c0_i32_1 = arith.constant 0 : i32
    return %c0_i32, %c0_i32_0 : i32, i32
  }
  func.func @transform_3(%arg0: i32) -> (i32, i32, i32) {
    %c0_i32 = arith.constant 0 : i32
    %c0_i32_0 = arith.constant 0 : i32
    %c0_i32_1 = arith.constant 0 : i32
    %c0_i32_2 = arith.constant 0 : i32
    return %c0_i32, %c0_i32_0, %c0_i32_1 : i32, i32, i32
  }
  func.func @transform_4(%arg0: i32) -> (i32, i32) {
    %c0_i32 = arith.constant 0 : i32
    %c0_i32_0 = arith.constant 0 : i32
    %c0_i32_1 = arith.constant 0 : i32
    return %c0_i32, %c0_i32_0 : i32, i32
  }
  func.func @transform_5(%arg0: i32) -> (i32, i32) {
    %c0_i32 = arith.constant 0 : i32
    %c0_i32_0 = arith.constant 0 : i32
    %c0_i32_1 = arith.constant 0 : i32
    return %c0_i32, %c0_i32_0 : i32, i32
  }
  func.func @transform_6(%arg0: i32) -> (i32, i32) {
    %c0_i32 = arith.constant 0 : i32
    %c0_i32_0 = arith.constant 0 : i32
    %c0_i32_1 = arith.constant 0 : i32
    return %c0_i32, %c0_i32_0 : i32, i32
  }
  func.func @transform_7(%arg0: i32) -> (i32, i32, i32) {
    %c0_i32 = arith.constant 0 : i32
    %c0_i32_0 = arith.constant 0 : i32
    %c0_i32_1 = arith.constant 0 : i32
    return %arg0, %c0_i32, %c0_i32_0 : i32, i32, i32
  }
  func.func @transform_8(%arg0: i32) -> (i32, i32, i32, i32) {
    %c0_i32 = arith.constant 0 : i32
    %c0_i32_0 = arith.constant 0 : i32
    %c0_i32_1 = arith.constant 0 : i32
    %c0_i32_2 = arith.constant 0 : i32
    return %arg0, %c0_i32, %c0_i32_0, %c0_i32_1 : i32, i32, i32, i32
  }
  func.func @transform_9(%arg0: i32) -> (i32, i32, i32, i32) {
    %c0_i32 = arith.constant 0 : i32
    %c0_i32_0 = arith.constant 0 : i32
    %c0_i32_1 = arith.constant 0 : i32
    %c0_i32_2 = arith.constant 0 : i32
    return %arg0, %c0_i32, %c0_i32_0, %c0_i32_1 : i32, i32, i32, i32
  }
  func.func @transform_10(%arg0: i32) -> (i32, i32, i32) {
    %c0_i32 = arith.constant 0 : i32
    %c0_i32_0 = arith.constant 0 : i32
    %c0_i32_1 = arith.constant 0 : i32
    return %arg0, %c0_i32, %c0_i32_0 : i32, i32, i32
  }
  func.func @transform_11(%arg0: i32) -> (i32, i32, i32, i32) {
    %c0_i32 = arith.constant 0 : i32
    %c0_i32_0 = arith.constant 0 : i32
    %c0_i32_1 = arith.constant 0 : i32
    %c0_i32_2 = arith.constant 0 : i32
    return %arg0, %c0_i32, %c0_i32_0, %c0_i32_1 : i32, i32, i32, i32
  }
  func.func @transform_12(%arg0: i32) -> (i32, i32, i32, i32) {
    %c0_i32 = arith.constant 0 : i32
    %c0_i32_0 = arith.constant 0 : i32
    %c0_i32_1 = arith.constant 0 : i32
    %c0_i32_2 = arith.constant 0 : i32
    return %arg0, %c0_i32, %c0_i32_0, %c0_i32_1 : i32, i32, i32, i32
  }
  func.func @transform_13(%arg0: i32) -> (i32, i32, i32, i32) {
    %c0_i32 = arith.constant 0 : i32
    %c0_i32_0 = arith.constant 0 : i32
    %c0_i32_1 = arith.constant 0 : i32
    %c0_i32_2 = arith.constant 0 : i32
    return %arg0, %c0_i32, %c0_i32_0, %c0_i32_1 : i32, i32, i32, i32
  }
  func.func @transform_14(%arg0: i32) -> (i32, i32, i32) {
    %c0_i32 = arith.constant 0 : i32
    %c0_i32_0 = arith.constant 0 : i32
    %c0_i32_1 = arith.constant 0 : i32
    return %arg0, %c0_i32, %c0_i32_0 : i32, i32, i32
  }
  func.func @transform_15(%arg0: i32) -> (i32, i32, i32) {
    %c0_i32 = arith.constant 0 : i32
    %c0_i32_0 = arith.constant 0 : i32
    %c0_i32_1 = arith.constant 0 : i32
    return %arg0, %c0_i32, %c0_i32_0 : i32, i32, i32
  }
  func.func @transform_16(%arg0: i32) -> (i32, i32, i32) {
    %c0_i32 = arith.constant 0 : i32
    %c0_i32_0 = arith.constant 0 : i32
    %c0_i32_1 = arith.constant 0 : i32
    return %arg0, %c0_i32, %c0_i32_0 : i32, i32, i32
  }
  func.func @transform_17(%arg0: i32) -> (i32, i32) {
    %c0_i32 = arith.constant 0 : i32
    %c0_i32_0 = arith.constant 0 : i32
    %c0_i32_1 = arith.constant 0 : i32
    return %c0_i32, %c0_i32_0 : i32, i32
  }
}

module attributes {stable_mosaic.version = 11 : i64} {
  func.func @_encoder_stack_kernel(%arg0: i32, %arg1: memref<16x1xi32, #tpu.memory_space<vmem>>, %arg2: memref<128x32xbf16, #tpu.memory_space<vmem>>, %arg3: memref<4x16x16xf32, #tpu.memory_space<vmem>>, %arg4: memref<1x32xf32, #tpu.memory_space<vmem>>, %arg5: memref<1x1x32xf32, #tpu.memory_space<vmem>>, %arg6: memref<1x4x32x24xbf16, #tpu.memory_space<vmem>>, %arg7: memref<1x4x8x32xbf16, #tpu.memory_space<vmem>>, %arg8: memref<1x1x32xf32, #tpu.memory_space<vmem>>, %arg9: memref<1x32x64xbf16, #tpu.memory_space<vmem>>, %arg10: memref<1x64x32xbf16, #tpu.memory_space<vmem>>, %arg11: memref<16x32xf32, #tpu.memory_space<vmem>>, %arg12: memref<16x32xf32, #tpu.memory_space<vmem>>) attributes {dimension_semantics = [#tpu.dimension_semantics<arbitrary>], iteration_bounds = array<i64: 2>, scalar_prefetch = 0 : i64, scratch_operands = 1 : i64, tpu.core_type = #tpu.core_type<tc>, window_params = [{pipeline_mode = #tpu.pipeline_mode<synchronous>, transform_indices = @transform_0, window_bounds = array<i64: 16, 1>}, {pipeline_mode = #tpu.pipeline_mode<synchronous>, transform_indices = @transform_1, window_bounds = array<i64: 128, 32>}, {pipeline_mode = #tpu.pipeline_mode<synchronous>, transform_indices = @transform_2, window_bounds = array<i64: 4, 16, 16>}, {pipeline_mode = #tpu.pipeline_mode<synchronous>, transform_indices = @transform_3, window_bounds = array<i64: 1, 32>}, {transform_indices = @transform_4, window_bounds = array<i64: 1, 1, 32>}, {transform_indices = @transform_5, window_bounds = array<i64: 1, 4, 32, 24>}, {transform_indices = @transform_6, window_bounds = array<i64: 1, 4, 8, 32>}, {transform_indices = @transform_7, window_bounds = array<i64: 1, 1, 32>}, {transform_indices = @transform_8, window_bounds = array<i64: 1, 32, 64>}, {transform_indices = @transform_9, window_bounds = array<i64: 1, 64, 32>}, {pipeline_mode = #tpu.pipeline_mode<synchronous>, transform_indices = @transform_10, window_bounds = array<i64: 16, 32>}]} {
    %c0_i32 = arith.constant 0 : i32
    %0 = arith.cmpi eq, %arg0, %c0_i32 : i32
    %1 = arith.extui %0 : i1 to i32
    %c0_i32_0 = arith.constant 0 : i32
    %2 = arith.cmpi ne, %1, %c0_i32_0 : i32
    scf.if %2 {
      %c0_43 = arith.constant 0 : index
      %c0_44 = arith.constant 0 : index
      %80 = vector.load %arg1[%c0_43, %c0_44] : memref<16x1xi32, #tpu.memory_space<vmem>>, vector<16x1xi32>
      %c0_45 = arith.constant 0 : index
      %c0_46 = arith.constant 0 : index
      %81 = vector.load %arg2[%c0_45, %c0_46] : memref<128x32xbf16, #tpu.memory_space<vmem>>, vector<128x32xbf16>
      %82 = tpu.iota {dimensions = array<i32: 1>} : vector<16x128xi32>
      %83 = vector.broadcast %80 : vector<16x1xi32> to vector<16x128xi32>
      %84 = arith.cmpi eq, %83, %82 : vector<16x128xi32>
      %85 = arith.extui %84 : vector<16x128xi1> to vector<16x128xi32>
      %86 = arith.sitofp %85 : vector<16x128xi32> to vector<16x128xf32>
      %87 = arith.truncf %86 : vector<16x128xf32> to vector<16x128xbf16>
      %cst_47 = arith.constant dense<0.000000e+00> : vector<16x32xf32>
      %88 = tpu.matmul %87, %81, %cst_47 {dimension_numbers = #tpu.dot_dimension_numbers<[1], [0], [0], [1], [0, 0, 1, 1], [], []>} : vector<16x128xbf16>, vector<128x32xbf16>, vector<16x32xf32> -> vector<16x32xf32>
      %c0_48 = arith.constant 0 : index
      %c0_49 = arith.constant 0 : index
      %89 = vector.load %arg12[%c0_48, %c0_49] : memref<16x32xf32, #tpu.memory_space<vmem>>, vector<16x32xf32>
      tpu.vector_store %arg12[%c0_48, %c0_49], %88 {strides = array<i32>} : memref<16x32xf32, #tpu.memory_space<vmem>>, vector<16x32xf32>,
    } else {
    }
    %c0 = arith.constant 0 : index
    %c0_1 = arith.constant 0 : index
    %3 = vector.load %arg12[%c0, %c0_1] : memref<16x32xf32, #tpu.memory_space<vmem>>, vector<16x32xf32>
    %c0_2 = arith.constant 0 : index
    %c0_3 = arith.constant 0 : index
    %c0_4 = arith.constant 0 : index
    %4 = vector.load %arg5[%c0_2, %c0_3, %c0_4] : memref<1x1x32xf32, #tpu.memory_space<vmem>>, vector<1x1x32xf32>
    %5 = vector.shape_cast %4 : vector<1x1x32xf32> to vector<1x32xf32>
    %6 = arith.mulf %3, %3 : vector<16x32xf32>
    %cst = arith.constant dense<0.000000e+00> : vector<16xf32>
    %7 = vector.multi_reduction <add>, %6, %cst [1] : vector<16x32xf32> to vector<16xf32>
    %8 = vector.shape_cast %7 : vector<16xf32> to vector<16x1xf32>
    %cst_5 = arith.constant 3.200000e+01 : f32
    %9 = vector.broadcast %cst_5 : f32 to vector<16x1xf32>
    %10 = arith.divf %8, %9 : vector<16x1xf32>
    %cst_6 = arith.constant 9.99999997E-7 : f32
    %11 = vector.broadcast %cst_6 : f32 to vector<16x1xf32>
    %12 = arith.addf %10, %11 : vector<16x1xf32>
    %13 = math.rsqrt %12 : vector<16x1xf32>
    %14 = vector.broadcast %13 : vector<16x1xf32> to vector<16x32xf32>
    %15 = arith.mulf %3, %14 : vector<16x32xf32>
    %16 = vector.broadcast %5 : vector<1x32xf32> to vector<16x32xf32>
    %17 = arith.mulf %15, %16 : vector<16x32xf32>
    %18 = arith.truncf %17 : vector<16x32xf32> to vector<16x32xbf16>
    %19 = vector.shape_cast %18 : vector<16x32xbf16> to vector<1x16x32xbf16>
    %20 = vector.broadcast %19 : vector<1x16x32xbf16> to vector<4x16x32xbf16>
    %c0_7 = arith.constant 0 : index
    %c0_8 = arith.constant 0 : index
    %c0_9 = arith.constant 0 : index
    %c0_10 = arith.constant 0 : index
    %21 = vector.load %arg6[%c0_7, %c0_8, %c0_9, %c0_10] : memref<1x4x32x24xbf16, #tpu.memory_space<vmem>>, vector<1x4x32x24xbf16>
    %22 = vector.shape_cast %21 : vector<1x4x32x24xbf16> to vector<4x32x24xbf16>
    "tpu.trace_start"() <{level = 10 : i32, message = "hmk,hkn->hmn"}> : () -> ()
    %cst_11 = arith.constant dense<0.000000e+00> : vector<4x16x24xf32>
    %23 = tpu.matmul %20, %22, %cst_11 {dimension_numbers = #tpu.dot_dimension_numbers<[2], [1], [1], [2], [0, 0, 0, 1, 1, 2], [0], [0]>} : vector<4x16x32xbf16>, vector<4x32x24xbf16>, vector<4x16x24xf32> -> vector<4x16x24xf32>
    "tpu.trace_stop"() : () -> ()
    %24 = vector.extract_strided_slice %23 {offsets = [0, 0, 0], sizes = [4, 16, 8], strides = [1, 1, 1]} : vector<4x16x24xf32> to vector<4x16x8xf32>
    %25 = vector.extract_strided_slice %23 {offsets = [0, 0, 8], sizes = [4, 16, 8], strides = [1, 1, 1]} : vector<4x16x24xf32> to vector<4x16x8xf32>
    %26 = vector.extract_strided_slice %23 {offsets = [0, 0, 16], sizes = [4, 16, 8], strides = [1, 1, 1]} : vector<4x16x24xf32> to vector<4x16x8xf32>
    %c0_12 = arith.constant 0 : index
    %c0_13 = arith.constant 0 : index
    %c0_14 = arith.constant 0 : index
    %27 = vector.load %arg3[%c0_12, %c0_13, %c0_14] : memref<4x16x16xf32, #tpu.memory_space<vmem>>, vector<4x16x16xf32>
    %28 = arith.truncf %24 : vector<4x16x8xf32> to vector<4x16x8xbf16>
    %29 = arith.truncf %25 : vector<4x16x8xf32> to vector<4x16x8xbf16>
    "tpu.trace_start"() <{level = 10 : i32, message = "hqd,hkd->hqk"}> : () -> ()
    %cst_15 = arith.constant dense<0.000000e+00> : vector<4x16x16xf32>
    %30 = tpu.matmul %28, %29, %cst_15 {dimension_numbers = #tpu.dot_dimension_numbers<[2], [2], [1], [1], [0, 0, 0, 1, 1, 1], [0], [0]>} : vector<4x16x8xbf16>, vector<4x16x8xbf16>, vector<4x16x16xf32> -> vector<4x16x16xf32>
    "tpu.trace_stop"() : () -> ()
    %31 = arith.addf %30, %27 : vector<4x16x16xf32>
    %cst_16 = arith.constant dense<0xFF800000> : vector<4x16xf32>
    %32 = vector.multi_reduction <maximumf>, %31, %cst_16 [2] : vector<4x16x16xf32> to vector<4x16xf32>
    %33 = vector.shape_cast %32 : vector<4x16xf32> to vector<4x16x1xf32>
    %34 = vector.broadcast %33 : vector<4x16x1xf32> to vector<4x16x16xf32>
    %35 = arith.subf %31, %34 : vector<4x16x16xf32>
    %36 = math.exp %35 : vector<4x16x16xf32>
    %cst_17 = arith.constant dense<0.000000e+00> : vector<4x16xf32>
    %37 = vector.multi_reduction <add>, %36, %cst_17 [2] : vector<4x16x16xf32> to vector<4x16xf32>
    %38 = vector.shape_cast %37 : vector<4x16xf32> to vector<4x16x1xf32>
    %39 = tpu.reciprocal %38 {approx = true} : vector<4x16x1xf32> -> vector<4x16x1xf32>
    %40 = vector.broadcast %39 : vector<4x16x1xf32> to vector<4x16x16xf32>
    %41 = arith.mulf %36, %40 : vector<4x16x16xf32>
    %42 = arith.truncf %41 : vector<4x16x16xf32> to vector<4x16x16xbf16>
    %43 = arith.truncf %26 : vector<4x16x8xf32> to vector<4x16x8xbf16>
    "tpu.trace_start"() <{level = 10 : i32, message = "hqk,hkd->hqd"}> : () -> ()
    %cst_18 = arith.constant dense<0.000000e+00> : vector<4x16x8xf32>
    %44 = tpu.matmul %42, %43, %cst_18 {dimension_numbers = #tpu.dot_dimension_numbers<[2], [1], [1], [2], [0, 0, 0, 1, 1, 2], [0], [0]>} : vector<4x16x16xbf16>, vector<4x16x8xbf16>, vector<4x16x8xf32> -> vector<4x16x8xf32>
    "tpu.trace_stop"() : () -> ()
    %c0_19 = arith.constant 0 : index
    %c0_20 = arith.constant 0 : index
    %c0_21 = arith.constant 0 : index
    %c0_22 = arith.constant 0 : index
    %45 = vector.load %arg7[%c0_19, %c0_20, %c0_21, %c0_22] : memref<1x4x8x32xbf16, #tpu.memory_space<vmem>>, vector<1x4x8x32xbf16>
    %46 = vector.shape_cast %45 : vector<1x4x8x32xbf16> to vector<4x8x32xbf16>
    %47 = arith.truncf %44 : vector<4x16x8xf32> to vector<4x16x8xbf16>
    "tpu.trace_start"() <{level = 10 : i32, message = "hmk,hkn->hmn"}> : () -> ()
    %cst_23 = arith.constant dense<0.000000e+00> : vector<4x16x32xf32>
    %48 = tpu.matmul %47, %46, %cst_23 {dimension_numbers = #tpu.dot_dimension_numbers<[2], [1], [1], [2], [0, 0, 0, 1, 1, 2], [0], [0]>} : vector<4x16x8xbf16>, vector<4x8x32xbf16>, vector<4x16x32xf32> -> vector<4x16x32xf32>
    "tpu.trace_stop"() : () -> ()
    %cst_24 = arith.constant dense<0.000000e+00> : vector<16x32xf32>
    %49 = vector.multi_reduction <add>, %48, %cst_24 [0] : vector<4x16x32xf32> to vector<16x32xf32>
    %50 = arith.addf %3, %49 : vector<16x32xf32>
    %c0_25 = arith.constant 0 : index
    %c0_26 = arith.constant 0 : index
    %c0_27 = arith.constant 0 : index
    %51 = vector.load %arg8[%c0_25, %c0_26, %c0_27] : memref<1x1x32xf32, #tpu.memory_space<vmem>>, vector<1x1x32xf32>
    %52 = vector.shape_cast %51 : vector<1x1x32xf32> to vector<1x32xf32>
    %53 = arith.mulf %50, %50 : vector<16x32xf32>
    %cst_28 = arith.constant dense<0.000000e+00> : vector<16xf32>
    %54 = vector.multi_reduction <add>, %53, %cst_28 [1] : vector<16x32xf32> to vector<16xf32>
    %55 = vector.shape_cast %54 : vector<16xf32> to vector<16x1xf32>
    %cst_29 = arith.constant 3.200000e+01 : f32
    %56 = vector.broadcast %cst_29 : f32 to vector<16x1xf32>
    %57 = arith.divf %55, %56 : vector<16x1xf32>
    %cst_30 = arith.constant 9.99999997E-7 : f32
    %58 = vector.broadcast %cst_30 : f32 to vector<16x1xf32>
    %59 = arith.addf %57, %58 : vector<16x1xf32>
    %60 = math.rsqrt %59 : vector<16x1xf32>
    %61 = vector.broadcast %60 : vector<16x1xf32> to vector<16x32xf32>
    %62 = arith.mulf %50, %61 : vector<16x32xf32>
    %63 = vector.broadcast %52 : vector<1x32xf32> to vector<16x32xf32>
    %64 = arith.mulf %62, %63 : vector<16x32xf32>
    %c0_31 = arith.constant 0 : index
    %c0_32 = arith.constant 0 : index
    %c0_33 = arith.constant 0 : index
    %65 = vector.load %arg9[%c0_31, %c0_32, %c0_33] : memref<1x32x64xbf16, #tpu.memory_space<vmem>>, vector<1x32x64xbf16>
    %66 = vector.shape_cast %65 : vector<1x32x64xbf16> to vector<32x64xbf16>
    %67 = arith.truncf %64 : vector<16x32xf32> to vector<16x32xbf16>
    %cst_34 = arith.constant dense<0.000000e+00> : vector<16x64xf32>
    %68 = tpu.matmul %67, %66, %cst_34 {dimension_numbers = #tpu.dot_dimension_numbers<[1], [0], [0], [1], [0, 0, 1, 1], [], []>} : vector<16x32xbf16>, vector<32x64xbf16>, vector<16x64xf32> -> vector<16x64xf32>
    %cst_35 = arith.constant 0.000000e+00 : f32
    %69 = vector.broadcast %cst_35 : f32 to vector<16x64xf32>
    %70 = arith.maximumf %68, %69 : vector<16x64xf32>
    %c0_36 = arith.constant 0 : index
    %c0_37 = arith.constant 0 : index
    %c0_38 = arith.constant 0 : index
    %71 = vector.load %arg10[%c0_36, %c0_37, %c0_38] : memref<1x64x32xbf16, #tpu.memory_space<vmem>>, vector<1x64x32xbf16>
    %72 = vector.shape_cast %71 : vector<1x64x32xbf16> to vector<64x32xbf16>
    %73 = arith.truncf %70 : vector<16x64xf32> to vector<16x64xbf16>
    %cst_39 = arith.constant dense<0.000000e+00> : vector<16x32xf32>
    %74 = tpu.matmul %73, %72, %cst_39 {dimension_numbers = #tpu.dot_dimension_numbers<[1], [0], [0], [1], [0, 0, 1, 1], [], []>} : vector<16x64xbf16>, vector<64x32xbf16>, vector<16x32xf32> -> vector<16x32xf32>
    %75 = arith.addf %50, %74 : vector<16x32xf32>
    %c0_40 = arith.constant 0 : index
    %c0_41 = arith.constant 0 : index
    %76 = vector.load %arg12[%c0_40, %c0_41] : memref<16x32xf32, #tpu.memory_space<vmem>>, vector<16x32xf32>
    tpu.vector_store %arg12[%c0_40, %c0_41], %75 {strides = array<i32>} : memref<16x32xf32, #tpu.memory_space<vmem>>, vector<16x32xf32>,
    %c1_i32 = arith.constant 1 : i32
    %77 = arith.cmpi eq, %arg0, %c1_i32 : i32
    %78 = arith.extui %77 : i1 to i32
    %c0_i32_42 = arith.constant 0 : i32
    %79 = arith.cmpi ne, %78, %c0_i32_42 : i32
    scf.if %79 {
      %c0_43 = arith.constant 0 : index
      %c0_44 = arith.constant 0 : index
      %80 = vector.load %arg4[%c0_43, %c0_44] : memref<1x32xf32, #tpu.memory_space<vmem>>, vector<1x32xf32>
      %81 = arith.mulf %75, %75 : vector<16x32xf32>
      %cst_45 = arith.constant dense<0.000000e+00> : vector<16xf32>
      %82 = vector.multi_reduction <add>, %81, %cst_45 [1] : vector<16x32xf32> to vector<16xf32>
      %83 = vector.shape_cast %82 : vector<16xf32> to vector<16x1xf32>
      %cst_46 = arith.constant 3.200000e+01 : f32
      %84 = vector.broadcast %cst_46 : f32 to vector<16x1xf32>
      %85 = arith.divf %83, %84 : vector<16x1xf32>
      %cst_47 = arith.constant 9.99999997E-7 : f32
      %86 = vector.broadcast %cst_47 : f32 to vector<16x1xf32>
      %87 = arith.addf %85, %86 : vector<16x1xf32>
      %88 = math.rsqrt %87 : vector<16x1xf32>
      %89 = vector.broadcast %88 : vector<16x1xf32> to vector<16x32xf32>
      %90 = arith.mulf %75, %89 : vector<16x32xf32>
      %91 = vector.broadcast %80 : vector<1x32xf32> to vector<16x32xf32>
      %92 = arith.mulf %90, %91 : vector<16x32xf32>
      %c0_48 = arith.constant 0 : index
      %c0_49 = arith.constant 0 : index
      %93 = vector.load %arg11[%c0_48, %c0_49] : memref<16x32xf32, #tpu.memory_space<vmem>>, vector<16x32xf32>
      tpu.vector_store %arg11[%c0_48, %c0_49], %92 {strides = array<i32>} : memref<16x32xf32, #tpu.memory_space<vmem>>, vector<16x32xf32>,
    } else {
    }
    return
  }
  func.func @transform_0(%arg0: i32) -> (i32, i32) {
    %c0_i32 = arith.constant 0 : i32
    %c0_i32_0 = arith.constant 0 : i32
    %c0_i32_1 = arith.constant 0 : i32
    return %c0_i32, %c0_i32_0 : i32, i32
  }
  func.func @transform_1(%arg0: i32) -> (i32, i32) {
    %c0_i32 = arith.constant 0 : i32
    %c0_i32_0 = arith.constant 0 : i32
    %c0_i32_1 = arith.constant 0 : i32
    return %c0_i32, %c0_i32_0 : i32, i32
  }
  func.func @transform_2(%arg0: i32) -> (i32, i32, i32) {
    %c0_i32 = arith.constant 0 : i32
    %c0_i32_0 = arith.constant 0 : i32
    %c0_i32_1 = arith.constant 0 : i32
    %c0_i32_2 = arith.constant 0 : i32
    return %c0_i32, %c0_i32_0, %c0_i32_1 : i32, i32, i32
  }
  func.func @transform_3(%arg0: i32) -> (i32, i32) {
    %c0_i32 = arith.constant 0 : i32
    %c0_i32_0 = arith.constant 0 : i32
    %c0_i32_1 = arith.constant 0 : i32
    return %c0_i32, %c0_i32_0 : i32, i32
  }
  func.func @transform_4(%arg0: i32) -> (i32, i32, i32) {
    %c0_i32 = arith.constant 0 : i32
    %c0_i32_0 = arith.constant 0 : i32
    %c0_i32_1 = arith.constant 0 : i32
    return %arg0, %c0_i32, %c0_i32_0 : i32, i32, i32
  }
  func.func @transform_5(%arg0: i32) -> (i32, i32, i32, i32) {
    %c0_i32 = arith.constant 0 : i32
    %c0_i32_0 = arith.constant 0 : i32
    %c0_i32_1 = arith.constant 0 : i32
    %c0_i32_2 = arith.constant 0 : i32
    return %arg0, %c0_i32, %c0_i32_0, %c0_i32_1 : i32, i32, i32, i32
  }
  func.func @transform_6(%arg0: i32) -> (i32, i32, i32, i32) {
    %c0_i32 = arith.constant 0 : i32
    %c0_i32_0 = arith.constant 0 : i32
    %c0_i32_1 = arith.constant 0 : i32
    %c0_i32_2 = arith.constant 0 : i32
    return %arg0, %c0_i32, %c0_i32_0, %c0_i32_1 : i32, i32, i32, i32
  }
  func.func @transform_7(%arg0: i32) -> (i32, i32, i32) {
    %c0_i32 = arith.constant 0 : i32
    %c0_i32_0 = arith.constant 0 : i32
    %c0_i32_1 = arith.constant 0 : i32
    return %arg0, %c0_i32, %c0_i32_0 : i32, i32, i32
  }
  func.func @transform_8(%arg0: i32) -> (i32, i32, i32) {
    %c0_i32 = arith.constant 0 : i32
    %c0_i32_0 = arith.constant 0 : i32
    %c0_i32_1 = arith.constant 0 : i32
    return %arg0, %c0_i32, %c0_i32_0 : i32, i32, i32
  }
  func.func @transform_9(%arg0: i32) -> (i32, i32, i32) {
    %c0_i32 = arith.constant 0 : i32
    %c0_i32_0 = arith.constant 0 : i32
    %c0_i32_1 = arith.constant 0 : i32
    return %arg0, %c0_i32, %c0_i32_0 : i32, i32, i32
  }
  func.func @transform_10(%arg0: i32) -> (i32, i32) {
    %c0_i32 = arith.constant 0 : i32
    %c0_i32_0 = arith.constant 0 : i32
    %c0_i32_1 = arith.constant 0 : i32
    return %c0_i32, %c0_i32_0 : i32, i32
  }
}

</mosaic_0001>

<llo_original>
// kernel: merge_t5_forward.2
$region0: #{merge_t5_forward.2}
  #allocation0 [shape = 'u32[]', space=smem, size = 0x4, offset = 0x4, fixed_abs, tag = 'smem constant byte address 0x4 - core index']
  #allocation1 [shape = 'u32[72,128]{1,0:T(1,128)}', space=vmem, size = 0x9000, scoped, tag = 'internal scratch']
  #allocation2 [shape = 'f32[16,32]{1,0:T(8,128)}', space=vmem, size = 0x2000, scoped, tag = 'scratch operand']
  %s0 = inlined_call_operand.vmem [shape: s32[16,1], index: 0, kind: input, shape index: {}]
  %s1 = inlined_call_operand.vmem [shape: bf16[128,32], index: 1, kind: input, shape index: {}]
  %s2 = inlined_call_operand.vmem [shape: f32[4,16,16], index: 2, kind: input, shape index: {}]
  %s3 = inlined_call_operand.vmem [shape: f32[1,32], index: 3, kind: input, shape index: {}]
  %s4 = inlined_call_operand.vmem [shape: f32[2,1,32], index: 4, kind: input, shape index: {}]
  %s5 = inlined_call_operand.vmem [shape: bf16[2,4,32,24], index: 5, kind: input, shape index: {}]
  %s6 = inlined_call_operand.vmem [shape: bf16[2,4,8,32], index: 6, kind: input, shape index: {}]
  %s7 = inlined_call_operand.vmem [shape: f32[2,1,32], index: 7, kind: input, shape index: {}]
  %s8 = inlined_call_operand.vmem [shape: bf16[2,32,64], index: 8, kind: input, shape index: {}]
  %s9 = inlined_call_operand.vmem [shape: bf16[2,64,32], index: 9, kind: input, shape index: {}]
  %s10 = inlined_call_operand.vmem [shape: f32[16,32], index: 10, kind: output, shape index: {}]
  %s11 = sld [smem:[#allocation0]]
  $region81: #{merge_t5_forward.2} parent=0
    _
  %s13 = ssub.s32 1, %s11
  %s14 = scalar_select 0, %s13, %s11
  loop: start=0, step=1, limit=4
  $region2: #{merge_t5_forward.2} parent=0 // loop_pre_header
    _
  $region3: #{merge_t5_forward.2} parent=0 // loop_header
    %s16 = sphi 0, %s20
    %p17 = scmp.ge.s32.totalorder %s16, 4
    %s24 = sphi 0, %s24
    %s26 = sphi 0, %s24
    %s27 = sphi 0, %s26
    %s41 = sphi 0, %s27
    %s45 = sphi 0, %s45
    %s47 = sphi 0, %s45
    %s48 = sphi 0, %s47
    %s62 = sphi 0, %s48
    %s66 = sphi 0, %s66
    %s68 = sphi 0, %s66
    %s69 = sphi 0, %s68
    %s83 = sphi 0, %s69
    %s87 = sphi 0, %s87
    %s89 = sphi 0, %s87
    %s90 = sphi 0, %s89
    %s104 = sphi 0, %s90
    %s110 = sphi 0, %s112
    %s113 = sphi 0, %s110
    %s114 = sphi 0, %s113
    %s130 = sphi 0, %s114
    %s136 = sphi 0, %s138
    %s139 = sphi 0, %s136
    %s140 = sphi 0, %s139
    %s156 = sphi 0, %s140
    %s162 = sphi 0, %s164
    %s165 = sphi 0, %s162
    %s166 = sphi 0, %s165
    %s182 = sphi 0, %s166
    %s188 = sphi 0, %s190
    %s191 = sphi 0, %s188
    %s192 = sphi 0, %s191
    %s208 = sphi 0, %s192
    %s214 = sphi 0, %s216
    %s217 = sphi 0, %s214
    %s218 = sphi 0, %s217
    %s234 = sphi 0, %s218
    %s240 = sphi 0, %s242
    %s243 = sphi 0, %s240
    %s244 = sphi 0, %s243
    %s260 = sphi 0, %s244
    %s264 = sphi 0, %s264
    %s266 = sphi 0, %s264
    %s267 = sphi 0, %s266
    %s281 = sphi 0, %s267
  $region4: #{merge_t5_forward.2} parent=0 // loop_header_branch
    %19 = sbr.rel (%p17) target = $region8
  $region5: #{merge_t5_forward.2} parent=0 // loop_body
    %s21 = ssub.s32 %s16, 1
    %s22 = ssub.s32 %s16, 2
    %s23 = sadd.s32 %s16, 1
    %s25 = sadd.s32 %s24, 1
    %p28 = scmp.eq.s32.totalorder %s16, 1
    %p29 = scmp.ne.s32.totalorder %s24, %s26
    %p30 = scmp.eq.s32.totalorder %s16, 0
    %p31 = por %p29, %p30
    %p32 = scmp.ne.s32.totalorder %s24, %s26
    %p33 = scmp.eq.s32.totalorder %s21, 1
    %p34 = por %p32, %p33
    %p35 = scmp.ne.s32.totalorder %s26, %s27
    %p36 = scmp.eq.s32.totalorder %s21, 0
    %p37 = por %p35, %p36
    %p38 = scmp.ne.s32.totalorder %s26, %s27
    %p39 = scmp.eq.s32.totalorder %s22, 1
    %p40 = por %p38, %p39
    %p42 = scmp.ne.s32.totalorder %s27, %s41
    %p43 = scmp.eq.s32.totalorder %s22, 0
    %p44 = por %p42, %p43
    %s46 = sadd.s32 %s45, 1
    %p49 = scmp.eq.s32.totalorder %s16, 1
    %p50 = scmp.ne.s32.totalorder %s45, %s47
    %p51 = scmp.eq.s32.totalorder %s16, 0
    %p52 = por %p50, %p51
    %p53 = scmp.ne.s32.totalorder %s45, %s47
    %p54 = scmp.eq.s32.totalorder %s21, 1
    %p55 = por %p53, %p54
    %p56 = scmp.ne.s32.totalorder %s47, %s48
    %p57 = scmp.eq.s32.totalorder %s21, 0
    %p58 = por %p56, %p57
    %p59 = scmp.ne.s32.totalorder %s47, %s48
    %p60 = scmp.eq.s32.totalorder %s22, 1
    %p61 = por %p59, %p60
    %p63 = scmp.ne.s32.totalorder %s48, %s62
    %p64 = scmp.eq.s32.totalorder %s22, 0
    %p65 = por %p63, %p64
    %s67 = sadd.s32 %s66, 1
    %p70 = scmp.eq.s32.totalorder %s16, 1
    %p71 = scmp.ne.s32.totalorder %s66, %s68
    %p72 = scmp.eq.s32.totalorder %s16, 0
    %p73 = por %p71, %p72
    %p74 = scmp.ne.s32.totalorder %s66, %s68
    %p75 = scmp.eq.s32.totalorder %s21, 1
    %p76 = por %p74, %p75
    %p77 = scmp.ne.s32.totalorder %s68, %s69
    %p78 = scmp.eq.s32.totalorder %s21, 0
    %p79 = por %p77, %p78
    %p80 = scmp.ne.s32.totalorder %s68, %s69
    %p81 = scmp.eq.s32.totalorder %s22, 1
    %p82 = por %p80, %p81
    %p84 = scmp.ne.s32.totalorder %s69, %s83
    %p85 = scmp.eq.s32.totalorder %s22, 0
    %p86 = por %p84, %p85
    %s88 = sadd.s32 %s87, 1
    %p91 = scmp.eq.s32.totalorder %s16, 1
    %p92 = scmp.ne.s32.totalorder %s87, %s89
    %p93 = scmp.eq.s32.totalorder %s16, 0
    %p94 = por %p92, %p93
    %p95 = scmp.ne.s32.totalorder %s87, %s89
    %p96 = scmp.eq.s32.totalorder %s21, 1
    %p97 = por %p95, %p96
    %p98 = scmp.ne.s32.totalorder %s89, %s90
    %p99 = scmp.eq.s32.totalorder %s21, 0
    %p100 = por %p98, %p99
    %p101 = scmp.ne.s32.totalorder %s89, %s90
    %p102 = scmp.eq.s32.totalorder %s22, 1
    %p103 = por %p101, %p102
    %p105 = scmp.ne.s32.totalorder %s90, %s104
    %p106 = scmp.eq.s32.totalorder %s22, 0
    %p107 = por %p105, %p106
    %s108 = ssub.s32 %s16, %s23
    %p109 = scmp.eq.s32.totalorder %s108, 0
    %s111 = sadd.s32 %s110, 1
    %s112 = scalar_select %p109, %s110, %s111
    %p115 = pneg %p109
    %p116 = scmp.eq.s32.totalorder %s16, 1
    %p117 = por %p115, %p116
    %p118 = scmp.ne.s32.totalorder %s110, %s113
    %p119 = scmp.eq.s32.totalorder %s16, 0
    %p120 = por %p118, %p119
    %p121 = scmp.ne.s32.totalorder %s110, %s113
    %p122 = scmp.eq.s32.totalorder %s21, 1
    %p123 = por %p121, %p122
    %p124 = scmp.ne.s32.totalorder %s113, %s114
    %p125 = scmp.eq.s32.totalorder %s21, 0
    %p126 = por %p124, %p125
    %p127 = scmp.ne.s32.totalorder %s113, %s114
    %p128 = scmp.eq.s32.totalorder %s22, 1
    %p129 = por %p127, %p128
    %p131 = scmp.ne.s32.totalorder %s114, %s130
    %p132 = scmp.eq.s32.totalorder %s22, 0
    %p133 = por %p131, %p132
    %s134 = ssub.s32 %s16, %s23
    %p135 = scmp.eq.s32.totalorder %s134, 0
    %s137 = sadd.s32 %s136, 1
    %s138 = scalar_select %p135, %s136, %s137
    %p141 = pneg %p135
    %p142 = scmp.eq.s32.totalorder %s16, 1
    %p143 = por %p141, %p142
    %p144 = scmp.ne.s32.totalorder %s136, %s139
    %p145 = scmp.eq.s32.totalorder %s16, 0
    %p146 = por %p144, %p145
    %p147 = scmp.ne.s32.totalorder %s136, %s139
    %p148 = scmp.eq.s32.totalorder %s21, 1
    %p149 = por %p147, %p148
    %p150 = scmp.ne.s32.totalorder %s139, %s140
    %p151 = scmp.eq.s32.totalorder %s21, 0
    %p152 = por %p150, %p151
    %p153 = scmp.ne.s32.totalorder %s139, %s140
    %p154 = scmp.eq.s32.totalorder %s22, 1
    %p155 = por %p153, %p154
    %p157 = scmp.ne.s32.totalorder %s140, %s156
    %p158 = scmp.eq.s32.totalorder %s22, 0
    %p159 = por %p157, %p158
    %s160 = ssub.s32 %s16, %s23
    %p161 = scmp.eq.s32.totalorder %s160, 0
    %s163 = sadd.s32 %s162, 1
    %s164 = scalar_select %p161, %s162, %s163
    %p167 = pneg %p161
    %p168 = scmp.eq.s32.totalorder %s16, 1
    %p169 = por %p167, %p168
    %p170 = scmp.ne.s32.totalorder %s162, %s165
    %p171 = scmp.eq.s32.totalorder %s16, 0
    %p172 = por %p170, %p171
    %p173 = scmp.ne.s32.totalorder %s162, %s165
    %p174 = scmp.eq.s32.totalorder %s21, 1
    %p175 = por %p173, %p174
    %p176 = scmp.ne.s32.totalorder %s165, %s166
    %p177 = scmp.eq.s32.totalorder %s21, 0
    %p178 = por %p176, %p177
    %p179 = scmp.ne.s32.totalorder %s165, %s166
    %p180 = scmp.eq.s32.totalorder %s22, 1
    %p181 = por %p179, %p180
    %p183 = scmp.ne.s32.totalorder %s166, %s182
    %p184 = scmp.eq.s32.totalorder %s22, 0
    %p185 = por %p183, %p184
    %s186 = ssub.s32 %s16, %s23
    %p187 = scmp.eq.s32.totalorder %s186, 0
    %s189 = sadd.s32 %s188, 1
    %s190 = scalar_select %p187, %s188, %s189
    %p193 = pneg %p187
    %p194 = scmp.eq.s32.totalorder %s16, 1
    %p195 = por %p193, %p194
    %p196 = scmp.ne.s32.totalorder %s188, %s191
    %p197 = scmp.eq.s32.totalorder %s16, 0
    %p198 = por %p196, %p197
    %p199 = scmp.ne.s32.totalorder %s188, %s191
    %p200 = scmp.eq.s32.totalorder %s21, 1
    %p201 = por %p199, %p200
    %p202 = scmp.ne.s32.totalorder %s191, %s192
    %p203 = scmp.eq.s32.totalorder %s21, 0
    %p204 = por %p202, %p203
    %p205 = scmp.ne.s32.totalorder %s191, %s192
    %p206 = scmp.eq.s32.totalorder %s22, 1
    %p207 = por %p205, %p206
    %p209 = scmp.ne.s32.totalorder %s192, %s208
    %p210 = scmp.eq.s32.totalorder %s22, 0
    %p211 = por %p209, %p210
    %s212 = ssub.s32 %s16, %s23
    %p213 = scmp.eq.s32.totalorder %s212, 0
    %s215 = sadd.s32 %s214, 1
    %s216 = scalar_select %p213, %s214, %s215
    %p219 = pneg %p213
    %p220 = scmp.eq.s32.totalorder %s16, 1
    %p221 = por %p219, %p220
    %p222 = scmp.ne.s32.totalorder %s214, %s217
    %p223 = scmp.eq.s32.totalorder %s16, 0
    %p224 = por %p222, %p223
    %p225 = scmp.ne.s32.totalorder %s214, %s217
    %p226 = scmp.eq.s32.totalorder %s21, 1
    %p227 = por %p225, %p226
    %p228 = scmp.ne.s32.totalorder %s217, %s218
    %p229 = scmp.eq.s32.totalorder %s21, 0
    %p230 = por %p228, %p229
    %p231 = scmp.ne.s32.totalorder %s217, %s218
    %p232 = scmp.eq.s32.totalorder %s22, 1
    %p233 = por %p231, %p232
    %p235 = scmp.ne.s32.totalorder %s218, %s234
    %p236 = scmp.eq.s32.totalorder %s22, 0
    %p237 = por %p235, %p236
    %s238 = ssub.s32 %s16, %s23
    %p239 = scmp.eq.s32.totalorder %s238, 0
    %s241 = sadd.s32 %s240, 1
    %s242 = scalar_select %p239, %s240, %s241
    %p245 = pneg %p239
    %p246 = scmp.eq.s32.totalorder %s16, 1
    %p247 = por %p245, %p246
    %p248 = scmp.ne.s32.totalorder %s240, %s243
    %p249 = scmp.eq.s32.totalorder %s16, 0
    %p250 = por %p248, %p249
    %p251 = scmp.ne.s32.totalorder %s240, %s243
    %p252 = scmp.eq.s32.totalorder %s21, 1
    %p253 = por %p251, %p252
    %p254 = scmp.ne.s32.totalorder %s243, %s244
    %p255 = scmp.eq.s32.totalorder %s21, 0
    %p256 = por %p254, %p255
    %p257 = scmp.ne.s32.totalorder %s243, %s244
    %p258 = scmp.eq.s32.totalorder %s22, 1
    %p259 = por %p257, %p258
    %p261 = scmp.ne.s32.totalorder %s244, %s260
    %p262 = scmp.eq.s32.totalorder %s22, 0
    %p263 = por %p261, %p262
    %s265 = sadd.s32 %s264, 1
    %p268 = scmp.eq.s32.totalorder %s16, 1
    %p269 = scmp.ne.s32.totalorder %s264, %s266
    %p270 = scmp.eq.s32.totalorder %s16, 0
    %p271 = por %p269, %p270
    %p272 = scmp.ne.s32.totalorder %s264, %s266
    %p273 = scmp.eq.s32.totalorder %s21, 1
    %p274 = por %p272, %p273
    %p275 = scmp.ne.s32.totalorder %s266, %s267
    %p276 = scmp.eq.s32.totalorder %s21, 0
    %p277 = por %p275, %p276
    %p278 = scmp.ne.s32.totalorder %s266, %s267
    %p279 = scmp.eq.s32.totalorder %s22, 1
    %p280 = por %p278, %p279
    %p282 = scmp.ne.s32.totalorder %s267, %s281
    %p283 = scmp.eq.s32.totalorder %s22, 0
    %p284 = por %p282, %p283
    %p285 = scmp.le.s32.totalorder 1, %s16
    %p286 = scmp.lt.s32.totalorder %s16, 3
    %p287 = pnand %p285, %p286
    %p288 = pneg %p287
    // Predicated region
    $region9: #{merge_t5_forward.2} parent=5 // pred_check
      _
    $region10: #{merge_t5_forward.2} parent=5 // pred_check_branch
      %290 = sbr.rel (%p287) target = $region12
    $region11: #{merge_t5_forward.2} parent=5 // pred_region
      %s291 = ssub.s32 %s16, 1
      // Predicated region
      $region13: #{merge_t5_forward.2} parent=11 // pred_check
        %p292 = pneg %p37
      $region14: #{merge_t5_forward.2} parent=11 // pred_check_branch
        %294 = sbr.rel (%p292) target = $region16
      $region15: #{merge_t5_forward.2} parent=11 // pred_region
        _
      $region16: #{merge_t5_forward.2} parent=11 // pred_fallthru
        _
      // Predicated region
      $region17: #{merge_t5_forward.2} parent=11 // pred_check
        %p295 = pneg %p58
      $region18: #{merge_t5_forward.2} parent=11 // pred_check_branch
        %297 = sbr.rel (%p295) target = $region20
      $region19: #{merge_t5_forward.2} parent=11 // pred_region
        _
      $region20: #{merge_t5_forward.2} parent=11 // pred_fallthru
        _
      // Predicated region
      $region21: #{merge_t5_forward.2} parent=11 // pred_check
        %p298 = pneg %p79
      $region22: #{merge_t5_forward.2} parent=11 // pred_check_branch
        %300 = sbr.rel (%p298) target = $region24
      $region23: #{merge_t5_forward.2} parent=11 // pred_region
        _
      $region24: #{merge_t5_forward.2} parent=11 // pred_fallthru
        _
      // Predicated region
      $region25: #{merge_t5_forward.2} parent=11 // pred_check
        %p301 = pneg %p100
      $region26: #{merge_t5_forward.2} parent=11 // pred_check_branch
        %303 = sbr.rel (%p301) target = $region28
      $region27: #{merge_t5_forward.2} parent=11 // pred_region
        _
      $region28: #{merge_t5_forward.2} parent=11 // pred_fallthru
        _
    $region12: #{merge_t5_forward.2} parent=5 // pred_fallthru
      _
    %p304 = scmp.lt.s32.totalorder %s16, 2
    // Predicated region
    $region29: #{merge_t5_forward.2} parent=5 // pred_check
      %p305 = pneg %p304
    $region30: #{merge_t5_forward.2} parent=5 // pred_check_branch
      %307 = sbr.rel (%p305) target = $region32
    $region31: #{merge_t5_forward.2} parent=5 // pred_region
      // Predicated region
      $region33: #{merge_t5_forward.2} parent=31 // pred_check
        %p308 = pneg %p120
      $region34: #{merge_t5_forward.2} parent=31 // pred_check_branch
        %310 = sbr.rel (%p308) target = $region36
      $region35: #{merge_t5_forward.2} parent=31 // pred_region
        %p311 = scmp.lt.s32.totalorder %s16, 1
        %s312 = scalar_select %p311, %s16, 1
        %s313 = scalar_lea.vmem %s4, %s312
      $region36: #{merge_t5_forward.2} parent=31 // pred_fallthru
        _
      // Predicated region
      $region37: #{merge_t5_forward.2} parent=31 // pred_check
        %p314 = pneg %p146
      $region38: #{merge_t5_forward.2} parent=31 // pred_check_branch
        %316 = sbr.rel (%p314) target = $region40
      $region39: #{merge_t5_forward.2} parent=31 // pred_region
        %p317 = scmp.lt.s32.totalorder %s16, 1
        %s318 = scalar_select %p317, %s16, 1
        %s319 = smul.addr %s318, 16
        %s320 = smul.addr %s319, 4
        %s321 = scalar_lea.vmem %s5, %s320
      $region40: #{merge_t5_forward.2} parent=31 // pred_fallthru
        _
      // Predicated region
      $region41: #{merge_t5_forward.2} parent=31 // pred_check
        %p322 = pneg %p172
      $region42: #{merge_t5_forward.2} parent=31 // pred_check_branch
        %324 = sbr.rel (%p322) target = $region44
      $region43: #{merge_t5_forward.2} parent=31 // pred_region
        %p325 = scmp.lt.s32.totalorder %s16, 1
        %s326 = scalar_select %p325, %s16, 1
        %s327 = smul.addr %s326, 4
        %s328 = smul.addr %s327, 4
        %s329 = scalar_lea.vmem %s6, %s328
      $region44: #{merge_t5_forward.2} parent=31 // pred_fallthru
        _
      // Predicated region
      $region45: #{merge_t5_forward.2} parent=31 // pred_check
        %p330 = pneg %p198
      $region46: #{merge_t5_forward.2} parent=31 // pred_check_branch
        %332 = sbr.rel (%p330) target = $region48
      $region47: #{merge_t5_forward.2} parent=31 // pred_region
        %p333 = scmp.lt.s32.totalorder %s16, 1
        %s334 = scalar_select %p333, %s16, 1
        %s335 = scalar_lea.vmem %s7, %s334
      $region48: #{merge_t5_forward.2} parent=31 // pred_fallthru
        _
      // Predicated region
      $region49: #{merge_t5_forward.2} parent=31 // pred_check
        %p336 = pneg %p224
      $region50: #{merge_t5_forward.2} parent=31 // pred_check_branch
        %338 = sbr.rel (%p336) target = $region52
      $region51: #{merge_t5_forward.2} parent=31 // pred_region
        %p339 = scmp.lt.s32.totalorder %s16, 1
        %s340 = scalar_select %p339, %s16, 1
        %s341 = smul.addr %s340, 4
        %s342 = smul.addr %s341, 4
        %s343 = scalar_lea.vmem %s8, %s342
      $region52: #{merge_t5_forward.2} parent=31 // pred_fallthru
        _
      // Predicated region
      $region53: #{merge_t5_forward.2} parent=31 // pred_check
        %p344 = pneg %p250
      $region54: #{merge_t5_forward.2} parent=31 // pred_check_branch
        %346 = sbr.rel (%p344) target = $region56
      $region55: #{merge_t5_forward.2} parent=31 // pred_region
        %p347 = scmp.lt.s32.totalorder %s16, 1
        %s348 = scalar_select %p347, %s16, 1
        %s349 = smul.addr %s348, 8
        %s350 = smul.addr %s349, 4
        %s351 = scalar_lea.vmem %s9, %s350
      $region56: #{merge_t5_forward.2} parent=31 // pred_fallthru
        _
    $region32: #{merge_t5_forward.2} parent=5 // pred_fallthru
      _
    %p352 = scmp.le.s32.totalorder 1, %s16
    %p353 = scmp.lt.s32.totalorder %s16, 3
    %p354 = pnand %p352, %p353
    %p355 = pneg %p354
    // Predicated region
    $region57: #{merge_t5_forward.2} parent=5 // pred_check
      _
    $region58: #{merge_t5_forward.2} parent=5 // pred_check_branch
      %357 = sbr.rel (%p354) target = $region60
    $region59: #{merge_t5_forward.2} parent=5 // pred_region
      %s358 = ssub.s32 %s16, 1
      %p359 = pneg %p37
      %p360 = pneg %p34
      %p361 = pneg %p58
      %p362 = pneg %p55
      %p363 = pneg %p79
      %p364 = pneg %p76
      %p365 = pneg %p100
      %p366 = pneg %p97
      %p367 = scmp.lt.s32.totalorder %s21, 1
      %s368 = scalar_select %p367, %s21, 1
      %s369 = scalar_lea.vmem %s4, %s368
      %p370 = pneg %p126
      %p371 = pneg %p123
      %p372 = scmp.lt.s32.totalorder %s21, 1
      %s373 = scalar_select %p372, %s21, 1
      %s374 = smul.addr %s373, 16
      %s375 = smul.addr %s374, 4
      %s376 = scalar_lea.vmem %s5, %s375
      %p377 = pneg %p152
      %p378 = pneg %p149
      %p379 = scmp.lt.s32.totalorder %s21, 1
      %s380 = scalar_select %p379, %s21, 1
      %s381 = smul.addr %s380, 4
      %s382 = smul.addr %s381, 4
      %s383 = scalar_lea.vmem %s6, %s382
      %p384 = pneg %p178
      %p385 = pneg %p175
      %p386 = scmp.lt.s32.totalorder %s21, 1
      %s387 = scalar_select %p386, %s21, 1
      %s388 = scalar_lea.vmem %s7, %s387
      %p389 = pneg %p204
      %p390 = pneg %p201
      %p391 = scmp.lt.s32.totalorder %s21, 1
      %s392 = scalar_select %p391, %s21, 1
      %s393 = smul.addr %s392, 4
      %s394 = smul.addr %s393, 4
      %s395 = scalar_lea.vmem %s8, %s394
      %p396 = pneg %p230
      %p397 = pneg %p227
      %p398 = scmp.lt.s32.totalorder %s21, 1
      %s399 = scalar_select %p398, %s21, 1
      %s400 = smul.addr %s399, 8
      %s401 = smul.addr %s400, 4
      %s402 = scalar_lea.vmem %s9, %s401
      %p403 = pneg %p256
      %p404 = pneg %p253
      %p405 = pneg %p277
      %p406 = pneg %p274
      %p407 = scmp.lt.s32.totalorder %s21, 1
      %s408 = scalar_select %p407, %s21, 1
      %s409 = scalar_lea.vmem %s4, %s408
      %p410 = scmp.lt.s32.totalorder %s21, 1
      %s411 = scalar_select %p410, %s21, 1
      %s412 = smul.addr %s411, 16
      %s413 = smul.addr %s412, 4
      %s414 = scalar_lea.vmem %s5, %s413
      %p415 = scmp.lt.s32.totalorder %s21, 1
      %s416 = scalar_select %p415, %s21, 1
      %s417 = smul.addr %s416, 4
      %s418 = smul.addr %s417, 4
      %s419 = scalar_lea.vmem %s6, %s418
      %p420 = scmp.lt.s32.totalorder %s21, 1
      %s421 = scalar_select %p420, %s21, 1
      %s422 = scalar_lea.vmem %s7, %s421
      %p423 = scmp.lt.s32.totalorder %s21, 1
      %s424 = scalar_select %p423, %s21, 1
      %s425 = smul.addr %s424, 4
      %s426 = smul.addr %s425, 4
      %s427 = scalar_lea.vmem %s8, %s426
      %p428 = scmp.lt.s32.totalorder %s21, 1
      %s429 = scalar_select %p428, %s21, 1
      %s430 = smul.addr %s429, 8
      %s431 = smul.addr %s430, 4
      %s432 = scalar_lea.vmem %s9, %s431
      %p434 = scmp.eq.s32.totalorder %s21, 0
      // Predicated region
      $region61: #{merge_t5_forward.2} parent=59 // pred_check
        %p435 = pneg %p434
      $region62: #{merge_t5_forward.2} parent=59 // pred_check_branch
        %437 = sbr.rel (%p435) target = $region64
      $region63: #{merge_t5_forward.2} parent=59 // pred_region
        %v438 = vld [vmem:[%s0] sm:$0xff]
        %v439 = vld [vmem:[%s0 + $0x8] sm:$0xff]
        %v440 = vld [vmem:[%s1] sm:$0xf]
        %v441 = vld [vmem:[%s1 + $0x4] sm:$0xf]
        %v442 = vld [vmem:[%s1 + $0x8] sm:$0xf]
        %v443 = vld [vmem:[%s1 + $0xc] sm:$0xf]
        %v444 = vld [vmem:[%s1 + $0x10] sm:$0xf]
        %v445 = vld [vmem:[%s1 + $0x14] sm:$0xf]
        %v446 = vld [vmem:[%s1 + $0x18] sm:$0xf]
        %v447 = vld [vmem:[%s1 + $0x1c] sm:$0xf]
        %v448 = vld [vmem:[%s1 + $0x20] sm:$0xf]
        %v449 = vld [vmem:[%s1 + $0x24] sm:$0xf]
        %v450 = vld [vmem:[%s1 + $0x28] sm:$0xf]
        %v451 = vld [vmem:[%s1 + $0x2c] sm:$0xf]
        %v452 = vld [vmem:[%s1 + $0x30] sm:$0xf]
        %v453 = vld [vmem:[%s1 + $0x34] sm:$0xf]
        %v454 = vld [vmem:[%s1 + $0x38] sm:$0xf]
        %v455 = vld [vmem:[%s1 + $0x3c] sm:$0xf]
        %v456 = vlaneseq
        %v457 = vand.u32 %v456, 127
        %458 = vset.pattern.permute.xlu0 0
        %459 = vperm.xlu0 %458, %v438
        %v460 = vpop.permute.xlu0 %459
        %461 = vset.pattern.permute.xlu0 0
        %462 = vperm.xlu0 %461, %v439
        %v463 = vpop.permute.xlu0 %462
        %vm464 = vcmp.eq.s32.totalorder %v460, %v457
        %vm465 = vcmp.eq.s32.totalorder %v463, %v457
        %v466 = vsel %vm464, 1, 0
        %v467 = vsel %vm465, 1, 0
        %v468 = vcvt.s32.f32 %v466
        %v469 = vcvt.s32.f32 %v467
        %v470 = vpack.c.bf16 %v469, %v468
        %v487 = vunpack.c.l.b16 %v440
        %v488 = vunpack.c.l.b16 %v441
        %v489 = vunpack.c.l.b16 %v442
        %v490 = vunpack.c.l.b16 %v443
        %v491 = vunpack.c.l.b16 %v444
        %v492 = vunpack.c.l.b16 %v445
        %v493 = vunpack.c.l.b16 %v446
        %v494 = vunpack.c.l.b16 %v447
        %v495 = vunpack.c.l.b16 %v448
        %v496 = vunpack.c.l.b16 %v449
        %v497 = vunpack.c.l.b16 %v450
        %v498 = vunpack.c.l.b16 %v451
        %v499 = vunpack.c.l.b16 %v452
        %v500 = vunpack.c.l.b16 %v453
        %v501 = vunpack.c.l.b16 %v454
        %v502 = vunpack.c.l.b16 %v455
        %v503 = vpack.c.b16 %v488, %v487
        %v504 = vpack.c.b16 %v490, %v489
        %v505 = vpack.c.b16 %v492, %v491
        %v506 = vpack.c.b16 %v494, %v493
        %v507 = vpack.c.b16 %v496, %v495
        %v508 = vpack.c.b16 %v498, %v497
        %v509 = vpack.c.b16 %v500, %v499
        %v510 = vpack.c.b16 %v502, %v501
        %519 = vmatpush.bf16.msra.mxu0 %v510
        %520 = vmatpush.bf16.msra.mxu0 %v509
        %521 = vmatpush.bf16.msra.mxu0 %v508
        %522 = vmatpush.bf16.msra.mxu0 %v507
        %523 = vmatpush.bf16.msra.mxu0 %v506
        %524 = vmatpush.bf16.msra.mxu0 %v505
        %525 = vmatpush.bf16.msra.mxu0 %v504
        %526 = vmatpush.bf16.msra.mxu0 %v503
        %527 = vmatmul.bf16.gmra.mxu0 %v470
        %v528 = vpop.f32.mrf.mxu0
        %v529 = vadd.f32 0.0, %v528
        %v530 = vpop.f32.mrf.mxu0
        %v531 = vadd.f32 0.0, %v530
        %532 = vdwg.mxu0
        %vm533 = vcmask 261120
        %534 = vst.msk [vmem:[#allocation2] sm:$0xff] %vm533, %v529
        %535 = vst.msk [vmem:[#allocation2 + $0x8] sm:$0xff] %vm533, %v531
      $region64: #{merge_t5_forward.2} parent=59 // pred_fallthru
        _
      %v536 = vld [vmem:[#allocation2] sm:$0xff]
      %v537 = vld [vmem:[#allocation2 + $0x8] sm:$0xff]
      %v538 = vld [vmem:[%s409] sm:$0x1]
      %v539 = vmul.f32 %v536, %v536
      %v540 = vmul.f32 %v537, %v537
      %vm541 = vcmask 261120
      %v542 = vsel %vm541, %v539, 0.0
      %543 = vadd.xlane.f32.xlu0 %v542
      %v544 = vpop.xlane.xlu0 %543
      %v545 = vsel %vm541, %v540, 0.0
      %546 = vadd.xlane.f32.xlu0 %v545
      %v547 = vpop.xlane.xlu0 %546
      %v548 = vrcp.pop 32.0
      %v549 = vmul.f32 32.0, %v548
      %v550 = vsub.f32 1.0, %v549
      %v551 = vmul.f32 %v548, %v550
      %v552 = vadd.f32 %v548, %v551
      %vm553 = vweird.f32 %v548
      %v554 = vsel %vm553, %v548, %v552
      %v555 = vmul.f32 %v544, %v554
      %v556 = vmul.f32 %v547, %v554
      %v557 = vadd.f32 %v555, 1e-06
      %v558 = vadd.f32 %v556, 1e-06
      %v559 = vrsqrt.pop %v557
      %v560 = vmul.f32 %v559, %v557
      %v561 = vmul.f32 %v560, %v559
      %v562 = vmul.f32 0.5, %v561
      %v563 = vsub.f32 1.5, %v562
      %v564 = vmul.f32 %v559, %v563
      %vm565 = vweird.f32 %v557
      %vm566 = vweird.f32 %v559
      %vm567 = vmor %vm565, %vm566
      %v568 = vsel %vm567, %v559, %v564
      %v569 = vrsqrt.pop %v558
      %v570 = vmul.f32 %v569, %v558
      %v571 = vmul.f32 %v570, %v569
      %v572 = vmul.f32 0.5, %v571
      %v573 = vsub.f32 1.5, %v572
      %v574 = vmul.f32 %v569, %v573
      %vm575 = vweird.f32 %v558
      %vm576 = vweird.f32 %v569
      %vm577 = vmor %vm575, %vm576
      %v578 = vsel %vm577, %v569, %v574
      %v579 = vmul.f32 %v536, %v568
      %v580 = vmul.f32 %v537, %v578
      %v582 = vperm.slane %v538, 0
      %v584 = vmul.f32 %v579, %v582
      %v585 = vmul.f32 %v580, %v582
      %v586 = vpack.c.bf16 %v584, %v584
      %v587 = vpack.c.bf16 %v585, %v585
      %v588 = vld [vmem:[%s414] sm:$0xf]
      %v589 = vld [vmem:[%s414 + $0x4] sm:$0xf]
      %v590 = vld [vmem:[%s414 + $0x8] sm:$0xf]
      %v591 = vld [vmem:[%s414 + $0xc] sm:$0xf]
      %v592 = vld [vmem:[%s414 + $0x10] sm:$0xf]
      %v593 = vld [vmem:[%s414 + $0x14] sm:$0xf]
      %v594 = vld [vmem:[%s414 + $0x18] sm:$0xf]
      %v595 = vld [vmem:[%s414 + $0x1c] sm:$0xf]
      %v596 = vld [vmem:[%s414 + $0x20] sm:$0xf]
      %v597 = vld [vmem:[%s414 + $0x24] sm:$0xf]
      %v598 = vld [vmem:[%s414 + $0x28] sm:$0xf]
      %v599 = vld [vmem:[%s414 + $0x2c] sm:$0xf]
      %v600 = vld [vmem:[%s414 + $0x30] sm:$0xf]
      %v601 = vld [vmem:[%s414 + $0x34] sm:$0xf]
      %v602 = vld [vmem:[%s414 + $0x38] sm:$0xf]
      %v603 = vld [vmem:[%s414 + $0x3c] sm:$0xf]
      %v606 = vunpack.c.l.b16 %v586
      %v607 = vunpack.c.l.b16 %v587
      %v608 = vpack.c.b16 %v607, %v606
      %v613 = vunpack.c.l.b16 %v588
      %v614 = vunpack.c.l.b16 %v589
      %v615 = vunpack.c.l.b16 %v590
      %v616 = vunpack.c.l.b16 %v591
      %v617 = vpack.c.b16 %v614, %v613
      %v618 = vpack.c.b16 %v616, %v615
      %v622 = vsel %vm541, %v608, 0
      %624 = vmatpush.bf16.msra.mxu0 0
      %625 = vmatpush.bf16.msra.mxu0 0
      %626 = vmatpush.bf16.msra.mxu0 0
      %627 = vmatpush.bf16.msra.mxu0 0
      %628 = vmatpush.bf16.msra.mxu0 0
      %629 = vmatpush.bf16.msra.mxu0 0
      %630 = vmatpush.bf16.msra.mxu0 %v618
      %631 = vmatpush.bf16.msra.mxu0 %v617
      %632 = vmatmul.bf16.gmra.mxu0 %v622
      %v633 = vpop.f32.mrf.mxu0
      %v634 = vadd.f32 0.0, %v633
      %v635 = vpop.f32.mrf.mxu0
      %v636 = vadd.f32 0.0, %v635
      %637 = vdwg.mxu0
      %v642 = vunpack.c.l.b16 %v592
      %v643 = vunpack.c.l.b16 %v593
      %v644 = vunpack.c.l.b16 %v594
      %v645 = vunpack.c.l.b16 %v595
      %v646 = vpack.c.b16 %v643, %v642
      %v647 = vpack.c.b16 %v645, %v644
      %650 = vmatpush.bf16.msra.mxu0 0
      %651 = vmatpush.bf16.msra.mxu0 0
      %652 = vmatpush.bf16.msra.mxu0 0
      %653 = vmatpush.bf16.msra.mxu0 0
      %654 = vmatpush.bf16.msra.mxu0 0
      %655 = vmatpush.bf16.msra.mxu0 0
      %656 = vmatpush.bf16.msra.mxu0 %v647
      %657 = vmatpush.bf16.msra.mxu0 %v646
      %658 = vmatmul.bf16.gmra.mxu0 %v622
      %v659 = vpop.f32.mrf.mxu0
      %v660 = vadd.f32 0.0, %v659
      %v661 = vpop.f32.mrf.mxu0
      %v662 = vadd.f32 0.0, %v661
      %663 = vdwg.mxu0
      %v668 = vunpack.c.l.b16 %v596
      %v669 = vunpack.c.l.b16 %v597
      %v670 = vunpack.c.l.b16 %v598
      %v671 = vunpack.c.l.b16 %v599
      %v672 = vpack.c.b16 %v669, %v668
      %v673 = vpack.c.b16 %v671, %v670
      %676 = vmatpush.bf16.msra.mxu0 0
      %677 = vmatpush.bf16.msra.mxu0 0
      %678 = vmatpush.bf16.msra.mxu0 0
      %679 = vmatpush.bf16.msra.mxu0 0
      %680 = vmatpush.bf16.msra.mxu0 0
      %681 = vmatpush.bf16.msra.mxu0 0
      %682 = vmatpush.bf16.msra.mxu0 %v673
      %683 = vmatpush.bf16.msra.mxu0 %v672
      %684 = vmatmul.bf16.gmra.mxu0 %v622
      %v685 = vpop.f32.mrf.mxu0
      %v686 = vadd.f32 0.0, %v685
      %v687 = vpop.f32.mrf.mxu0
      %v688 = vadd.f32 0.0, %v687
      %689 = vdwg.mxu0
      %v694 = vunpack.c.l.b16 %v600
      %v695 = vunpack.c.l.b16 %v601
      %v696 = vunpack.c.l.b16 %v602
      %v697 = vunpack.c.l.b16 %v603
      %v698 = vpack.c.b16 %v695, %v694
      %v699 = vpack.c.b16 %v697, %v696
      %702 = vmatpush.bf16.msra.mxu0 0
      %703 = vmatpush.bf16.msra.mxu0 0
      %704 = vmatpush.bf16.msra.mxu0 0
      %705 = vmatpush.bf16.msra.mxu0 0
      %706 = vmatpush.bf16.msra.mxu0 0
      %707 = vmatpush.bf16.msra.mxu0 0
      %708 = vmatpush.bf16.msra.mxu0 %v699
      %709 = vmatpush.bf16.msra.mxu0 %v698
      %710 = vmatmul.bf16.gmra.mxu0 %v622
      %v711 = vpop.f32.mrf.mxu0
      %v712 = vadd.f32 0.0, %v711
      %v713 = vpop.f32.mrf.mxu0
      %v714 = vadd.f32 0.0, %v713
      %715 = vdwg.mxu0
      %v716 = vld [vmem:[%s2] sm:$0xff]
      %v717 = vld [vmem:[%s2 + $0x8] sm:$0xff]
      %v718 = vld [vmem:[%s2 + $0x10] sm:$0xff]
      %v719 = vld [vmem:[%s2 + $0x18] sm:$0xff]
      %v720 = vld [vmem:[%s2 + $0x20] sm:$0xff]
      %v721 = vld [vmem:[%s2 + $0x28] sm:$0xff]
      %v722 = vld [vmem:[%s2 + $0x30] sm:$0xff]
      %v723 = vld [vmem:[%s2 + $0x38] sm:$0xff]
      %v724 = vpack.c.bf16 %v634, %v634
      %v725 = vpack.c.bf16 %v636, %v636
      %v726 = vpack.c.bf16 %v660, %v660
      %v727 = vpack.c.bf16 %v662, %v662
      %v728 = vpack.c.bf16 %v686, %v686
      %v729 = vpack.c.bf16 %v688, %v688
      %v730 = vpack.c.bf16 %v712, %v712
      %v731 = vpack.c.bf16 %v714, %v714
      %v734 = vunpack.c.l.b16 %v724
      %v735 = vunpack.c.l.b16 %v725
      %v736 = vpack.c.b16 %v735, %v734
      %737 = vrot.lane.b32.xlu0 %v736, 120
      %v738 = vpop.permute.xlu0 %737
      %vm739 = vcmask 64512
      %v741 = vsel %vm739, %v736, 0
      %v744 = vsel %vm739, %v738, 0
      %746 = vmatpush.bf16.xpose.msra.mxu0 0
      %747 = vmatpush.bf16.xpose.msra.mxu0 0
      %748 = vmatpush.bf16.xpose.msra.mxu0 0
      %749 = vmatpush.bf16.xpose.msra.mxu0 0
      %750 = vmatpush.bf16.xpose.msra.mxu0 0
      %751 = vmatpush.bf16.xpose.msra.mxu0 0
      %752 = vmatpush.bf16.xpose.msra.mxu0 0
      %753 = vmatpush.bf16.xpose.msra.mxu0 %v744
      %754 = vmatmul.bf16.gmra.mxu0 %v741
      %v755 = vpop.f32.mrf.mxu0
      %v756 = vadd.f32 %v716, %v755
      %v757 = vpop.f32.mrf.mxu0
      %v758 = vadd.f32 %v717, %v757
      %759 = vdwg.mxu0
      %v762 = vunpack.c.l.b16 %v726
      %v763 = vunpack.c.l.b16 %v727
      %v764 = vpack.c.b16 %v763, %v762
      %765 = vrot.lane.b32.xlu0 %v764, 120
      %v766 = vpop.permute.xlu0 %765
      %v768 = vsel %vm739, %v764, 0
      %v771 = vsel %vm739, %v766, 0
      %773 = vmatpush.bf16.xpose.msra.mxu0 0
      %774 = vmatpush.bf16.xpose.msra.mxu0 0
      %775 = vmatpush.bf16.xpose.msra.mxu0 0
      %776 = vmatpush.bf16.xpose.msra.mxu0 0
      %777 = vmatpush.bf16.xpose.msra.mxu0 0
      %778 = vmatpush.bf16.xpose.msra.mxu0 0
      %779 = vmatpush.bf16.xpose.msra.mxu0 0
      %780 = vmatpush.bf16.xpose.msra.mxu0 %v771
      %781 = vmatmul.bf16.gmra.mxu0 %v768
      %v782 = vpop.f32.mrf.mxu0
      %v783 = vadd.f32 %v718, %v782
      %v784 = vpop.f32.mrf.mxu0
      %v785 = vadd.f32 %v719, %v784
      %786 = vdwg.mxu0
      %v789 = vunpack.c.l.b16 %v728
      %v790 = vunpack.c.l.b16 %v729
      %v791 = vpack.c.b16 %v790, %v789
      %792 = vrot.lane.b32.xlu0 %v791, 120
      %v793 = vpop.permute.xlu0 %792
      %v795 = vsel %vm739, %v791, 0
      %v798 = vsel %vm739, %v793, 0
      %800 = vmatpush.bf16.xpose.msra.mxu0 0
      %801 = vmatpush.bf16.xpose.msra.mxu0 0
      %802 = vmatpush.bf16.xpose.msra.mxu0 0
      %803 = vmatpush.bf16.xpose.msra.mxu0 0
      %804 = vmatpush.bf16.xpose.msra.mxu0 0
      %805 = vmatpush.bf16.xpose.msra.mxu0 0
      %806 = vmatpush.bf16.xpose.msra.mxu0 0
      %807 = vmatpush.bf16.xpose.msra.mxu0 %v798
      %808 = vmatmul.bf16.gmra.mxu0 %v795
      %v809 = vpop.f32.mrf.mxu0
      %v810 = vadd.f32 %v720, %v809
      %v811 = vpop.f32.mrf.mxu0
      %v812 = vadd.f32 %v721, %v811
      %813 = vdwg.mxu0
      %v816 = vunpack.c.l.b16 %v730
      %v817 = vunpack.c.l.b16 %v731
      %v818 = vpack.c.b16 %v817, %v816
      %819 = vrot.lane.b32.xlu0 %v818, 120
      %v820 = vpop.permute.xlu0 %819
      %v822 = vsel %vm739, %v818, 0
      %v825 = vsel %vm739, %v820, 0
      %827 = vmatpush.bf16.xpose.msra.mxu0 0
      %828 = vmatpush.bf16.xpose.msra.mxu0 0
      %829 = vmatpush.bf16.xpose.msra.mxu0 0
      %830 = vmatpush.bf16.xpose.msra.mxu0 0
      %831 = vmatpush.bf16.xpose.msra.mxu0 0
      %832 = vmatpush.bf16.xpose.msra.mxu0 0
      %833 = vmatpush.bf16.xpose.msra.mxu0 0
      %834 = vmatpush.bf16.xpose.msra.mxu0 %v825
      %835 = vmatmul.bf16.gmra.mxu0 %v822
      %v836 = vpop.f32.mrf.mxu0
      %v837 = vadd.f32 %v722, %v836
      %v838 = vpop.f32.mrf.mxu0
      %v839 = vadd.f32 %v723, %v838
      %840 = vdwg.mxu0
      %vm841 = vcmask 130048
      %v842 = vsel %vm841, %v756, -inf
      %843 = vmax.xlane.f32.xlu0 %v842
      %v844 = vpop.xlane.xlu0 %843
      %v845 = vsel %vm841, %v758, -inf
      %846 = vmax.xlane.f32.xlu0 %v845
      %v847 = vpop.xlane.xlu0 %846
      %v848 = vsel %vm841, %v783, -inf
      %849 = vmax.xlane.f32.xlu0 %v848
      %v850 = vpop.xlane.xlu0 %849
      %v851 = vsel %vm841, %v785, -inf
      %852 = vmax.xlane.f32.xlu0 %v851
      %v853 = vpop.xlane.xlu0 %852
      %v854 = vsel %vm841, %v810, -inf
      %855 = vmax.xlane.f32.xlu0 %v854
      %v856 = vpop.xlane.xlu0 %855
      %v857 = vsel %vm841, %v812, -inf
      %858 = vmax.xlane.f32.xlu0 %v857
      %v859 = vpop.xlane.xlu0 %858
      %v860 = vsel %vm841, %v837, -inf
      %861 = vmax.xlane.f32.xlu0 %v860
      %v862 = vpop.xlane.xlu0 %861
      %v863 = vsel %vm841, %v839, -inf
      %864 = vmax.xlane.f32.xlu0 %v863
      %v865 = vpop.xlane.xlu0 %864
      %v866 = vsub.f32 %v756, %v844
      %v867 = vsub.f32 %v758, %v847
      %v868 = vsub.f32 %v783, %v850
      %v869 = vsub.f32 %v785, %v853
      %v870 = vsub.f32 %v810, %v856
      %v871 = vsub.f32 %v812, %v859
      %v872 = vsub.f32 %v837, %v862
      %v873 = vsub.f32 %v839, %v865
      %v874 = vmul.f32 %v866, 1.442695
      %v875 = vpow.pop %v874
      %v876 = vmul.f32 %v867, 1.442695
      %v877 = vpow.pop %v876
      %v878 = vmul.f32 %v868, 1.442695
      %v879 = vpow.pop %v878
      %v880 = vmul.f32 %v869, 1.442695
      %v881 = vpow.pop %v880
      %v882 = vmul.f32 %v870, 1.442695
      %v883 = vpow.pop %v882
      %v884 = vmul.f32 %v871, 1.442695
      %v885 = vpow.pop %v884
      %v886 = vmul.f32 %v872, 1.442695
      %v887 = vpow.pop %v886
      %v888 = vmul.f32 %v873, 1.442695
      %v889 = vpow.pop %v888
      %v890 = vsel %vm841, %v875, 0.0
      %891 = vadd.xlane.f32.xlu0 %v890
      %v892 = vpop.xlane.xlu0 %891
      %v893 = vsel %vm841, %v877, 0.0
      %894 = vadd.xlane.f32.xlu0 %v893
      %v895 = vpop.xlane.xlu0 %894
      %v896 = vsel %vm841, %v879, 0.0
      %897 = vadd.xlane.f32.xlu0 %v896
      %v898 = vpop.xlane.xlu0 %897
      %v899 = vsel %vm841, %v881, 0.0
      %900 = vadd.xlane.f32.xlu0 %v899
      %v901 = vpop.xlane.xlu0 %900
      %v902 = vsel %vm841, %v883, 0.0
      %903 = vadd.xlane.f32.xlu0 %v902
      %v904 = vpop.xlane.xlu0 %903
      %v905 = vsel %vm841, %v885, 0.0
      %906 = vadd.xlane.f32.xlu0 %v905
      %v907 = vpop.xlane.xlu0 %906
      %v908 = vsel %vm841, %v887, 0.0
      %909 = vadd.xlane.f32.xlu0 %v908
      %v910 = vpop.xlane.xlu0 %909
      %v911 = vsel %vm841, %v889, 0.0
      %912 = vadd.xlane.f32.xlu0 %v911
      %v913 = vpop.xlane.xlu0 %912
      %v914 = vrcp.pop %v892
      %v915 = vrcp.pop %v895
      %v916 = vrcp.pop %v898
      %v917 = vrcp.pop %v901
      %v918 = vrcp.pop %v904
      %v919 = vrcp.pop %v907
      %v920 = vrcp.pop %v910
      %v921 = vrcp.pop %v913
      %v922 = vmul.f32 %v875, %v914
      %v923 = vmul.f32 %v877, %v915
      %v924 = vmul.f32 %v879, %v916
      %v925 = vmul.f32 %v881, %v917
      %v926 = vmul.f32 %v883, %v918
      %v927 = vmul.f32 %v885, %v919
      %v928 = vmul.f32 %v887, %v920
      %v929 = vmul.f32 %v889, %v921
      %v930 = vpack.c.bf16 %v922, %v922
      %v931 = vpack.c.bf16 %v923, %v923
      %v932 = vpack.c.bf16 %v924, %v924
      %v933 = vpack.c.bf16 %v925, %v925
      %v934 = vpack.c.bf16 %v926, %v926
      %v935 = vpack.c.bf16 %v927, %v927
      %v936 = vpack.c.bf16 %v928, %v928
      %v937 = vpack.c.bf16 %v929, %v929
      %v940 = vunpack.c.l.b16 %v930
      %v941 = vunpack.c.l.b16 %v931
      %v942 = vpack.c.b16 %v941, %v940
      %943 = vrot.lane.b32.xlu0 %v736, 112
      %v944 = vpop.permute.xlu0 %943
      %v947 = vsel %vm841, %v942, 0
      %949 = vmatpush.bf16.msra.mxu0 0
      %950 = vmatpush.bf16.msra.mxu0 0
      %951 = vmatpush.bf16.msra.mxu0 0
      %952 = vmatpush.bf16.msra.mxu0 0
      %953 = vmatpush.bf16.msra.mxu0 0
      %954 = vmatpush.bf16.msra.mxu0 0
      %955 = vmatpush.bf16.msra.mxu0 0
      %956 = vmatpush.bf16.msra.mxu0 %v944
      %957 = vmatmul.bf16.gmra.mxu0 %v947
      %v958 = vpop.f32.mrf.mxu0
      %v959 = vadd.f32 0.0, %v958
      %v960 = vpop.f32.mrf.mxu0
      %v961 = vadd.f32 0.0, %v960
      %962 = vdwg.mxu0
      %v965 = vunpack.c.l.b16 %v932
      %v966 = vunpack.c.l.b16 %v933
      %v967 = vpack.c.b16 %v966, %v965
      %968 = vrot.lane.b32.xlu0 %v764, 112
      %v969 = vpop.permute.xlu0 %968
      %v972 = vsel %vm841, %v967, 0
      %974 = vmatpush.bf16.msra.mxu0 0
      %975 = vmatpush.bf16.msra.mxu0 0
      %976 = vmatpush.bf16.msra.mxu0 0
      %977 = vmatpush.bf16.msra.mxu0 0
      %978 = vmatpush.bf16.msra.mxu0 0
      %979 = vmatpush.bf16.msra.mxu0 0
      %980 = vmatpush.bf16.msra.mxu0 0
      %981 = vmatpush.bf16.msra.mxu0 %v969
      %982 = vmatmul.bf16.gmra.mxu0 %v972
      %v983 = vpop.f32.mrf.mxu0
      %v984 = vadd.f32 0.0, %v983
      %v985 = vpop.f32.mrf.mxu0
      %v986 = vadd.f32 0.0, %v985
      %987 = vdwg.mxu0
      %v990 = vunpack.c.l.b16 %v934
      %v991 = vunpack.c.l.b16 %v935
      %v992 = vpack.c.b16 %v991, %v990
      %993 = vrot.lane.b32.xlu0 %v791, 112
      %v994 = vpop.permute.xlu0 %993
      %v997 = vsel %vm841, %v992, 0
      %999 = vmatpush.bf16.msra.mxu0 0
      %1000 = vmatpush.bf16.msra.mxu0 0
      %1001 = vmatpush.bf16.msra.mxu0 0
      %1002 = vmatpush.bf16.msra.mxu0 0
      %1003 = vmatpush.bf16.msra.mxu0 0
      %1004 = vmatpush.bf16.msra.mxu0 0
      %1005 = vmatpush.bf16.msra.mxu0 0
      %1006 = vmatpush.bf16.msra.mxu0 %v994
      %1007 = vmatmul.bf16.gmra.mxu0 %v997
      %v1008 = vpop.f32.mrf.mxu0
      %v1009 = vadd.f32 0.0, %v1008
      %v1010 = vpop.f32.mrf.mxu0
      %v1011 = vadd.f32 0.0, %v1010
      %1012 = vdwg.mxu0
      %v1015 = vunpack.c.l.b16 %v936
      %v1016 = vunpack.c.l.b16 %v937
      %v1017 = vpack.c.b16 %v1016, %v1015
      %1018 = vrot.lane.b32.xlu0 %v818, 112
      %v1019 = vpop.permute.xlu0 %1018
      %v1022 = vsel %vm841, %v1017, 0
      %1024 = vmatpush.bf16.msra.mxu0 0
      %1025 = vmatpush.bf16.msra.mxu0 0
      %1026 = vmatpush.bf16.msra.mxu0 0
      %1027 = vmatpush.bf16.msra.mxu0 0
      %1028 = vmatpush.bf16.msra.mxu0 0
      %1029 = vmatpush.bf16.msra.mxu0 0
      %1030 = vmatpush.bf16.msra.mxu0 0
      %1031 = vmatpush.bf16.msra.mxu0 %v1019
      %1032 = vmatmul.bf16.gmra.mxu0 %v1022
      %v1033 = vpop.f32.mrf.mxu0
      %v1034 = vadd.f32 0.0, %v1033
      %v1035 = vpop.f32.mrf.mxu0
      %v1036 = vadd.f32 0.0, %v1035
      %1037 = vdwg.mxu0
      %v1038 = vld [vmem:[%s419] sm:$0xf]
      %v1039 = vld [vmem:[%s419 + $0x4] sm:$0xf]
      %v1040 = vld [vmem:[%s419 + $0x8] sm:$0xf]
      %v1041 = vld [vmem:[%s419 + $0xc] sm:$0xf]
      %v1042 = vpack.c.bf16 %v959, %v959
      %v1043 = vpack.c.bf16 %v961, %v961
      %v1044 = vpack.c.bf16 %v984, %v984
      %v1045 = vpack.c.bf16 %v986, %v986
      %v1046 = vpack.c.bf16 %v1009, %v1009
      %v1047 = vpack.c.bf16 %v1011, %v1011
      %v1048 = vpack.c.bf16 %v1034, %v1034
      %v1049 = vpack.c.bf16 %v1036, %v1036
      %v1052 = vunpack.c.l.b16 %v1042
      %v1053 = vunpack.c.l.b16 %v1043
      %v1054 = vpack.c.b16 %v1053, %v1052
      %v1056 = vsel %vm739, %v1054, 0
      %vm1058 = vcmask 1043456
      %v1060 = vsel %vm1058, %v1038, 0
      %1062 = vmatpush.bf16.msra.mxu0 0
      %1063 = vmatpush.bf16.msra.mxu0 0
      %1064 = vmatpush.bf16.msra.mxu0 0
      %1065 = vmatpush.bf16.msra.mxu0 0
      %1066 = vmatpush.bf16.msra.mxu0 0
      %1067 = vmatpush.bf16.msra.mxu0 0
      %1068 = vmatpush.bf16.msra.mxu0 0
      %1069 = vmatpush.bf16.msra.mxu0 %v1060
      %1070 = vmatmul.bf16.gmra.mxu0 %v1056
      %v1071 = vpop.f32.mrf.mxu0
      %v1072 = vadd.f32 0.0, %v1071
      %v1073 = vpop.f32.mrf.mxu0
      %v1074 = vadd.f32 0.0, %v1073
      %1075 = vdwg.mxu0
      %v1078 = vunpack.c.l.b16 %v1044
      %v1079 = vunpack.c.l.b16 %v1045
      %v1080 = vpack.c.b16 %v1079, %v1078
      %v1082 = vsel %vm739, %v1080, 0
      %v1085 = vsel %vm1058, %v1039, 0
      %1087 = vmatpush.bf16.msra.mxu0 0
      %1088 = vmatpush.bf16.msra.mxu0 0
      %1089 = vmatpush.bf16.msra.mxu0 0
      %1090 = vmatpush.bf16.msra.mxu0 0
      %1091 = vmatpush.bf16.msra.mxu0 0
      %1092 = vmatpush.bf16.msra.mxu0 0
      %1093 = vmatpush.bf16.msra.mxu0 0
      %1094 = vmatpush.bf16.msra.mxu0 %v1085
      %1095 = vmatmul.bf16.gmra.mxu0 %v1082
      %v1096 = vpop.f32.mrf.mxu0
      %v1097 = vadd.f32 0.0, %v1096
      %v1098 = vpop.f32.mrf.mxu0
      %v1099 = vadd.f32 0.0, %v1098
      %1100 = vdwg.mxu0
      %v1103 = vunpack.c.l.b16 %v1046
      %v1104 = vunpack.c.l.b16 %v1047
      %v1105 = vpack.c.b16 %v1104, %v1103
      %v1107 = vsel %vm739, %v1105, 0
      %v1110 = vsel %vm1058, %v1040, 0
      %1112 = vmatpush.bf16.msra.mxu0 0
      %1113 = vmatpush.bf16.msra.mxu0 0
      %1114 = vmatpush.bf16.msra.mxu0 0
      %1115 = vmatpush.bf16.msra.mxu0 0
      %1116 = vmatpush.bf16.msra.mxu0 0
      %1117 = vmatpush.bf16.msra.mxu0 0
      %1118 = vmatpush.bf16.msra.mxu0 0
      %1119 = vmatpush.bf16.msra.mxu0 %v1110
      %1120 = vmatmul.bf16.gmra.mxu0 %v1107
      %v1121 = vpop.f32.mrf.mxu0
      %v1122 = vadd.f32 0.0, %v1121
      %v1123 = vpop.f32.mrf.mxu0
      %v1124 = vadd.f32 0.0, %v1123
      %1125 = vdwg.mxu0
      %v1128 = vunpack.c.l.b16 %v1048
      %v1129 = vunpack.c.l.b16 %v1049
      %v1130 = vpack.c.b16 %v1129, %v1128
      %v1132 = vsel %vm739, %v1130, 0
      %v1135 = vsel %vm1058, %v1041, 0
      %1137 = vmatpush.bf16.msra.mxu0 0
      %1138 = vmatpush.bf16.msra.mxu0 0
      %1139 = vmatpush.bf16.msra.mxu0 0
      %1140 = vmatpush.bf16.msra.mxu0 0
      %1141 = vmatpush.bf16.msra.mxu0 0
      %1142 = vmatpush.bf16.msra.mxu0 0
      %1143 = vmatpush.bf16.msra.mxu0 0
      %1144 = vmatpush.bf16.msra.mxu0 %v1135
      %1145 = vmatmul.bf16.gmra.mxu0 %v1132
      %v1146 = vpop.f32.mrf.mxu0
      %v1147 = vadd.f32 0.0, %v1146
      %v1148 = vpop.f32.mrf.mxu0
      %v1149 = vadd.f32 0.0, %v1148
      %1150 = vdwg.mxu0
      %v1151 = vsel %vm541, %v1072, 0.0
      %v1152 = vsel %vm541, %v1097, 0.0
      %v1153 = vadd.f32 %v1151, %v1152
      %v1154 = vsel %vm541, %v1122, 0.0
      %v1155 = vadd.f32 %v1153, %v1154
      %v1156 = vsel %vm541, %v1147, 0.0
      %v1157 = vadd.f32 %v1155, %v1156
      %v1158 = vsel %vm541, %v1074, 0.0
      %v1159 = vsel %vm541, %v1099, 0.0
      %v1160 = vadd.f32 %v1158, %v1159
      %v1161 = vsel %vm541, %v1124, 0.0
      %v1162 = vadd.f32 %v1160, %v1161
      %v1163 = vsel %vm541, %v1149, 0.0
      %v1164 = vadd.f32 %v1162, %v1163
      %v1165 = vadd.f32 %v536, %v1157
      %v1166 = vadd.f32 %v537, %v1164
      %v1167 = vld [vmem:[%s422] sm:$0x1]
      %v1168 = vmul.f32 %v1165, %v1165
      %v1169 = vmul.f32 %v1166, %v1166
      %v1170 = vsel %vm541, %v1168, 0.0
      %1171 = vadd.xlane.f32.xlu0 %v1170
      %v1172 = vpop.xlane.xlu0 %1171
      %v1173 = vsel %vm541, %v1169, 0.0
      %1174 = vadd.xlane.f32.xlu0 %v1173
      %v1175 = vpop.xlane.xlu0 %1174
      %v1176 = vmul.f32 %v1172, %v554
      %v1177 = vmul.f32 %v1175, %v554
      %v1178 = vadd.f32 %v1176, 1e-06
      %v1179 = vadd.f32 %v1177, 1e-06
      %v1180 = vrsqrt.pop %v1178
      %v1181 = vmul.f32 %v1180, %v1178
      %v1182 = vmul.f32 %v1181, %v1180
      %v1183 = vmul.f32 0.5, %v1182
      %v1184 = vsub.f32 1.5, %v1183
      %v1185 = vmul.f32 %v1180, %v1184
      %vm1186 = vweird.f32 %v1178
      %vm1187 = vweird.f32 %v1180
      %vm1188 = vmor %vm1186, %vm1187
      %v1189 = vsel %vm1188, %v1180, %v1185
      %v1190 = vrsqrt.pop %v1179
      %v1191 = vmul.f32 %v1190, %v1179
      %v1192 = vmul.f32 %v1191, %v1190
      %v1193 = vmul.f32 0.5, %v1192
      %v1194 = vsub.f32 1.5, %v1193
      %v1195 = vmul.f32 %v1190, %v1194
      %vm1196 = vweird.f32 %v1179
      %vm1197 = vweird.f32 %v1190
      %vm1198 = vmor %vm1196, %vm1197
      %v1199 = vsel %vm1198, %v1190, %v1195
      %v1200 = vmul.f32 %v1165, %v1189
      %v1201 = vmul.f32 %v1166, %v1199
      %v1203 = vperm.slane %v1167, 0
      %v1205 = vmul.f32 %v1200, %v1203
      %v1206 = vmul.f32 %v1201, %v1203
      %v1207 = vld [vmem:[%s427] sm:$0xf]
      %v1208 = vld [vmem:[%s427 + $0x4] sm:$0xf]
      %v1209 = vld [vmem:[%s427 + $0x8] sm:$0xf]
      %v1210 = vld [vmem:[%s427 + $0xc] sm:$0xf]
      %v1211 = vpack.c.bf16 %v1206, %v1205
      %v1216 = vunpack.c.l.b16 %v1207
      %v1217 = vunpack.c.l.b16 %v1208
      %v1218 = vunpack.c.l.b16 %v1209
      %v1219 = vunpack.c.l.b16 %v1210
      %v1220 = vpack.c.b16 %v1217, %v1216
      %v1221 = vpack.c.b16 %v1219, %v1218
      %v1225 = vsel %vm541, %v1211, 0
      %1227 = vmatpush.bf16.msra.mxu0 0
      %1228 = vmatpush.bf16.msra.mxu0 0
      %1229 = vmatpush.bf16.msra.mxu0 0
      %1230 = vmatpush.bf16.msra.mxu0 0
      %1231 = vmatpush.bf16.msra.mxu0 0
      %1232 = vmatpush.bf16.msra.mxu0 0
      %1233 = vmatpush.bf16.msra.mxu0 %v1221
      %1234 = vmatpush.bf16.msra.mxu0 %v1220
      %1235 = vmatmul.bf16.gmra.mxu0 %v1225
      %v1236 = vpop.f32.mrf.mxu0
      %v1237 = vadd.f32 0.0, %v1236
      %v1238 = vpop.f32.mrf.mxu0
      %v1239 = vadd.f32 0.0, %v1238
      %1240 = vdwg.mxu0
      %v1241 = vmax.f32 %v1237, 0.0
      %v1242 = vmax.f32 %v1239, 0.0
      %v1243 = vld [vmem:[%s432] sm:$0xf]
      %v1244 = vld [vmem:[%s432 + $0x4] sm:$0xf]
      %v1245 = vld [vmem:[%s432 + $0x8] sm:$0xf]
      %v1246 = vld [vmem:[%s432 + $0xc] sm:$0xf]
      %v1247 = vld [vmem:[%s432 + $0x10] sm:$0xf]
      %v1248 = vld [vmem:[%s432 + $0x14] sm:$0xf]
      %v1249 = vld [vmem:[%s432 + $0x18] sm:$0xf]
      %v1250 = vld [vmem:[%s432 + $0x1c] sm:$0xf]
      %v1251 = vpack.c.bf16 %v1242, %v1241
      %v1260 = vunpack.c.l.b16 %v1243
      %v1261 = vunpack.c.l.b16 %v1244
      %v1262 = vunpack.c.l.b16 %v1245
      %v1263 = vunpack.c.l.b16 %v1246
      %v1264 = vunpack.c.l.b16 %v1247
      %v1265 = vunpack.c.l.b16 %v1248
      %v1266 = vunpack.c.l.b16 %v1249
      %v1267 = vunpack.c.l.b16 %v1250
      %v1268 = vpack.c.b16 %v1261, %v1260
      %v1269 = vpack.c.b16 %v1263, %v1262
      %v1270 = vpack.c.b16 %v1265, %v1264
      %v1271 = vpack.c.b16 %v1267, %v1266
      %vm1276 = vcmask 523264
      %v1278 = vsel %vm1276, %v1251, 0
      %1280 = vmatpush.bf16.msra.mxu0 0
      %1281 = vmatpush.bf16.msra.mxu0 0
      %1282 = vmatpush.bf16.msra.mxu0 0
      %1283 = vmatpush.bf16.msra.mxu0 0
      %1284 = vmatpush.bf16.msra.mxu0 %v1271
      %1285 = vmatpush.bf16.msra.mxu0 %v1270
      %1286 = vmatpush.bf16.msra.mxu0 %v1269
      %1287 = vmatpush.bf16.msra.mxu0 %v1268
      %1288 = vmatmul.bf16.gmra.mxu0 %v1278
      %v1289 = vpop.f32.mrf.mxu0
      %v1290 = vadd.f32 0.0, %v1289
      %v1291 = vpop.f32.mrf.mxu0
      %v1292 = vadd.f32 0.0, %v1291
      %1293 = vdwg.mxu0
      %v1294 = vadd.f32 %v1165, %v1290
      %v1295 = vadd.f32 %v1166, %v1292
      %1296 = vst.msk [vmem:[#allocation2] sm:$0xff] %vm541, %v1294
      %1297 = vst.msk [vmem:[#allocation2 + $0x8] sm:$0xff] %vm541, %v1295
      %p1298 = scmp.eq.s32.totalorder %s21, 1
      // Predicated region
      $region65: #{merge_t5_forward.2} parent=59 // pred_check
        %p1299 = pneg %p1298
      $region66: #{merge_t5_forward.2} parent=59 // pred_check_branch
        %1301 = sbr.rel (%p1299) target = $region68
      $region67: #{merge_t5_forward.2} parent=59 // pred_region
        %v1302 = vld [vmem:[%s3] sm:$0x1]
        %v1303 = vmul.f32 %v1294, %v1294
        %v1304 = vmul.f32 %v1295, %v1295
        %v1305 = vsel %vm541, %v1303, 0.0
        %1306 = vadd.xlane.f32.xlu0 %v1305
        %v1307 = vpop.xlane.xlu0 %1306
        %v1308 = vsel %vm541, %v1304, 0.0
        %1309 = vadd.xlane.f32.xlu0 %v1308
        %v1310 = vpop.xlane.xlu0 %1309
        %v1311 = vmul.f32 %v1307, %v554
        %v1312 = vmul.f32 %v1310, %v554
        %v1313 = vadd.f32 %v1311, 1e-06
        %v1314 = vadd.f32 %v1312, 1e-06
        %v1315 = vrsqrt.pop %v1313
        %v1316 = vmul.f32 %v1315, %v1313
        %v1317 = vmul.f32 %v1316, %v1315
        %v1318 = vmul.f32 0.5, %v1317
        %v1319 = vsub.f32 1.5, %v1318
        %v1320 = vmul.f32 %v1315, %v1319
        %vm1321 = vweird.f32 %v1313
        %vm1322 = vweird.f32 %v1315
        %vm1323 = vmor %vm1321, %vm1322
        %v1324 = vsel %vm1323, %v1315, %v1320
        %v1325 = vrsqrt.pop %v1314
        %v1326 = vmul.f32 %v1325, %v1314
        %v1327 = vmul.f32 %v1326, %v1325
        %v1328 = vmul.f32 0.5, %v1327
        %v1329 = vsub.f32 1.5, %v1328
        %v1330 = vmul.f32 %v1325, %v1329
        %vm1331 = vweird.f32 %v1314
        %vm1332 = vweird.f32 %v1325
        %vm1333 = vmor %vm1331, %vm1332
        %v1334 = vsel %vm1333, %v1325, %v1330
        %v1335 = vmul.f32 %v1294, %v1324
        %v1336 = vmul.f32 %v1295, %v1334
        %v1338 = vperm.slane %v1302, 0
        %v1340 = vmul.f32 %v1335, %v1338
        %v1341 = vmul.f32 %v1336, %v1338
        %1342 = vst.msk [vmem:[%s10] sm:$0xff] %vm541, %v1340
        %1343 = vst.msk [vmem:[%s10 + $0x8] sm:$0xff] %vm541, %v1341
      $region68: #{merge_t5_forward.2} parent=59 // pred_fallthru
        _
      // Predicated region
      $region69: #{merge_t5_forward.2} parent=59 // pred_check
        %p1344 = pneg %p274
      $region70: #{merge_t5_forward.2} parent=59 // pred_check_branch
        %1346 = sbr.rel (%p1344) target = $region72
      $region71: #{merge_t5_forward.2} parent=59 // pred_region
        _
      $region72: #{merge_t5_forward.2} parent=59 // pred_fallthru
        _
      // Predicated region
      $region73: #{merge_t5_forward.2} parent=59 // pred_check
        %p1347 = pneg %p274
      $region74: #{merge_t5_forward.2} parent=59 // pred_check_branch
        %1349 = sbr.rel (%p1347) target = $region76
      $region75: #{merge_t5_forward.2} parent=59 // pred_region
        _
      $region76: #{merge_t5_forward.2} parent=59 // pred_fallthru
        _
    $region60: #{merge_t5_forward.2} parent=5 // pred_fallthru
      _
    %p1350 = scmp.le.s32.totalorder 2, %s16
    // Predicated region
    $region77: #{merge_t5_forward.2} parent=5 // pred_check
      %p1351 = pneg %p1350
    $region78: #{merge_t5_forward.2} parent=5 // pred_check_branch
      %1353 = sbr.rel (%p1351) target = $region80
    $region79: #{merge_t5_forward.2} parent=5 // pred_region
      %s1354 = ssub.s32 %s16, 2
    $region80: #{merge_t5_forward.2} parent=5 // pred_fallthru
      _
  $region6: #{merge_t5_forward.2} parent=0 // loop_footer
    %s20 = sadd.s32 1, %s16
  $region7: #{merge_t5_forward.2} parent=0 // loop_footer_branch
    %15 = sbr.rel target = $region3
  $region8: #{merge_t5_forward.2} parent=0 // loop_exit
    _

// kernel: merge_t5_forward.3
$region0: #{merge_t5_forward.3}
  #allocation0 [shape = 'u32[]', space=smem, size = 0x4, offset = 0x4, fixed_abs, tag = 'smem constant byte address 0x4 - core index']
  #allocation1 [shape = 'u32[72,128]{1,0:T(1,128)}', space=vmem, size = 0x9000, scoped, tag = 'internal scratch']
  #allocation2 [shape = 'f32[16,32]{1,0:T(8,128)}', space=vmem, size = 0x2000, scoped, tag = 'scratch operand']
  %s0 = inlined_call_operand.vmem [shape: s32[16,1], index: 0, kind: input, shape index: {}]
  %s1 = inlined_call_operand.vmem [shape: f32[16,32], index: 1, kind: input, shape index: {}]
  %s2 = inlined_call_operand.vmem [shape: bf16[128,32], index: 2, kind: input, shape index: {}]
  %s3 = inlined_call_operand.vmem [shape: f32[4,16,16], index: 3, kind: input, shape index: {}]
  %s4 = inlined_call_operand.vmem [shape: f32[16,16], index: 4, kind: input, shape index: {}]
  %s5 = inlined_call_operand.vmem [shape: f32[1,32], index: 5, kind: input, shape index: {}]
  %s6 = inlined_call_operand.vmem [shape: bf16[32,128], index: 6, kind: input, shape index: {}]
  %s7 = inlined_call_operand.vmem [shape: f32[2,1,32], index: 7, kind: input, shape index: {}]
  %s8 = inlined_call_operand.vmem [shape: bf16[2,4,32,24], index: 8, kind: input, shape index: {}]
  %s9 = inlined_call_operand.vmem [shape: bf16[2,4,8,32], index: 9, kind: input, shape index: {}]
  %s10 = inlined_call_operand.vmem [shape: f32[2,1,32], index: 10, kind: input, shape index: {}]
  %s11 = inlined_call_operand.vmem [shape: bf16[2,4,32,8], index: 11, kind: input, shape index: {}]
  %s12 = inlined_call_operand.vmem [shape: bf16[2,4,32,16], index: 12, kind: input, shape index: {}]
  %s13 = inlined_call_operand.vmem [shape: bf16[2,4,8,32], index: 13, kind: input, shape index: {}]
  %s14 = inlined_call_operand.vmem [shape: f32[2,1,32], index: 14, kind: input, shape index: {}]
  %s15 = inlined_call_operand.vmem [shape: bf16[2,32,64], index: 15, kind: input, shape index: {}]
  %s16 = inlined_call_operand.vmem [shape: bf16[2,64,32], index: 16, kind: input, shape index: {}]
  %s17 = inlined_call_operand.hbm [shape: f32[16,128], index: 17, kind: output, shape index: {}]
  %s18 = sld [smem:[#allocation0]]
  $region109: #{merge_t5_forward.3} parent=0
    _
  %s20 = ssub.s32 1, %s18
  %s21 = scalar_select 0, %s20, %s18
  $region1: #{merge_t5_forward.3} parent=0
    #allocation3 [shape = 'u8[8192]{0}', space=vmem, size = 0x2000, scoped, tag = 'output window, operand 0, single buffered']
    #allocation4 [shape = 's32[2]{0}', space=sflag, size = 0x8, scoped, tag = 'scoped memory for merge_t5_forward.3']
    %22 = vsyncpa [#allocation4], 0
    loop: start=0, step=1, limit=4
    $region2: #{merge_t5_forward.3} parent=1 // loop_pre_header
      _
    $region3: #{merge_t5_forward.3} parent=1 // loop_header
      %s24 = sphi 0, %s28
      %p25 = scmp.ge.s32.totalorder %s24, 4
      %s32 = sphi 0, %s32
      %s34 = sphi 0, %s32
      %s35 = sphi 0, %s34
      %s49 = sphi 0, %s35
      %s53 = sphi 0, %s53
      %s55 = sphi 0, %s53
      %s56 = sphi 0, %s55
      %s70 = sphi 0, %s56
      %s74 = sphi 0, %s74
      %s76 = sphi 0, %s74
      %s77 = sphi 0, %s76
      %s91 = sphi 0, %s77
      %s95 = sphi 0, %s95
      %s97 = sphi 0, %s95
      %s98 = sphi 0, %s97
      %s112 = sphi 0, %s98
      %s116 = sphi 0, %s116
      %s118 = sphi 0, %s116
      %s119 = sphi 0, %s118
      %s133 = sphi 0, %s119
      %s137 = sphi 0, %s137
      %s139 = sphi 0, %s137
      %s140 = sphi 0, %s139
      %s154 = sphi 0, %s140
      %s158 = sphi 0, %s158
      %s160 = sphi 0, %s158
      %s161 = sphi 0, %s160
      %s175 = sphi 0, %s161
      %s181 = sphi 0, %s183
      %s184 = sphi 0, %s181
      %s185 = sphi 0, %s184
      %s201 = sphi 0, %s185
      %s207 = sphi 0, %s209
      %s210 = sphi 0, %s207
      %s211 = sphi 0, %s210
      %s227 = sphi 0, %s211
      %s233 = sphi 0, %s235
      %s236 = sphi 0, %s233
      %s237 = sphi 0, %s236
      %s253 = sphi 0, %s237
      %s259 = sphi 0, %s261
      %s262 = sphi 0, %s259
      %s263 = sphi 0, %s262
      %s279 = sphi 0, %s263
      %s285 = sphi 0, %s287
      %s288 = sphi 0, %s285
      %s289 = sphi 0, %s288
      %s305 = sphi 0, %s289
      %s311 = sphi 0, %s313
      %s314 = sphi 0, %s311
      %s315 = sphi 0, %s314
      %s331 = sphi 0, %s315
      %s337 = sphi 0, %s339
      %s340 = sphi 0, %s337
      %s341 = sphi 0, %s340
      %s357 = sphi 0, %s341
      %s363 = sphi 0, %s365
      %s366 = sphi 0, %s363
      %s367 = sphi 0, %s366
      %s383 = sphi 0, %s367
      %s389 = sphi 0, %s391
      %s392 = sphi 0, %s389
      %s393 = sphi 0, %s392
      %s409 = sphi 0, %s393
      %s415 = sphi 0, %s417
      %s418 = sphi 0, %s415
      %s419 = sphi 0, %s418
      %s435 = sphi 0, %s419
      %s439 = sphi 0, %s439
      %s441 = sphi 0, %s439
      %s442 = sphi 0, %s441
      %s456 = sphi 0, %s442
    $region4: #{merge_t5_forward.3} parent=1 // loop_header_branch
      %27 = sbr.rel (%p25) target = $region8
    $region5: #{merge_t5_forward.3} parent=1 // loop_body
      %s29 = ssub.s32 %s24, 1
      %s30 = ssub.s32 %s24, 2
      %s31 = sadd.s32 %s24, 1
      %s33 = sadd.s32 %s32, 1
      %p36 = scmp.eq.s32.totalorder %s24, 1
      %p37 = scmp.ne.s32.totalorder %s32, %s34
      %p38 = scmp.eq.s32.totalorder %s24, 0
      %p39 = por %p37, %p38
      %p40 = scmp.ne.s32.totalorder %s32, %s34
      %p41 = scmp.eq.s32.totalorder %s29, 1
      %p42 = por %p40, %p41
      %p43 = scmp.ne.s32.totalorder %s34, %s35
      %p44 = scmp.eq.s32.totalorder %s29, 0
      %p45 = por %p43, %p44
      %p46 = scmp.ne.s32.totalorder %s34, %s35
      %p47 = scmp.eq.s32.totalorder %s30, 1
      %p48 = por %p46, %p47
      %p50 = scmp.ne.s32.totalorder %s35, %s49
      %p51 = scmp.eq.s32.totalorder %s30, 0
      %p52 = por %p50, %p51
      %s54 = sadd.s32 %s53, 1
      %p57 = scmp.eq.s32.totalorder %s24, 1
      %p58 = scmp.ne.s32.totalorder %s53, %s55
      %p59 = scmp.eq.s32.totalorder %s24, 0
      %p60 = por %p58, %p59
      %p61 = scmp.ne.s32.totalorder %s53, %s55
      %p62 = scmp.eq.s32.totalorder %s29, 1
      %p63 = por %p61, %p62
      %p64 = scmp.ne.s32.totalorder %s55, %s56
      %p65 = scmp.eq.s32.totalorder %s29, 0
      %p66 = por %p64, %p65
      %p67 = scmp.ne.s32.totalorder %s55, %s56
      %p68 = scmp.eq.s32.totalorder %s30, 1
      %p69 = por %p67, %p68
      %p71 = scmp.ne.s32.totalorder %s56, %s70
      %p72 = scmp.eq.s32.totalorder %s30, 0
      %p73 = por %p71, %p72
      %s75 = sadd.s32 %s74, 1
      %p78 = scmp.eq.s32.totalorder %s24, 1
      %p79 = scmp.ne.s32.totalorder %s74, %s76
      %p80 = scmp.eq.s32.totalorder %s24, 0
      %p81 = por %p79, %p80
      %p82 = scmp.ne.s32.totalorder %s74, %s76
      %p83 = scmp.eq.s32.totalorder %s29, 1
      %p84 = por %p82, %p83
      %p85 = scmp.ne.s32.totalorder %s76, %s77
      %p86 = scmp.eq.s32.totalorder %s29, 0
      %p87 = por %p85, %p86
      %p88 = scmp.ne.s32.totalorder %s76, %s77
      %p89 = scmp.eq.s32.totalorder %s30, 1
      %p90 = por %p88, %p89
      %p92 = scmp.ne.s32.totalorder %s77, %s91
      %p93 = scmp.eq.s32.totalorder %s30, 0
      %p94 = por %p92, %p93
      %s96 = sadd.s32 %s95, 1
      %p99 = scmp.eq.s32.totalorder %s24, 1
      %p100 = scmp.ne.s32.totalorder %s95, %s97
      %p101 = scmp.eq.s32.totalorder %s24, 0
      %p102 = por %p100, %p101
      %p103 = scmp.ne.s32.totalorder %s95, %s97
      %p104 = scmp.eq.s32.totalorder %s29, 1
      %p105 = por %p103, %p104
      %p106 = scmp.ne.s32.totalorder %s97, %s98
      %p107 = scmp.eq.s32.totalorder %s29, 0
      %p108 = por %p106, %p107
      %p109 = scmp.ne.s32.totalorder %s97, %s98
      %p110 = scmp.eq.s32.totalorder %s30, 1
      %p111 = por %p109, %p110
      %p113 = scmp.ne.s32.totalorder %s98, %s112
      %p114 = scmp.eq.s32.totalorder %s30, 0
      %p115 = por %p113, %p114
      %s117 = sadd.s32 %s116, 1
      %p120 = scmp.eq.s32.totalorder %s24, 1
      %p121 = scmp.ne.s32.totalorder %s116, %s118
      %p122 = scmp.eq.s32.totalorder %s24, 0
      %p123 = por %p121, %p122
      %p124 = scmp.ne.s32.totalorder %s116, %s118
      %p125 = scmp.eq.s32.totalorder %s29, 1
      %p126 = por %p124, %p125
      %p127 = scmp.ne.s32.totalorder %s118, %s119
      %p128 = scmp.eq.s32.totalorder %s29, 0
      %p129 = por %p127, %p128
      %p130 = scmp.ne.s32.totalorder %s118, %s119
      %p131 = scmp.eq.s32.totalorder %s30, 1
      %p132 = por %p130, %p131
      %p134 = scmp.ne.s32.totalorder %s119, %s133
      %p135 = scmp.eq.s32.totalorder %s30, 0
      %p136 = por %p134, %p135
      %s138 = sadd.s32 %s137, 1
      %p141 = scmp.eq.s32.totalorder %s24, 1
      %p142 = scmp.ne.s32.totalorder %s137, %s139
      %p143 = scmp.eq.s32.totalorder %s24, 0
      %p144 = por %p142, %p143
      %p145 = scmp.ne.s32.totalorder %s137, %s139
      %p146 = scmp.eq.s32.totalorder %s29, 1
      %p147 = por %p145, %p146
      %p148 = scmp.ne.s32.totalorder %s139, %s140
      %p149 = scmp.eq.s32.totalorder %s29, 0
      %p150 = por %p148, %p149
      %p151 = scmp.ne.s32.totalorder %s139, %s140
      %p152 = scmp.eq.s32.totalorder %s30, 1
      %p153 = por %p151, %p152
      %p155 = scmp.ne.s32.totalorder %s140, %s154
      %p156 = scmp.eq.s32.totalorder %s30, 0
      %p157 = por %p155, %p156
      %s159 = sadd.s32 %s158, 1
      %p162 = scmp.eq.s32.totalorder %s24, 1
      %p163 = scmp.ne.s32.totalorder %s158, %s160
      %p164 = scmp.eq.s32.totalorder %s24, 0
      %p165 = por %p163, %p164
      %p166 = scmp.ne.s32.totalorder %s158, %s160
      %p167 = scmp.eq.s32.totalorder %s29, 1
      %p168 = por %p166, %p167
      %p169 = scmp.ne.s32.totalorder %s160, %s161
      %p170 = scmp.eq.s32.totalorder %s29, 0
      %p171 = por %p169, %p170
      %p172 = scmp.ne.s32.totalorder %s160, %s161
      %p173 = scmp.eq.s32.totalorder %s30, 1
      %p174 = por %p172, %p173
      %p176 = scmp.ne.s32.totalorder %s161, %s175
      %p177 = scmp.eq.s32.totalorder %s30, 0
      %p178 = por %p176, %p177
      %s179 = ssub.s32 %s24, %s31
      %p180 = scmp.eq.s32.totalorder %s179, 0
      %s182 = sadd.s32 %s181, 1
      %s183 = scalar_select %p180, %s181, %s182
      %p186 = pneg %p180
      %p187 = scmp.eq.s32.totalorder %s24, 1
      %p188 = por %p186, %p187
      %p189 = scmp.ne.s32.totalorder %s181, %s184
      %p190 = scmp.eq.s32.totalorder %s24, 0
      %p191 = por %p189, %p190
      %p192 = scmp.ne.s32.totalorder %s181, %s184
      %p193 = scmp.eq.s32.totalorder %s29, 1
      %p194 = por %p192, %p193
      %p195 = scmp.ne.s32.totalorder %s184, %s185
      %p196 = scmp.eq.s32.totalorder %s29, 0
      %p197 = por %p195, %p196
      %p198 = scmp.ne.s32.totalorder %s184, %s185
      %p199 = scmp.eq.s32.totalorder %s30, 1
      %p200 = por %p198, %p199
      %p202 = scmp.ne.s32.totalorder %s185, %s201
      %p203 = scmp.eq.s32.totalorder %s30, 0
      %p204 = por %p202, %p203
      %s205 = ssub.s32 %s24, %s31
      %p206 = scmp.eq.s32.totalorder %s205, 0
      %s208 = sadd.s32 %s207, 1
      %s209 = scalar_select %p206, %s207, %s208
      %p212 = pneg %p206
      %p213 = scmp.eq.s32.totalorder %s24, 1
      %p214 = por %p212, %p213
      %p215 = scmp.ne.s32.totalorder %s207, %s210
      %p216 = scmp.eq.s32.totalorder %s24, 0
      %p217 = por %p215, %p216
      %p218 = scmp.ne.s32.totalorder %s207, %s210
      %p219 = scmp.eq.s32.totalorder %s29, 1
      %p220 = por %p218, %p219
      %p221 = scmp.ne.s32.totalorder %s210, %s211
      %p222 = scmp.eq.s32.totalorder %s29, 0
      %p223 = por %p221, %p222
      %p224 = scmp.ne.s32.totalorder %s210, %s211
      %p225 = scmp.eq.s32.totalorder %s30, 1
      %p226 = por %p224, %p225
      %p228 = scmp.ne.s32.totalorder %s211, %s227
      %p229 = scmp.eq.s32.totalorder %s30, 0
      %p230 = por %p228, %p229
      %s231 = ssub.s32 %s24, %s31
      %p232 = scmp.eq.s32.totalorder %s231, 0
      %s234 = sadd.s32 %s233, 1
      %s235 = scalar_select %p232, %s233, %s234
      %p238 = pneg %p232
      %p239 = scmp.eq.s32.totalorder %s24, 1
      %p240 = por %p238, %p239
      %p241 = scmp.ne.s32.totalorder %s233, %s236
      %p242 = scmp.eq.s32.totalorder %s24, 0
      %p243 = por %p241, %p242
      %p244 = scmp.ne.s32.totalorder %s233, %s236
      %p245 = scmp.eq.s32.totalorder %s29, 1
      %p246 = por %p244, %p245
      %p247 = scmp.ne.s32.totalorder %s236, %s237
      %p248 = scmp.eq.s32.totalorder %s29, 0
      %p249 = por %p247, %p248
      %p250 = scmp.ne.s32.totalorder %s236, %s237
      %p251 = scmp.eq.s32.totalorder %s30, 1
      %p252 = por %p250, %p251
      %p254 = scmp.ne.s32.totalorder %s237, %s253
      %p255 = scmp.eq.s32.totalorder %s30, 0
      %p256 = por %p254, %p255
      %s257 = ssub.s32 %s24, %s31
      %p258 = scmp.eq.s32.totalorder %s257, 0
      %s260 = sadd.s32 %s259, 1
      %s261 = scalar_select %p258, %s259, %s260
      %p264 = pneg %p258
      %p265 = scmp.eq.s32.totalorder %s24, 1
      %p266 = por %p264, %p265
      %p267 = scmp.ne.s32.totalorder %s259, %s262
      %p268 = scmp.eq.s32.totalorder %s24, 0
      %p269 = por %p267, %p268
      %p270 = scmp.ne.s32.totalorder %s259, %s262
      %p271 = scmp.eq.s32.totalorder %s29, 1
      %p272 = por %p270, %p271
      %p273 = scmp.ne.s32.totalorder %s262, %s263
      %p274 = scmp.eq.s32.totalorder %s29, 0
      %p275 = por %p273, %p274
      %p276 = scmp.ne.s32.totalorder %s262, %s263
      %p277 = scmp.eq.s32.totalorder %s30, 1
      %p278 = por %p276, %p277
      %p280 = scmp.ne.s32.totalorder %s263, %s279
      %p281 = scmp.eq.s32.totalorder %s30, 0
      %p282 = por %p280, %p281
      %s283 = ssub.s32 %s24, %s31
      %p284 = scmp.eq.s32.totalorder %s283, 0
      %s286 = sadd.s32 %s285, 1
      %s287 = scalar_select %p284, %s285, %s286
      %p290 = pneg %p284
      %p291 = scmp.eq.s32.totalorder %s24, 1
      %p292 = por %p290, %p291
      %p293 = scmp.ne.s32.totalorder %s285, %s288
      %p294 = scmp.eq.s32.totalorder %s24, 0
      %p295 = por %p293, %p294
      %p296 = scmp.ne.s32.totalorder %s285, %s288
      %p297 = scmp.eq.s32.totalorder %s29, 1
      %p298 = por %p296, %p297
      %p299 = scmp.ne.s32.totalorder %s288, %s289
      %p300 = scmp.eq.s32.totalorder %s29, 0
      %p301 = por %p299, %p300
      %p302 = scmp.ne.s32.totalorder %s288, %s289
      %p303 = scmp.eq.s32.totalorder %s30, 1
      %p304 = por %p302, %p303
      %p306 = scmp.ne.s32.totalorder %s289, %s305
      %p307 = scmp.eq.s32.totalorder %s30, 0
      %p308 = por %p306, %p307
      %s309 = ssub.s32 %s24, %s31
      %p310 = scmp.eq.s32.totalorder %s309, 0
      %s312 = sadd.s32 %s311, 1
      %s313 = scalar_select %p310, %s311, %s312
      %p316 = pneg %p310
      %p317 = scmp.eq.s32.totalorder %s24, 1
      %p318 = por %p316, %p317
      %p319 = scmp.ne.s32.totalorder %s311, %s314
      %p320 = scmp.eq.s32.totalorder %s24, 0
      %p321 = por %p319, %p320
      %p322 = scmp.ne.s32.totalorder %s311, %s314
      %p323 = scmp.eq.s32.totalorder %s29, 1
      %p324 = por %p322, %p323
      %p325 = scmp.ne.s32.totalorder %s314, %s315
      %p326 = scmp.eq.s32.totalorder %s29, 0
      %p327 = por %p325, %p326
      %p328 = scmp.ne.s32.totalorder %s314, %s315
      %p329 = scmp.eq.s32.totalorder %s30, 1
      %p330 = por %p328, %p329
      %p332 = scmp.ne.s32.totalorder %s315, %s331
      %p333 = scmp.eq.s32.totalorder %s30, 0
      %p334 = por %p332, %p333
      %s335 = ssub.s32 %s24, %s31
      %p336 = scmp.eq.s32.totalorder %s335, 0
      %s338 = sadd.s32 %s337, 1
      %s339 = scalar_select %p336, %s337, %s338
      %p342 = pneg %p336
      %p343 = scmp.eq.s32.totalorder %s24, 1
      %p344 = por %p342, %p343
      %p345 = scmp.ne.s32.totalorder %s337, %s340
      %p346 = scmp.eq.s32.totalorder %s24, 0
      %p347 = por %p345, %p346
      %p348 = scmp.ne.s32.totalorder %s337, %s340
      %p349 = scmp.eq.s32.totalorder %s29, 1
      %p350 = por %p348, %p349
      %p351 = scmp.ne.s32.totalorder %s340, %s341
      %p352 = scmp.eq.s32.totalorder %s29, 0
      %p353 = por %p351, %p352
      %p354 = scmp.ne.s32.totalorder %s340, %s341
      %p355 = scmp.eq.s32.totalorder %s30, 1
      %p356 = por %p354, %p355
      %p358 = scmp.ne.s32.totalorder %s341, %s357
      %p359 = scmp.eq.s32.totalorder %s30, 0
      %p360 = por %p358, %p359
      %s361 = ssub.s32 %s24, %s31
      %p362 = scmp.eq.s32.totalorder %s361, 0
      %s364 = sadd.s32 %s363, 1
      %s365 = scalar_select %p362, %s363, %s364
      %p368 = pneg %p362
      %p369 = scmp.eq.s32.totalorder %s24, 1
      %p370 = por %p368, %p369
      %p371 = scmp.ne.s32.totalorder %s363, %s366
      %p372 = scmp.eq.s32.totalorder %s24, 0
      %p373 = por %p371, %p372
      %p374 = scmp.ne.s32.totalorder %s363, %s366
      %p375 = scmp.eq.s32.totalorder %s29, 1
      %p376 = por %p374, %p375
      %p377 = scmp.ne.s32.totalorder %s366, %s367
      %p378 = scmp.eq.s32.totalorder %s29, 0
      %p379 = por %p377, %p378
      %p380 = scmp.ne.s32.totalorder %s366, %s367
      %p381 = scmp.eq.s32.totalorder %s30, 1
      %p382 = por %p380, %p381
      %p384 = scmp.ne.s32.totalorder %s367, %s383
      %p385 = scmp.eq.s32.totalorder %s30, 0
      %p386 = por %p384, %p385
      %s387 = ssub.s32 %s24, %s31
      %p388 = scmp.eq.s32.totalorder %s387, 0
      %s390 = sadd.s32 %s389, 1
      %s391 = scalar_select %p388, %s389, %s390
      %p394 = pneg %p388
      %p395 = scmp.eq.s32.totalorder %s24, 1
      %p396 = por %p394, %p395
      %p397 = scmp.ne.s32.totalorder %s389, %s392
      %p398 = scmp.eq.s32.totalorder %s24, 0
      %p399 = por %p397, %p398
      %p400 = scmp.ne.s32.totalorder %s389, %s392
      %p401 = scmp.eq.s32.totalorder %s29, 1
      %p402 = por %p400, %p401
      %p403 = scmp.ne.s32.totalorder %s392, %s393
      %p404 = scmp.eq.s32.totalorder %s29, 0
      %p405 = por %p403, %p404
      %p406 = scmp.ne.s32.totalorder %s392, %s393
      %p407 = scmp.eq.s32.totalorder %s30, 1
      %p408 = por %p406, %p407
      %p410 = scmp.ne.s32.totalorder %s393, %s409
      %p411 = scmp.eq.s32.totalorder %s30, 0
      %p412 = por %p410, %p411
      %s413 = ssub.s32 %s24, %s31
      %p414 = scmp.eq.s32.totalorder %s413, 0
      %s416 = sadd.s32 %s415, 1
      %s417 = scalar_select %p414, %s415, %s416
      %p420 = pneg %p414
      %p421 = scmp.eq.s32.totalorder %s24, 1
      %p422 = por %p420, %p421
      %p423 = scmp.ne.s32.totalorder %s415, %s418
      %p424 = scmp.eq.s32.totalorder %s24, 0
      %p425 = por %p423, %p424
      %p426 = scmp.ne.s32.totalorder %s415, %s418
      %p427 = scmp.eq.s32.totalorder %s29, 1
      %p428 = por %p426, %p427
      %p429 = scmp.ne.s32.totalorder %s418, %s419
      %p430 = scmp.eq.s32.totalorder %s29, 0
      %p431 = por %p429, %p430
      %p432 = scmp.ne.s32.totalorder %s418, %s419
      %p433 = scmp.eq.s32.totalorder %s30, 1
      %p434 = por %p432, %p433
      %p436 = scmp.ne.s32.totalorder %s419, %s435
      %p437 = scmp.eq.s32.totalorder %s30, 0
      %p438 = por %p436, %p437
      %s440 = sadd.s32 %s439, 1
      %p443 = scmp.eq.s32.totalorder %s24, 1
      %p444 = scmp.ne.s32.totalorder %s439, %s441
      %p445 = scmp.eq.s32.totalorder %s24, 0
      %p446 = por %p444, %p445
      %p447 = scmp.ne.s32.totalorder %s439, %s441
      %p448 = scmp.eq.s32.totalorder %s29, 1
      %p449 = por %p447, %p448
      %p450 = scmp.ne.s32.totalorder %s441, %s442
      %p451 = scmp.eq.s32.totalorder %s29, 0
      %p452 = por %p450, %p451
      %p453 = scmp.ne.s32.totalorder %s441, %s442
      %p454 = scmp.eq.s32.totalorder %s30, 1
      %p455 = por %p453, %p454
      %p457 = scmp.ne.s32.totalorder %s442, %s456
      %p458 = scmp.eq.s32.totalorder %s30, 0
      %p459 = por %p457, %p458
      %p460 = scmp.le.s32.totalorder 1, %s24
      %p461 = scmp.lt.s32.totalorder %s24, 3
      %p462 = pnand %p460, %p461
      %p463 = pneg %p462
      // Predicated region
      $region9: #{merge_t5_forward.3} parent=5 // pred_check
        _
      $region10: #{merge_t5_forward.3} parent=5 // pred_check_branch
        %465 = sbr.rel (%p462) target = $region12
      $region11: #{merge_t5_forward.3} parent=5 // pred_region
        %s466 = ssub.s32 %s24, 1
        // Predicated region
        $region13: #{merge_t5_forward.3} parent=11 // pred_check
          %p467 = pneg %p45
        $region14: #{merge_t5_forward.3} parent=11 // pred_check_branch
          %469 = sbr.rel (%p467) target = $region16
        $region15: #{merge_t5_forward.3} parent=11 // pred_region
          _
        $region16: #{merge_t5_forward.3} parent=11 // pred_fallthru
          _
        // Predicated region
        $region17: #{merge_t5_forward.3} parent=11 // pred_check
          %p470 = pneg %p66
        $region18: #{merge_t5_forward.3} parent=11 // pred_check_branch
          %472 = sbr.rel (%p470) target = $region20
        $region19: #{merge_t5_forward.3} parent=11 // pred_region
          _
        $region20: #{merge_t5_forward.3} parent=11 // pred_fallthru
          _
        // Predicated region
        $region21: #{merge_t5_forward.3} parent=11 // pred_check
          %p473 = pneg %p87
        $region22: #{merge_t5_forward.3} parent=11 // pred_check_branch
          %475 = sbr.rel (%p473) target = $region24
        $region23: #{merge_t5_forward.3} parent=11 // pred_region
          _
        $region24: #{merge_t5_forward.3} parent=11 // pred_fallthru
          _
        // Predicated region
        $region25: #{merge_t5_forward.3} parent=11 // pred_check
          %p476 = pneg %p108
        $region26: #{merge_t5_forward.3} parent=11 // pred_check_branch
          %478 = sbr.rel (%p476) target = $region28
        $region27: #{merge_t5_forward.3} parent=11 // pred_region
          _
        $region28: #{merge_t5_forward.3} parent=11 // pred_fallthru
          _
        // Predicated region
        $region29: #{merge_t5_forward.3} parent=11 // pred_check
          %p479 = pneg %p129
        $region30: #{merge_t5_forward.3} parent=11 // pred_check_branch
          %481 = sbr.rel (%p479) target = $region32
        $region31: #{merge_t5_forward.3} parent=11 // pred_region
          _
        $region32: #{merge_t5_forward.3} parent=11 // pred_fallthru
          _
        // Predicated region
        $region33: #{merge_t5_forward.3} parent=11 // pred_check
          %p482 = pneg %p150
        $region34: #{merge_t5_forward.3} parent=11 // pred_check_branch
          %484 = sbr.rel (%p482) target = $region36
        $region35: #{merge_t5_forward.3} parent=11 // pred_region
          _
        $region36: #{merge_t5_forward.3} parent=11 // pred_fallthru
          _
        // Predicated region
        $region37: #{merge_t5_forward.3} parent=11 // pred_check
          %p485 = pneg %p171
        $region38: #{merge_t5_forward.3} parent=11 // pred_check_branch
          %487 = sbr.rel (%p485) target = $region40
        $region39: #{merge_t5_forward.3} parent=11 // pred_region
          _
        $region40: #{merge_t5_forward.3} parent=11 // pred_fallthru
          _
      $region12: #{merge_t5_forward.3} parent=5 // pred_fallthru
        _
      %p488 = scmp.lt.s32.totalorder %s24, 2
      // Predicated region
      $region41: #{merge_t5_forward.3} parent=5 // pred_check
        %p489 = pneg %p488
      $region42: #{merge_t5_forward.3} parent=5 // pred_check_branch
        %491 = sbr.rel (%p489) target = $region44
      $region43: #{merge_t5_forward.3} parent=5 // pred_region
        // Predicated region
        $region45: #{merge_t5_forward.3} parent=43 // pred_check
          %p492 = pneg %p191
        $region46: #{merge_t5_forward.3} parent=43 // pred_check_branch
          %494 = sbr.rel (%p492) target = $region48
        $region47: #{merge_t5_forward.3} parent=43 // pred_region
          %p495 = scmp.lt.s32.totalorder %s24, 1
          %s496 = scalar_select %p495, %s24, 1
          %s497 = scalar_lea.vmem %s7, %s496
        $region48: #{merge_t5_forward.3} parent=43 // pred_fallthru
          _
        // Predicated region
        $region49: #{merge_t5_forward.3} parent=43 // pred_check
          %p498 = pneg %p217
        $region50: #{merge_t5_forward.3} parent=43 // pred_check_branch
          %500 = sbr.rel (%p498) target = $region52
        $region51: #{merge_t5_forward.3} parent=43 // pred_region
          %p501 = scmp.lt.s32.totalorder %s24, 1
          %s502 = scalar_select %p501, %s24, 1
          %s503 = smul.addr %s502, 16
          %s504 = smul.addr %s503, 4
          %s505 = scalar_lea.vmem %s8, %s504
        $region52: #{merge_t5_forward.3} parent=43 // pred_fallthru
          _
        // Predicated region
        $region53: #{merge_t5_forward.3} parent=43 // pred_check
          %p506 = pneg %p243
        $region54: #{merge_t5_forward.3} parent=43 // pred_check_branch
          %508 = sbr.rel (%p506) target = $region56
        $region55: #{merge_t5_forward.3} parent=43 // pred_region
          %p509 = scmp.lt.s32.totalorder %s24, 1
          %s510 = scalar_select %p509, %s24, 1
          %s511 = smul.addr %s510, 4
          %s512 = smul.addr %s511, 4
          %s513 = scalar_lea.vmem %s9, %s512
        $region56: #{merge_t5_forward.3} parent=43 // pred_fallthru
          _
        // Predicated region
        $region57: #{merge_t5_forward.3} parent=43 // pred_check
          %p514 = pneg %p269
        $region58: #{merge_t5_forward.3} parent=43 // pred_check_branch
          %516 = sbr.rel (%p514) target = $region60
        $region59: #{merge_t5_forward.3} parent=43 // pred_region
          %p517 = scmp.lt.s32.totalorder %s24, 1
          %s518 = scalar_select %p517, %s24, 1
          %s519 = scalar_lea.vmem %s10, %s518
        $region60: #{merge_t5_forward.3} parent=43 // pred_fallthru
          _
        // Predicated region
        $region61: #{merge_t5_forward.3} parent=43 // pred_check
          %p520 = pneg %p295
        $region62: #{merge_t5_forward.3} parent=43 // pred_check_branch
          %522 = sbr.rel (%p520) target = $region64
        $region63: #{merge_t5_forward.3} parent=43 // pred_region
          %p523 = scmp.lt.s32.totalorder %s24, 1
          %s524 = scalar_select %p523, %s24, 1
          %s525 = smul.addr %s524, 16
          %s526 = smul.addr %s525, 4
          %s527 = scalar_lea.vmem %s11, %s526
        $region64: #{merge_t5_forward.3} parent=43 // pred_fallthru
          _
        // Predicated region
        $region65: #{merge_t5_forward.3} parent=43 // pred_check
          %p528 = pneg %p321
        $region66: #{merge_t5_forward.3} parent=43 // pred_check_branch
          %530 = sbr.rel (%p528) target = $region68
        $region67: #{merge_t5_forward.3} parent=43 // pred_region
          %p531 = scmp.lt.s32.totalorder %s24, 1
          %s532 = scalar_select %p531, %s24, 1
          %s533 = smul.addr %s532, 16
          %s534 = smul.addr %s533, 4
          %s535 = scalar_lea.vmem %s12, %s534
        $region68: #{merge_t5_forward.3} parent=43 // pred_fallthru
          _
        // Predicated region
        $region69: #{merge_t5_forward.3} parent=43 // pred_check
          %p536 = pneg %p347
        $region70: #{merge_t5_forward.3} parent=43 // pred_check_branch
          %538 = sbr.rel (%p536) target = $region72
        $region71: #{merge_t5_forward.3} parent=43 // pred_region
          %p539 = scmp.lt.s32.totalorder %s24, 1
          %s540 = scalar_select %p539, %s24, 1
          %s541 = smul.addr %s540, 4
          %s542 = smul.addr %s541, 4
          %s543 = scalar_lea.vmem %s13, %s542
        $region72: #{merge_t5_forward.3} parent=43 // pred_fallthru
          _
        // Predicated region
        $region73: #{merge_t5_forward.3} parent=43 // pred_check
          %p544 = pneg %p373
        $region74: #{merge_t5_forward.3} parent=43 // pred_check_branch
          %546 = sbr.rel (%p544) target = $region76
        $region75: #{merge_t5_forward.3} parent=43 // pred_region
          %p547 = scmp.lt.s32.totalorder %s24, 1
          %s548 = scalar_select %p547, %s24, 1
          %s549 = scalar_lea.vmem %s14, %s548
        $region76: #{merge_t5_forward.3} parent=43 // pred_fallthru
          _
        // Predicated region
        $region77: #{merge_t5_forward.3} parent=43 // pred_check
          %p550 = pneg %p399
        $region78: #{merge_t5_forward.3} parent=43 // pred_check_branch
          %552 = sbr.rel (%p550) target = $region80
        $region79: #{merge_t5_forward.3} parent=43 // pred_region
          %p553 = scmp.lt.s32.totalorder %s24, 1
          %s554 = scalar_select %p553, %s24, 1
          %s555 = smul.addr %s554, 4
          %s556 = smul.addr %s555, 4
          %s557 = scalar_lea.vmem %s15, %s556
        $region80: #{merge_t5_forward.3} parent=43 // pred_fallthru
          _
        // Predicated region
        $region81: #{merge_t5_forward.3} parent=43 // pred_check
          %p558 = pneg %p425
        $region82: #{merge_t5_forward.3} parent=43 // pred_check_branch
          %560 = sbr.rel (%p558) target = $region84
        $region83: #{merge_t5_forward.3} parent=43 // pred_region
          %p561 = scmp.lt.s32.totalorder %s24, 1
          %s562 = scalar_select %p561, %s24, 1
          %s563 = smul.addr %s562, 8
          %s564 = smul.addr %s563, 4
          %s565 = scalar_lea.vmem %s16, %s564
        $region84: #{merge_t5_forward.3} parent=43 // pred_fallthru
          _
      $region44: #{merge_t5_forward.3} parent=5 // pred_fallthru
        _
      %p566 = scmp.le.s32.totalorder 1, %s24
      %p567 = scmp.lt.s32.totalorder %s24, 3
      %p568 = pnand %p566, %p567
      %p569 = pneg %p568
      // Predicated region
      $region85: #{merge_t5_forward.3} parent=5 // pred_check
        _
      $region86: #{merge_t5_forward.3} parent=5 // pred_check_branch
        %571 = sbr.rel (%p568) target = $region88
      $region87: #{merge_t5_forward.3} parent=5 // pred_region
        %s572 = ssub.s32 %s24, 1
        %p573 = pneg %p45
        %p574 = pneg %p42
        %p575 = pneg %p66
        %p576 = pneg %p63
        %p577 = pneg %p87
        %p578 = pneg %p84
        %p579 = pneg %p108
        %p580 = pneg %p105
        %p581 = pneg %p129
        %p582 = pneg %p126
        %p583 = pneg %p150
        %p584 = pneg %p147
        %p585 = pneg %p171
        %p586 = pneg %p168
        %p587 = scmp.lt.s32.totalorder %s29, 1
        %s588 = scalar_select %p587, %s29, 1
        %s589 = scalar_lea.vmem %s7, %s588
        %p590 = pneg %p197
        %p591 = pneg %p194
        %p592 = scmp.lt.s32.totalorder %s29, 1
        %s593 = scalar_select %p592, %s29, 1
        %s594 = smul.addr %s593, 16
        %s595 = smul.addr %s594, 4
        %s596 = scalar_lea.vmem %s8, %s595
        %p597 = pneg %p223
        %p598 = pneg %p220
        %p599 = scmp.lt.s32.totalorder %s29, 1
        %s600 = scalar_select %p599, %s29, 1
        %s601 = smul.addr %s600, 4
        %s602 = smul.addr %s601, 4
        %s603 = scalar_lea.vmem %s9, %s602
        %p604 = pneg %p249
        %p605 = pneg %p246
        %p606 = scmp.lt.s32.totalorder %s29, 1
        %s607 = scalar_select %p606, %s29, 1
        %s608 = scalar_lea.vmem %s10, %s607
        %p609 = pneg %p275
        %p610 = pneg %p272
        %p611 = scmp.lt.s32.totalorder %s29, 1
        %s612 = scalar_select %p611, %s29, 1
        %s613 = smul.addr %s612, 16
        %s614 = smul.addr %s613, 4
        %s615 = scalar_lea.vmem %s11, %s614
        %p616 = pneg %p301
        %p617 = pneg %p298
        %p618 = scmp.lt.s32.totalorder %s29, 1
        %s619 = scalar_select %p618, %s29, 1
        %s620 = smul.addr %s619, 16
        %s621 = smul.addr %s620, 4
        %s622 = scalar_lea.vmem %s12, %s621
        %p623 = pneg %p327
        %p624 = pneg %p324
        %p625 = scmp.lt.s32.totalorder %s29, 1
        %s626 = scalar_select %p625, %s29, 1
        %s627 = smul.addr %s626, 4
        %s628 = smul.addr %s627, 4
        %s629 = scalar_lea.vmem %s13, %s628
        %p630 = pneg %p353
        %p631 = pneg %p350
        %p632 = scmp.lt.s32.totalorder %s29, 1
        %s633 = scalar_select %p632, %s29, 1
        %s634 = scalar_lea.vmem %s14, %s633
        %p635 = pneg %p379
        %p636 = pneg %p376
        %p637 = scmp.lt.s32.totalorder %s29, 1
        %s638 = scalar_select %p637, %s29, 1
        %s639 = smul.addr %s638, 4
        %s640 = smul.addr %s639, 4
        %s641 = scalar_lea.vmem %s15, %s640
        %p642 = pneg %p405
        %p643 = pneg %p402
        %p644 = scmp.lt.s32.totalorder %s29, 1
        %s645 = scalar_select %p644, %s29, 1
        %s646 = smul.addr %s645, 8
        %s647 = smul.addr %s646, 4
        %s648 = scalar_lea.vmem %s16, %s647
        %p649 = pneg %p431
        %p650 = pneg %p428
        %p651 = pneg %p452
        %p652 = pneg %p449
        %p653 = scmp.lt.s32.totalorder %s29, 1
        %s654 = scalar_select %p653, %s29, 1
        %s655 = scalar_lea.vmem %s7, %s654
        %p656 = scmp.lt.s32.totalorder %s29, 1
        %s657 = scalar_select %p656, %s29, 1
        %s658 = smul.addr %s657, 16
        %s659 = smul.addr %s658, 4
        %s660 = scalar_lea.vmem %s8, %s659
        %p661 = scmp.lt.s32.totalorder %s29, 1
        %s662 = scalar_select %p661, %s29, 1
        %s663 = smul.addr %s662, 4
        %s664 = smul.addr %s663, 4
        %s665 = scalar_lea.vmem %s9, %s664
        %p666 = scmp.lt.s32.totalorder %s29, 1
        %s667 = scalar_select %p666, %s29, 1
        %s668 = scalar_lea.vmem %s10, %s667
        %p669 = scmp.lt.s32.totalorder %s29, 1
        %s670 = scalar_select %p669, %s29, 1
        %s671 = smul.addr %s670, 16
        %s672 = smul.addr %s671, 4
        %s673 = scalar_lea.vmem %s11, %s672
        %p674 = scmp.lt.s32.totalorder %s29, 1
        %s675 = scalar_select %p674, %s29, 1
        %s676 = smul.addr %s675, 16
        %s677 = smul.addr %s676, 4
        %s678 = scalar_lea.vmem %s12, %s677
        %p679 = scmp.lt.s32.totalorder %s29, 1
        %s680 = scalar_select %p679, %s29, 1
        %s681 = smul.addr %s680, 4
        %s682 = smul.addr %s681, 4
        %s683 = scalar_lea.vmem %s13, %s682
        %p684 = scmp.lt.s32.totalorder %s29, 1
        %s685 = scalar_select %p684, %s29, 1
        %s686 = scalar_lea.vmem %s14, %s685
        %p687 = scmp.lt.s32.totalorder %s29, 1
        %s688 = scalar_select %p687, %s29, 1
        %s689 = smul.addr %s688, 4
        %s690 = smul.addr %s689, 4
        %s691 = scalar_lea.vmem %s15, %s690
        %p692 = scmp.lt.s32.totalorder %s29, 1
        %s693 = scalar_select %p692, %s29, 1
        %s694 = smul.addr %s693, 8
        %s695 = smul.addr %s694, 4
        %s696 = scalar_lea.vmem %s16, %s695
        %p698 = scmp.eq.s32.totalorder %s29, 0
        // Predicated region
        $region89: #{merge_t5_forward.3} parent=87 // pred_check
          %p699 = pneg %p698
        $region90: #{merge_t5_forward.3} parent=87 // pred_check_branch
          %701 = sbr.rel (%p699) target = $region92
        $region91: #{merge_t5_forward.3} parent=87 // pred_region
          %v702 = vld [vmem:[%s0] sm:$0xff]
          %v703 = vld [vmem:[%s0 + $0x8] sm:$0xff]
          %v704 = vld [vmem:[%s2] sm:$0xf]
          %v705 = vld [vmem:[%s2 + $0x4] sm:$0xf]
          %v706 = vld [vmem:[%s2 + $0x8] sm:$0xf]
          %v707 = vld [vmem:[%s2 + $0xc] sm:$0xf]
          %v708 = vld [vmem:[%s2 + $0x10] sm:$0xf]
          %v709 = vld [vmem:[%s2 + $0x14] sm:$0xf]
          %v710 = vld [vmem:[%s2 + $0x18] sm:$0xf]
          %v711 = vld [vmem:[%s2 + $0x1c] sm:$0xf]
          %v712 = vld [vmem:[%s2 + $0x20] sm:$0xf]
          %v713 = vld [vmem:[%s2 + $0x24] sm:$0xf]
          %v714 = vld [vmem:[%s2 + $0x28] sm:$0xf]
          %v715 = vld [vmem:[%s2 + $0x2c] sm:$0xf]
          %v716 = vld [vmem:[%s2 + $0x30] sm:$0xf]
          %v717 = vld [vmem:[%s2 + $0x34] sm:$0xf]
          %v718 = vld [vmem:[%s2 + $0x38] sm:$0xf]
          %v719 = vld [vmem:[%s2 + $0x3c] sm:$0xf]
          %v720 = vlaneseq
          %v721 = vand.u32 %v720, 127
          %722 = vset.pattern.permute.xlu0 0
          %723 = vperm.xlu0 %722, %v702
          %v724 = vpop.permute.xlu0 %723
          %725 = vset.pattern.permute.xlu0 0
          %726 = vperm.xlu0 %725, %v703
          %v727 = vpop.permute.xlu0 %726
          %vm728 = vcmp.eq.s32.totalorder %v724, %v721
          %vm729 = vcmp.eq.s32.totalorder %v727, %v721
          %v730 = vsel %vm728, 1, 0
          %v731 = vsel %vm729, 1, 0
          %v732 = vcvt.s32.f32 %v730
          %v733 = vcvt.s32.f32 %v731
          %v734 = vpack.c.bf16 %v733, %v732
          %v751 = vunpack.c.l.b16 %v704
          %v752 = vunpack.c.l.b16 %v705
          %v753 = vunpack.c.l.b16 %v706
          %v754 = vunpack.c.l.b16 %v707
          %v755 = vunpack.c.l.b16 %v708
          %v756 = vunpack.c.l.b16 %v709
          %v757 = vunpack.c.l.b16 %v710
          %v758 = vunpack.c.l.b16 %v711
          %v759 = vunpack.c.l.b16 %v712
          %v760 = vunpack.c.l.b16 %v713
          %v761 = vunpack.c.l.b16 %v714
          %v762 = vunpack.c.l.b16 %v715
          %v763 = vunpack.c.l.b16 %v716
          %v764 = vunpack.c.l.b16 %v717
          %v765 = vunpack.c.l.b16 %v718
          %v766 = vunpack.c.l.b16 %v719
          %v767 = vpack.c.b16 %v752, %v751
          %v768 = vpack.c.b16 %v754, %v753
          %v769 = vpack.c.b16 %v756, %v755
          %v770 = vpack.c.b16 %v758, %v757
          %v771 = vpack.c.b16 %v760, %v759
          %v772 = vpack.c.b16 %v762, %v761
          %v773 = vpack.c.b16 %v764, %v763
          %v774 = vpack.c.b16 %v766, %v765
          %783 = vmatpush.bf16.msra.mxu0 %v774
          %784 = vmatpush.bf16.msra.mxu0 %v773
          %785 = vmatpush.bf16.msra.mxu0 %v772
          %786 = vmatpush.bf16.msra.mxu0 %v771
          %787 = vmatpush.bf16.msra.mxu0 %v770
          %788 = vmatpush.bf16.msra.mxu0 %v769
          %789 = vmatpush.bf16.msra.mxu0 %v768
          %790 = vmatpush.bf16.msra.mxu0 %v767
          %791 = vmatmul.bf16.gmra.mxu0 %v734
          %v792 = vpop.f32.mrf.mxu0
          %v793 = vadd.f32 0.0, %v792
          %v794 = vpop.f32.mrf.mxu0
          %v795 = vadd.f32 0.0, %v794
          %796 = vdwg.mxu0
          %vm797 = vcmask 261120
          %798 = vst.msk [vmem:[#allocation2] sm:$0xff] %vm797, %v793
          %799 = vst.msk [vmem:[#allocation2 + $0x8] sm:$0xff] %vm797, %v795
        $region92: #{merge_t5_forward.3} parent=87 // pred_fallthru
          _
        %v800 = vld [vmem:[#allocation2] sm:$0xff]
        %v801 = vld [vmem:[#allocation2 + $0x8] sm:$0xff]
        %v802 = vld [vmem:[%s655] sm:$0x1]
        %v803 = vmul.f32 %v800, %v800
        %v804 = vmul.f32 %v801, %v801
        %vm805 = vcmask 261120
        %v806 = vsel %vm805, %v803, 0.0
        %807 = vadd.xlane.f32.xlu0 %v806
        %v808 = vpop.xlane.xlu0 %807
        %v809 = vsel %vm805, %v804, 0.0
        %810 = vadd.xlane.f32.xlu0 %v809
        %v811 = vpop.xlane.xlu0 %810
        %v812 = vrcp.pop 32.0
        %v813 = vmul.f32 32.0, %v812
        %v814 = vsub.f32 1.0, %v813
        %v815 = vmul.f32 %v812, %v814
        %v816 = vadd.f32 %v812, %v815
        %vm817 = vweird.f32 %v812
        %v818 = vsel %vm817, %v812, %v816
        %v819 = vmul.f32 %v808, %v818
        %v820 = vmul.f32 %v811, %v818
        %v821 = vadd.f32 %v819, 1e-06
        %v822 = vadd.f32 %v820, 1e-06
        %v823 = vrsqrt.pop %v821
        %v824 = vmul.f32 %v823, %v821
        %v825 = vmul.f32 %v824, %v823
        %v826 = vmul.f32 0.5, %v825
        %v827 = vsub.f32 1.5, %v826
        %v828 = vmul.f32 %v823, %v827
        %vm829 = vweird.f32 %v821
        %vm830 = vweird.f32 %v823
        %vm831 = vmor %vm829, %vm830
        %v832 = vsel %vm831, %v823, %v828
        %v833 = vrsqrt.pop %v822
        %v834 = vmul.f32 %v833, %v822
        %v835 = vmul.f32 %v834, %v833
        %v836 = vmul.f32 0.5, %v835
        %v837 = vsub.f32 1.5, %v836
        %v838 = vmul.f32 %v833, %v837
        %vm839 = vweird.f32 %v822
        %vm840 = vweird.f32 %v833
        %vm841 = vmor %vm839, %vm840
        %v842 = vsel %vm841, %v833, %v838
        %v843 = vmul.f32 %v800, %v832
        %v844 = vmul.f32 %v801, %v842
        %v846 = vperm.slane %v802, 0
        %v848 = vmul.f32 %v843, %v846
        %v849 = vmul.f32 %v844, %v846
        %v850 = vpack.c.bf16 %v848, %v848
        %v851 = vpack.c.bf16 %v849, %v849
        %v852 = vld [vmem:[%s660] sm:$0xf]
        %v853 = vld [vmem:[%s660 + $0x4] sm:$0xf]
        %v854 = vld [vmem:[%s660 + $0x8] sm:$0xf]
        %v855 = vld [vmem:[%s660 + $0xc] sm:$0xf]
        %v856 = vld [vmem:[%s660 + $0x10] sm:$0xf]
        %v857 = vld [vmem:[%s660 + $0x14] sm:$0xf]
        %v858 = vld [vmem:[%s660 + $0x18] sm:$0xf]
        %v859 = vld [vmem:[%s660 + $0x1c] sm:$0xf]
        %v860 = vld [vmem:[%s660 + $0x20] sm:$0xf]
        %v861 = vld [vmem:[%s660 + $0x24] sm:$0xf]
        %v862 = vld [vmem:[%s660 + $0x28] sm:$0xf]
        %v863 = vld [vmem:[%s660 + $0x2c] sm:$0xf]
        %v864 = vld [vmem:[%s660 + $0x30] sm:$0xf]
        %v865 = vld [vmem:[%s660 + $0x34] sm:$0xf]
        %v866 = vld [vmem:[%s660 + $0x38] sm:$0xf]
        %v867 = vld [vmem:[%s660 + $0x3c] sm:$0xf]
        %v870 = vunpack.c.l.b16 %v850
        %v871 = vunpack.c.l.b16 %v851
        %v872 = vpack.c.b16 %v871, %v870
        %v877 = vunpack.c.l.b16 %v852
        %v878 = vunpack.c.l.b16 %v853
        %v879 = vunpack.c.l.b16 %v854
        %v880 = vunpack.c.l.b16 %v855
        %v881 = vpack.c.b16 %v878, %v877
        %v882 = vpack.c.b16 %v880, %v879
        %v886 = vsel %vm805, %v872, 0
        %888 = vmatpush.bf16.msra.mxu0 0
        %889 = vmatpush.bf16.msra.mxu0 0
        %890 = vmatpush.bf16.msra.mxu0 0
        %891 = vmatpush.bf16.msra.mxu0 0
        %892 = vmatpush.bf16.msra.mxu0 0
        %893 = vmatpush.bf16.msra.mxu0 0
        %894 = vmatpush.bf16.msra.mxu0 %v882
        %895 = vmatpush.bf16.msra.mxu0 %v881
        %896 = vmatmul.bf16.gmra.mxu0 %v886
        %v897 = vpop.f32.mrf.mxu0
        %v898 = vadd.f32 0.0, %v897
        %v899 = vpop.f32.mrf.mxu0
        %v900 = vadd.f32 0.0, %v899
        %901 = vdwg.mxu0
        %v906 = vunpack.c.l.b16 %v856
        %v907 = vunpack.c.l.b16 %v857
        %v908 = vunpack.c.l.b16 %v858
        %v909 = vunpack.c.l.b16 %v859
        %v910 = vpack.c.b16 %v907, %v906
        %v911 = vpack.c.b16 %v909, %v908
        %914 = vmatpush.bf16.msra.mxu0 0
        %915 = vmatpush.bf16.msra.mxu0 0
        %916 = vmatpush.bf16.msra.mxu0 0
        %917 = vmatpush.bf16.msra.mxu0 0
        %918 = vmatpush.bf16.msra.mxu0 0
        %919 = vmatpush.bf16.msra.mxu0 0
        %920 = vmatpush.bf16.msra.mxu0 %v911
        %921 = vmatpush.bf16.msra.mxu0 %v910
        %922 = vmatmul.bf16.gmra.mxu0 %v886
        %v923 = vpop.f32.mrf.mxu0
        %v924 = vadd.f32 0.0, %v923
        %v925 = vpop.f32.mrf.mxu0
        %v926 = vadd.f32 0.0, %v925
        %927 = vdwg.mxu0
        %v932 = vunpack.c.l.b16 %v860
        %v933 = vunpack.c.l.b16 %v861
        %v934 = vunpack.c.l.b16 %v862
        %v935 = vunpack.c.l.b16 %v863
        %v936 = vpack.c.b16 %v933, %v932
        %v937 = vpack.c.b16 %v935, %v934
        %940 = vmatpush.bf16.msra.mxu0 0
        %941 = vmatpush.bf16.msra.mxu0 0
        %942 = vmatpush.bf16.msra.mxu0 0
        %943 = vmatpush.bf16.msra.mxu0 0
        %944 = vmatpush.bf16.msra.mxu0 0
        %945 = vmatpush.bf16.msra.mxu0 0
        %946 = vmatpush.bf16.msra.mxu0 %v937
        %947 = vmatpush.bf16.msra.mxu0 %v936
        %948 = vmatmul.bf16.gmra.mxu0 %v886
        %v949 = vpop.f32.mrf.mxu0
        %v950 = vadd.f32 0.0, %v949
        %v951 = vpop.f32.mrf.mxu0
        %v952 = vadd.f32 0.0, %v951
        %953 = vdwg.mxu0
        %v958 = vunpack.c.l.b16 %v864
        %v959 = vunpack.c.l.b16 %v865
        %v960 = vunpack.c.l.b16 %v866
        %v961 = vunpack.c.l.b16 %v867
        %v962 = vpack.c.b16 %v959, %v958
        %v963 = vpack.c.b16 %v961, %v960
        %966 = vmatpush.bf16.msra.mxu0 0
        %967 = vmatpush.bf16.msra.mxu0 0
        %968 = vmatpush.bf16.msra.mxu0 0
        %969 = vmatpush.bf16.msra.mxu0 0
        %970 = vmatpush.bf16.msra.mxu0 0
        %971 = vmatpush.bf16.msra.mxu0 0
        %972 = vmatpush.bf16.msra.mxu0 %v963
        %973 = vmatpush.bf16.msra.mxu0 %v962
        %974 = vmatmul.bf16.gmra.mxu0 %v886
        %v975 = vpop.f32.mrf.mxu0
        %v976 = vadd.f32 0.0, %v975
        %v977 = vpop.f32.mrf.mxu0
        %v978 = vadd.f32 0.0, %v977
        %979 = vdwg.mxu0
        %v980 = vld [vmem:[%s3] sm:$0xff]
        %v981 = vld [vmem:[%s3 + $0x8] sm:$0xff]
        %v982 = vld [vmem:[%s3 + $0x10] sm:$0xff]
        %v983 = vld [vmem:[%s3 + $0x18] sm:$0xff]
        %v984 = vld [vmem:[%s3 + $0x20] sm:$0xff]
        %v985 = vld [vmem:[%s3 + $0x28] sm:$0xff]
        %v986 = vld [vmem:[%s3 + $0x30] sm:$0xff]
        %v987 = vld [vmem:[%s3 + $0x38] sm:$0xff]
        %v988 = vpack.c.bf16 %v898, %v898
        %v989 = vpack.c.bf16 %v900, %v900
        %v990 = vpack.c.bf16 %v924, %v924
        %v991 = vpack.c.bf16 %v926, %v926
        %v992 = vpack.c.bf16 %v950, %v950
        %v993 = vpack.c.bf16 %v952, %v952
        %v994 = vpack.c.bf16 %v976, %v976
        %v995 = vpack.c.bf16 %v978, %v978
        %v998 = vunpack.c.l.b16 %v988
        %v999 = vunpack.c.l.b16 %v989
        %v1000 = vpack.c.b16 %v999, %v998
        %1001 = vrot.lane.b32.xlu0 %v1000, 120
        %v1002 = vpop.permute.xlu0 %1001
        %vm1003 = vcmask 64512
        %v1005 = vsel %vm1003, %v1000, 0
        %v1008 = vsel %vm1003, %v1002, 0
        %1010 = vmatpush.bf16.xpose.msra.mxu0 0
        %1011 = vmatpush.bf16.xpose.msra.mxu0 0
        %1012 = vmatpush.bf16.xpose.msra.mxu0 0
        %1013 = vmatpush.bf16.xpose.msra.mxu0 0
        %1014 = vmatpush.bf16.xpose.msra.mxu0 0
        %1015 = vmatpush.bf16.xpose.msra.mxu0 0
        %1016 = vmatpush.bf16.xpose.msra.mxu0 0
        %1017 = vmatpush.bf16.xpose.msra.mxu0 %v1008
        %1018 = vmatmul.bf16.gmra.mxu0 %v1005
        %v1019 = vpop.f32.mrf.mxu0
        %v1020 = vadd.f32 %v980, %v1019
        %v1021 = vpop.f32.mrf.mxu0
        %v1022 = vadd.f32 %v981, %v1021
        %1023 = vdwg.mxu0
        %v1026 = vunpack.c.l.b16 %v990
        %v1027 = vunpack.c.l.b16 %v991
        %v1028 = vpack.c.b16 %v1027, %v1026
        %1029 = vrot.lane.b32.xlu0 %v1028, 120
        %v1030 = vpop.permute.xlu0 %1029
        %v1032 = vsel %vm1003, %v1028, 0
        %v1035 = vsel %vm1003, %v1030, 0
        %1037 = vmatpush.bf16.xpose.msra.mxu0 0
        %1038 = vmatpush.bf16.xpose.msra.mxu0 0
        %1039 = vmatpush.bf16.xpose.msra.mxu0 0
        %1040 = vmatpush.bf16.xpose.msra.mxu0 0
        %1041 = vmatpush.bf16.xpose.msra.mxu0 0
        %1042 = vmatpush.bf16.xpose.msra.mxu0 0
        %1043 = vmatpush.bf16.xpose.msra.mxu0 0
        %1044 = vmatpush.bf16.xpose.msra.mxu0 %v1035
        %1045 = vmatmul.bf16.gmra.mxu0 %v1032
        %v1046 = vpop.f32.mrf.mxu0
        %v1047 = vadd.f32 %v982, %v1046
        %v1048 = vpop.f32.mrf.mxu0
        %v1049 = vadd.f32 %v983, %v1048
        %1050 = vdwg.mxu0
        %v1053 = vunpack.c.l.b16 %v992
        %v1054 = vunpack.c.l.b16 %v993
        %v1055 = vpack.c.b16 %v1054, %v1053
        %1056 = vrot.lane.b32.xlu0 %v1055, 120
        %v1057 = vpop.permute.xlu0 %1056
        %v1059 = vsel %vm1003, %v1055, 0
        %v1062 = vsel %vm1003, %v1057, 0
        %1064 = vmatpush.bf16.xpose.msra.mxu0 0
        %1065 = vmatpush.bf16.xpose.msra.mxu0 0
        %1066 = vmatpush.bf16.xpose.msra.mxu0 0
        %1067 = vmatpush.bf16.xpose.msra.mxu0 0
        %1068 = vmatpush.bf16.xpose.msra.mxu0 0
        %1069 = vmatpush.bf16.xpose.msra.mxu0 0
        %1070 = vmatpush.bf16.xpose.msra.mxu0 0
        %1071 = vmatpush.bf16.xpose.msra.mxu0 %v1062
        %1072 = vmatmul.bf16.gmra.mxu0 %v1059
        %v1073 = vpop.f32.mrf.mxu0
        %v1074 = vadd.f32 %v984, %v1073
        %v1075 = vpop.f32.mrf.mxu0
        %v1076 = vadd.f32 %v985, %v1075
        %1077 = vdwg.mxu0
        %v1080 = vunpack.c.l.b16 %v994
        %v1081 = vunpack.c.l.b16 %v995
        %v1082 = vpack.c.b16 %v1081, %v1080
        %1083 = vrot.lane.b32.xlu0 %v1082, 120
        %v1084 = vpop.permute.xlu0 %1083
        %v1086 = vsel %vm1003, %v1082, 0
        %v1089 = vsel %vm1003, %v1084, 0
        %1091 = vmatpush.bf16.xpose.msra.mxu0 0
        %1092 = vmatpush.bf16.xpose.msra.mxu0 0
        %1093 = vmatpush.bf16.xpose.msra.mxu0 0
        %1094 = vmatpush.bf16.xpose.msra.mxu0 0
        %1095 = vmatpush.bf16.xpose.msra.mxu0 0
        %1096 = vmatpush.bf16.xpose.msra.mxu0 0
        %1097 = vmatpush.bf16.xpose.msra.mxu0 0
        %1098 = vmatpush.bf16.xpose.msra.mxu0 %v1089
        %1099 = vmatmul.bf16.gmra.mxu0 %v1086
        %v1100 = vpop.f32.mrf.mxu0
        %v1101 = vadd.f32 %v986, %v1100
        %v1102 = vpop.f32.mrf.mxu0
        %v1103 = vadd.f32 %v987, %v1102
        %1104 = vdwg.mxu0
        %vm1105 = vcmask 130048
        %v1106 = vsel %vm1105, %v1020, -inf
        %1107 = vmax.xlane.f32.xlu0 %v1106
        %v1108 = vpop.xlane.xlu0 %1107
        %v1109 = vsel %vm1105, %v1022, -inf
        %1110 = vmax.xlane.f32.xlu0 %v1109
        %v1111 = vpop.xlane.xlu0 %1110
        %v1112 = vsel %vm1105, %v1047, -inf
        %1113 = vmax.xlane.f32.xlu0 %v1112
        %v1114 = vpop.xlane.xlu0 %1113
        %v1115 = vsel %vm1105, %v1049, -inf
        %1116 = vmax.xlane.f32.xlu0 %v1115
        %v1117 = vpop.xlane.xlu0 %1116
        %v1118 = vsel %vm1105, %v1074, -inf
        %1119 = vmax.xlane.f32.xlu0 %v1118
        %v1120 = vpop.xlane.xlu0 %1119
        %v1121 = vsel %vm1105, %v1076, -inf
        %1122 = vmax.xlane.f32.xlu0 %v1121
        %v1123 = vpop.xlane.xlu0 %1122
        %v1124 = vsel %vm1105, %v1101, -inf
        %1125 = vmax.xlane.f32.xlu0 %v1124
        %v1126 = vpop.xlane.xlu0 %1125
        %v1127 = vsel %vm1105, %v1103, -inf
        %1128 = vmax.xlane.f32.xlu0 %v1127
        %v1129 = vpop.xlane.xlu0 %1128
        %v1130 = vsub.f32 %v1020, %v1108
        %v1131 = vsub.f32 %v1022, %v1111
        %v1132 = vsub.f32 %v1047, %v1114
        %v1133 = vsub.f32 %v1049, %v1117
        %v1134 = vsub.f32 %v1074, %v1120
        %v1135 = vsub.f32 %v1076, %v1123
        %v1136 = vsub.f32 %v1101, %v1126
        %v1137 = vsub.f32 %v1103, %v1129
        %v1138 = vmul.f32 %v1130, 1.442695
        %v1139 = vpow.pop %v1138
        %v1140 = vmul.f32 %v1131, 1.442695
        %v1141 = vpow.pop %v1140
        %v1142 = vmul.f32 %v1132, 1.442695
        %v1143 = vpow.pop %v1142
        %v1144 = vmul.f32 %v1133, 1.442695
        %v1145 = vpow.pop %v1144
        %v1146 = vmul.f32 %v1134, 1.442695
        %v1147 = vpow.pop %v1146
        %v1148 = vmul.f32 %v1135, 1.442695
        %v1149 = vpow.pop %v1148
        %v1150 = vmul.f32 %v1136, 1.442695
        %v1151 = vpow.pop %v1150
        %v1152 = vmul.f32 %v1137, 1.442695
        %v1153 = vpow.pop %v1152
        %v1154 = vsel %vm1105, %v1139, 0.0
        %1155 = vadd.xlane.f32.xlu0 %v1154
        %v1156 = vpop.xlane.xlu0 %1155
        %v1157 = vsel %vm1105, %v1141, 0.0
        %1158 = vadd.xlane.f32.xlu0 %v1157
        %v1159 = vpop.xlane.xlu0 %1158
        %v1160 = vsel %vm1105, %v1143, 0.0
        %1161 = vadd.xlane.f32.xlu0 %v1160
        %v1162 = vpop.xlane.xlu0 %1161
        %v1163 = vsel %vm1105, %v1145, 0.0
        %1164 = vadd.xlane.f32.xlu0 %v1163
        %v1165 = vpop.xlane.xlu0 %1164
        %v1166 = vsel %vm1105, %v1147, 0.0
        %1167 = vadd.xlane.f32.xlu0 %v1166
        %v1168 = vpop.xlane.xlu0 %1167
        %v1169 = vsel %vm1105, %v1149, 0.0
        %1170 = vadd.xlane.f32.xlu0 %v1169
        %v1171 = vpop.xlane.xlu0 %1170
        %v1172 = vsel %vm1105, %v1151, 0.0
        %1173 = vadd.xlane.f32.xlu0 %v1172
        %v1174 = vpop.xlane.xlu0 %1173
        %v1175 = vsel %vm1105, %v1153, 0.0
        %1176 = vadd.xlane.f32.xlu0 %v1175
        %v1177 = vpop.xlane.xlu0 %1176
        %v1178 = vrcp.pop %v1156
        %v1179 = vrcp.pop %v1159
        %v1180 = vrcp.pop %v1162
        %v1181 = vrcp.pop %v1165
        %v1182 = vrcp.pop %v1168
        %v1183 = vrcp.pop %v1171
        %v1184 = vrcp.pop %v1174
        %v1185 = vrcp.pop %v1177
        %v1186 = vmul.f32 %v1139, %v1178
        %v1187 = vmul.f32 %v1141, %v1179
        %v1188 = vmul.f32 %v1143, %v1180
        %v1189 = vmul.f32 %v1145, %v1181
        %v1190 = vmul.f32 %v1147, %v1182
        %v1191 = vmul.f32 %v1149, %v1183
        %v1192 = vmul.f32 %v1151, %v1184
        %v1193 = vmul.f32 %v1153, %v1185
        %v1194 = vpack.c.bf16 %v1186, %v1186
        %v1195 = vpack.c.bf16 %v1187, %v1187
        %v1196 = vpack.c.bf16 %v1188, %v1188
        %v1197 = vpack.c.bf16 %v1189, %v1189
        %v1198 = vpack.c.bf16 %v1190, %v1190
        %v1199 = vpack.c.bf16 %v1191, %v1191
        %v1200 = vpack.c.bf16 %v1192, %v1192
        %v1201 = vpack.c.bf16 %v1193, %v1193
        %v1204 = vunpack.c.l.b16 %v1194
        %v1205 = vunpack.c.l.b16 %v1195
        %v1206 = vpack.c.b16 %v1205, %v1204
        %1207 = vrot.lane.b32.xlu0 %v1000, 112
        %v1208 = vpop.permute.xlu0 %1207
        %v1211 = vsel %vm1105, %v1206, 0
        %1213 = vmatpush.bf16.msra.mxu0 0
        %1214 = vmatpush.bf16.msra.mxu0 0
        %1215 = vmatpush.bf16.msra.mxu0 0
        %1216 = vmatpush.bf16.msra.mxu0 0
        %1217 = vmatpush.bf16.msra.mxu0 0
        %1218 = vmatpush.bf16.msra.mxu0 0
        %1219 = vmatpush.bf16.msra.mxu0 0
        %1220 = vmatpush.bf16.msra.mxu0 %v1208
        %1221 = vmatmul.bf16.gmra.mxu0 %v1211
        %v1222 = vpop.f32.mrf.mxu0
        %v1223 = vadd.f32 0.0, %v1222
        %v1224 = vpop.f32.mrf.mxu0
        %v1225 = vadd.f32 0.0, %v1224
        %1226 = vdwg.mxu0
        %v1229 = vunpack.c.l.b16 %v1196
        %v1230 = vunpack.c.l.b16 %v1197
        %v1231 = vpack.c.b16 %v1230, %v1229
        %1232 = vrot.lane.b32.xlu0 %v1028, 112
        %v1233 = vpop.permute.xlu0 %1232
        %v1236 = vsel %vm1105, %v1231, 0
        %1238 = vmatpush.bf16.msra.mxu0 0
        %1239 = vmatpush.bf16.msra.mxu0 0
        %1240 = vmatpush.bf16.msra.mxu0 0
        %1241 = vmatpush.bf16.msra.mxu0 0
        %1242 = vmatpush.bf16.msra.mxu0 0
        %1243 = vmatpush.bf16.msra.mxu0 0
        %1244 = vmatpush.bf16.msra.mxu0 0
        %1245 = vmatpush.bf16.msra.mxu0 %v1233
        %1246 = vmatmul.bf16.gmra.mxu0 %v1236
        %v1247 = vpop.f32.mrf.mxu0
        %v1248 = vadd.f32 0.0, %v1247
        %v1249 = vpop.f32.mrf.mxu0
        %v1250 = vadd.f32 0.0, %v1249
        %1251 = vdwg.mxu0
        %v1254 = vunpack.c.l.b16 %v1198
        %v1255 = vunpack.c.l.b16 %v1199
        %v1256 = vpack.c.b16 %v1255, %v1254
        %1257 = vrot.lane.b32.xlu0 %v1055, 112
        %v1258 = vpop.permute.xlu0 %1257
        %v1261 = vsel %vm1105, %v1256, 0
        %1263 = vmatpush.bf16.msra.mxu0 0
        %1264 = vmatpush.bf16.msra.mxu0 0
        %1265 = vmatpush.bf16.msra.mxu0 0
        %1266 = vmatpush.bf16.msra.mxu0 0
        %1267 = vmatpush.bf16.msra.mxu0 0
        %1268 = vmatpush.bf16.msra.mxu0 0
        %1269 = vmatpush.bf16.msra.mxu0 0
        %1270 = vmatpush.bf16.msra.mxu0 %v1258
        %1271 = vmatmul.bf16.gmra.mxu0 %v1261
        %v1272 = vpop.f32.mrf.mxu0
        %v1273 = vadd.f32 0.0, %v1272
        %v1274 = vpop.f32.mrf.mxu0
        %v1275 = vadd.f32 0.0, %v1274
        %1276 = vdwg.mxu0
        %v1279 = vunpack.c.l.b16 %v1200
        %v1280 = vunpack.c.l.b16 %v1201
        %v1281 = vpack.c.b16 %v1280, %v1279
        %1282 = vrot.lane.b32.xlu0 %v1082, 112
        %v1283 = vpop.permute.xlu0 %1282
        %v1286 = vsel %vm1105, %v1281, 0
        %1288 = vmatpush.bf16.msra.mxu0 0
        %1289 = vmatpush.bf16.msra.mxu0 0
        %1290 = vmatpush.bf16.msra.mxu0 0
        %1291 = vmatpush.bf16.msra.mxu0 0
        %1292 = vmatpush.bf16.msra.mxu0 0
        %1293 = vmatpush.bf16.msra.mxu0 0
        %1294 = vmatpush.bf16.msra.mxu0 0
        %1295 = vmatpush.bf16.msra.mxu0 %v1283
        %1296 = vmatmul.bf16.gmra.mxu0 %v1286
        %v1297 = vpop.f32.mrf.mxu0
        %v1298 = vadd.f32 0.0, %v1297
        %v1299 = vpop.f32.mrf.mxu0
        %v1300 = vadd.f32 0.0, %v1299
        %1301 = vdwg.mxu0
        %v1302 = vld [vmem:[%s665] sm:$0xf]
        %v1303 = vld [vmem:[%s665 + $0x4] sm:$0xf]
        %v1304 = vld [vmem:[%s665 + $0x8] sm:$0xf]
        %v1305 = vld [vmem:[%s665 + $0xc] sm:$0xf]
        %v1306 = vpack.c.bf16 %v1223, %v1223
        %v1307 = vpack.c.bf16 %v1225, %v1225
        %v1308 = vpack.c.bf16 %v1248, %v1248
        %v1309 = vpack.c.bf16 %v1250, %v1250
        %v1310 = vpack.c.bf16 %v1273, %v1273
        %v1311 = vpack.c.bf16 %v1275, %v1275
        %v1312 = vpack.c.bf16 %v1298, %v1298
        %v1313 = vpack.c.bf16 %v1300, %v1300
        %v1316 = vunpack.c.l.b16 %v1306
        %v1317 = vunpack.c.l.b16 %v1307
        %v1318 = vpack.c.b16 %v1317, %v1316
        %v1320 = vsel %vm1003, %v1318, 0
        %vm1322 = vcmask 1043456
        %v1324 = vsel %vm1322, %v1302, 0
        %1326 = vmatpush.bf16.msra.mxu0 0
        %1327 = vmatpush.bf16.msra.mxu0 0
        %1328 = vmatpush.bf16.msra.mxu0 0
        %1329 = vmatpush.bf16.msra.mxu0 0
        %1330 = vmatpush.bf16.msra.mxu0 0
        %1331 = vmatpush.bf16.msra.mxu0 0
        %1332 = vmatpush.bf16.msra.mxu0 0
        %1333 = vmatpush.bf16.msra.mxu0 %v1324
        %1334 = vmatmul.bf16.gmra.mxu0 %v1320
        %v1335 = vpop.f32.mrf.mxu0
        %v1336 = vadd.f32 0.0, %v1335
        %v1337 = vpop.f32.mrf.mxu0
        %v1338 = vadd.f32 0.0, %v1337
        %1339 = vdwg.mxu0
        %v1342 = vunpack.c.l.b16 %v1308
        %v1343 = vunpack.c.l.b16 %v1309
        %v1344 = vpack.c.b16 %v1343, %v1342
        %v1346 = vsel %vm1003, %v1344, 0
        %v1349 = vsel %vm1322, %v1303, 0
        %1351 = vmatpush.bf16.msra.mxu0 0
        %1352 = vmatpush.bf16.msra.mxu0 0
        %1353 = vmatpush.bf16.msra.mxu0 0
        %1354 = vmatpush.bf16.msra.mxu0 0
        %1355 = vmatpush.bf16.msra.mxu0 0
        %1356 = vmatpush.bf16.msra.mxu0 0
        %1357 = vmatpush.bf16.msra.mxu0 0
        %1358 = vmatpush.bf16.msra.mxu0 %v1349
        %1359 = vmatmul.bf16.gmra.mxu0 %v1346
        %v1360 = vpop.f32.mrf.mxu0
        %v1361 = vadd.f32 0.0, %v1360
        %v1362 = vpop.f32.mrf.mxu0
        %v1363 = vadd.f32 0.0, %v1362
        %1364 = vdwg.mxu0
        %v1367 = vunpack.c.l.b16 %v1310
        %v1368 = vunpack.c.l.b16 %v1311
        %v1369 = vpack.c.b16 %v1368, %v1367
        %v1371 = vsel %vm1003, %v1369, 0
        %v1374 = vsel %vm1322, %v1304, 0
        %1376 = vmatpush.bf16.msra.mxu0 0
        %1377 = vmatpush.bf16.msra.mxu0 0
        %1378 = vmatpush.bf16.msra.mxu0 0
        %1379 = vmatpush.bf16.msra.mxu0 0
        %1380 = vmatpush.bf16.msra.mxu0 0
        %1381 = vmatpush.bf16.msra.mxu0 0
        %1382 = vmatpush.bf16.msra.mxu0 0
        %1383 = vmatpush.bf16.msra.mxu0 %v1374
        %1384 = vmatmul.bf16.gmra.mxu0 %v1371
        %v1385 = vpop.f32.mrf.mxu0
        %v1386 = vadd.f32 0.0, %v1385
        %v1387 = vpop.f32.mrf.mxu0
        %v1388 = vadd.f32 0.0, %v1387
        %1389 = vdwg.mxu0
        %v1392 = vunpack.c.l.b16 %v1312
        %v1393 = vunpack.c.l.b16 %v1313
        %v1394 = vpack.c.b16 %v1393, %v1392
        %v1396 = vsel %vm1003, %v1394, 0
        %v1399 = vsel %vm1322, %v1305, 0
        %1401 = vmatpush.bf16.msra.mxu0 0
        %1402 = vmatpush.bf16.msra.mxu0 0
        %1403 = vmatpush.bf16.msra.mxu0 0
        %1404 = vmatpush.bf16.msra.mxu0 0
        %1405 = vmatpush.bf16.msra.mxu0 0
        %1406 = vmatpush.bf16.msra.mxu0 0
        %1407 = vmatpush.bf16.msra.mxu0 0
        %1408 = vmatpush.bf16.msra.mxu0 %v1399
        %1409 = vmatmul.bf16.gmra.mxu0 %v1396
        %v1410 = vpop.f32.mrf.mxu0
        %v1411 = vadd.f32 0.0, %v1410
        %v1412 = vpop.f32.mrf.mxu0
        %v1413 = vadd.f32 0.0, %v1412
        %1414 = vdwg.mxu0
        %v1415 = vsel %vm805, %v1336, 0.0
        %v1416 = vsel %vm805, %v1361, 0.0
        %v1417 = vadd.f32 %v1415, %v1416
        %v1418 = vsel %vm805, %v1386, 0.0
        %v1419 = vadd.f32 %v1417, %v1418
        %v1420 = vsel %vm805, %v1411, 0.0
        %v1421 = vadd.f32 %v1419, %v1420
        %v1422 = vsel %vm805, %v1338, 0.0
        %v1423 = vsel %vm805, %v1363, 0.0
        %v1424 = vadd.f32 %v1422, %v1423
        %v1425 = vsel %vm805, %v1388, 0.0
        %v1426 = vadd.f32 %v1424, %v1425
        %v1427 = vsel %vm805, %v1413, 0.0
        %v1428 = vadd.f32 %v1426, %v1427
        %v1429 = vadd.f32 %v800, %v1421
        %v1430 = vadd.f32 %v801, %v1428
        %v1431 = vld [vmem:[%s668] sm:$0x1]
        %v1432 = vmul.f32 %v1429, %v1429
        %v1433 = vmul.f32 %v1430, %v1430
        %v1434 = vsel %vm805, %v1432, 0.0
        %1435 = vadd.xlane.f32.xlu0 %v1434
        %v1436 = vpop.xlane.xlu0 %1435
        %v1437 = vsel %vm805, %v1433, 0.0
        %1438 = vadd.xlane.f32.xlu0 %v1437
        %v1439 = vpop.xlane.xlu0 %1438
        %v1440 = vmul.f32 %v1436, %v818
        %v1441 = vmul.f32 %v1439, %v818
        %v1442 = vadd.f32 %v1440, 1e-06
        %v1443 = vadd.f32 %v1441, 1e-06
        %v1444 = vrsqrt.pop %v1442
        %v1445 = vmul.f32 %v1444, %v1442
        %v1446 = vmul.f32 %v1445, %v1444
        %v1447 = vmul.f32 0.5, %v1446
        %v1448 = vsub.f32 1.5, %v1447
        %v1449 = vmul.f32 %v1444, %v1448
        %vm1450 = vweird.f32 %v1442
        %vm1451 = vweird.f32 %v1444
        %vm1452 = vmor %vm1450, %vm1451
        %v1453 = vsel %vm1452, %v1444, %v1449
        %v1454 = vrsqrt.pop %v1443
        %v1455 = vmul.f32 %v1454, %v1443
        %v1456 = vmul.f32 %v1455, %v1454
        %v1457 = vmul.f32 0.5, %v1456
        %v1458 = vsub.f32 1.5, %v1457
        %v1459 = vmul.f32 %v1454, %v1458
        %vm1460 = vweird.f32 %v1443
        %vm1461 = vweird.f32 %v1454
        %vm1462 = vmor %vm1460, %vm1461
        %v1463 = vsel %vm1462, %v1454, %v1459
        %v1464 = vmul.f32 %v1429, %v1453
        %v1465 = vmul.f32 %v1430, %v1463
        %v1467 = vperm.slane %v1431, 0
        %v1469 = vmul.f32 %v1464, %v1467
        %v1470 = vmul.f32 %v1465, %v1467
        %v1471 = vpack.c.bf16 %v1469, %v1469
        %v1472 = vpack.c.bf16 %v1470, %v1470
        %v1473 = vld [vmem:[%s1] sm:$0xff]
        %v1474 = vld [vmem:[%s1 + $0x8] sm:$0xff]
        %v1475 = vpack.c.bf16 %v1473, %v1473
        %v1476 = vpack.c.bf16 %v1474, %v1474
        %v1477 = vld [vmem:[%s673] sm:$0xf]
        %v1478 = vld [vmem:[%s673 + $0x4] sm:$0xf]
        %v1479 = vld [vmem:[%s673 + $0x8] sm:$0xf]
        %v1480 = vld [vmem:[%s673 + $0xc] sm:$0xf]
        %v1481 = vld [vmem:[%s673 + $0x10] sm:$0xf]
        %v1482 = vld [vmem:[%s673 + $0x14] sm:$0xf]
        %v1483 = vld [vmem:[%s673 + $0x18] sm:$0xf]
        %v1484 = vld [vmem:[%s673 + $0x1c] sm:$0xf]
        %v1485 = vld [vmem:[%s673 + $0x20] sm:$0xf]
        %v1486 = vld [vmem:[%s673 + $0x24] sm:$0xf]
        %v1487 = vld [vmem:[%s673 + $0x28] sm:$0xf]
        %v1488 = vld [vmem:[%s673 + $0x2c] sm:$0xf]
        %v1489 = vld [vmem:[%s673 + $0x30] sm:$0xf]
        %v1490 = vld [vmem:[%s673 + $0x34] sm:$0xf]
        %v1491 = vld [vmem:[%s673 + $0x38] sm:$0xf]
        %v1492 = vld [vmem:[%s673 + $0x3c] sm:$0xf]
        %v1495 = vunpack.c.l.b16 %v1471
        %v1496 = vunpack.c.l.b16 %v1472
        %v1497 = vpack.c.b16 %v1496, %v1495
        %v1502 = vunpack.c.l.b16 %v1477
        %v1503 = vunpack.c.l.b16 %v1478
        %v1504 = vunpack.c.l.b16 %v1479
        %v1505 = vunpack.c.l.b16 %v1480
        %v1506 = vpack.c.b16 %v1503, %v1502
        %v1507 = vpack.c.b16 %v1505, %v1504
        %v1511 = vsel %vm805, %v1497, 0
        %1513 = vmatpush.bf16.msra.mxu0 0
        %1514 = vmatpush.bf16.msra.mxu0 0
        %1515 = vmatpush.bf16.msra.mxu0 0
        %1516 = vmatpush.bf16.msra.mxu0 0
        %1517 = vmatpush.bf16.msra.mxu0 0
        %1518 = vmatpush.bf16.msra.mxu0 0
        %1519 = vmatpush.bf16.msra.mxu0 %v1507
        %1520 = vmatpush.bf16.msra.mxu0 %v1506
        %1521 = vmatmul.bf16.gmra.mxu0 %v1511
        %v1522 = vpop.f32.mrf.mxu0
        %v1523 = vadd.f32 0.0, %v1522
        %v1524 = vpop.f32.mrf.mxu0
        %v1525 = vadd.f32 0.0, %v1524
        %1526 = vdwg.mxu0
        %v1531 = vunpack.c.l.b16 %v1481
        %v1532 = vunpack.c.l.b16 %v1482
        %v1533 = vunpack.c.l.b16 %v1483
        %v1534 = vunpack.c.l.b16 %v1484
        %v1535 = vpack.c.b16 %v1532, %v1531
        %v1536 = vpack.c.b16 %v1534, %v1533
        %1539 = vmatpush.bf16.msra.mxu0 0
        %1540 = vmatpush.bf16.msra.mxu0 0
        %1541 = vmatpush.bf16.msra.mxu0 0
        %1542 = vmatpush.bf16.msra.mxu0 0
        %1543 = vmatpush.bf16.msra.mxu0 0
        %1544 = vmatpush.bf16.msra.mxu0 0
        %1545 = vmatpush.bf16.msra.mxu0 %v1536
        %1546 = vmatpush.bf16.msra.mxu0 %v1535
        %1547 = vmatmul.bf16.gmra.mxu0 %v1511
        %v1548 = vpop.f32.mrf.mxu0
        %v1549 = vadd.f32 0.0, %v1548
        %v1550 = vpop.f32.mrf.mxu0
        %v1551 = vadd.f32 0.0, %v1550
        %1552 = vdwg.mxu0
        %v1557 = vunpack.c.l.b16 %v1485
        %v1558 = vunpack.c.l.b16 %v1486
        %v1559 = vunpack.c.l.b16 %v1487
        %v1560 = vunpack.c.l.b16 %v1488
        %v1561 = vpack.c.b16 %v1558, %v1557
        %v1562 = vpack.c.b16 %v1560, %v1559
        %1565 = vmatpush.bf16.msra.mxu0 0
        %1566 = vmatpush.bf16.msra.mxu0 0
        %1567 = vmatpush.bf16.msra.mxu0 0
        %1568 = vmatpush.bf16.msra.mxu0 0
        %1569 = vmatpush.bf16.msra.mxu0 0
        %1570 = vmatpush.bf16.msra.mxu0 0
        %1571 = vmatpush.bf16.msra.mxu0 %v1562
        %1572 = vmatpush.bf16.msra.mxu0 %v1561
        %1573 = vmatmul.bf16.gmra.mxu0 %v1511
        %v1574 = vpop.f32.mrf.mxu0
        %v1575 = vadd.f32 0.0, %v1574
        %v1576 = vpop.f32.mrf.mxu0
        %v1577 = vadd.f32 0.0, %v1576
        %1578 = vdwg.mxu0
        %v1583 = vunpack.c.l.b16 %v1489
        %v1584 = vunpack.c.l.b16 %v1490
        %v1585 = vunpack.c.l.b16 %v1491
        %v1586 = vunpack.c.l.b16 %v1492
        %v1587 = vpack.c.b16 %v1584, %v1583
        %v1588 = vpack.c.b16 %v1586, %v1585
        %1591 = vmatpush.bf16.msra.mxu0 0
        %1592 = vmatpush.bf16.msra.mxu0 0
        %1593 = vmatpush.bf16.msra.mxu0 0
        %1594 = vmatpush.bf16.msra.mxu0 0
        %1595 = vmatpush.bf16.msra.mxu0 0
        %1596 = vmatpush.bf16.msra.mxu0 0
        %1597 = vmatpush.bf16.msra.mxu0 %v1588
        %1598 = vmatpush.bf16.msra.mxu0 %v1587
        %1599 = vmatmul.bf16.gmra.mxu0 %v1511
        %v1600 = vpop.f32.mrf.mxu0
        %v1601 = vadd.f32 0.0, %v1600
        %v1602 = vpop.f32.mrf.mxu0
        %v1603 = vadd.f32 0.0, %v1602
        %1604 = vdwg.mxu0
        %v1605 = vld [vmem:[%s678] sm:$0xf]
        %v1606 = vld [vmem:[%s678 + $0x4] sm:$0xf]
        %v1607 = vld [vmem:[%s678 + $0x8] sm:$0xf]
        %v1608 = vld [vmem:[%s678 + $0xc] sm:$0xf]
        %v1609 = vld [vmem:[%s678 + $0x10] sm:$0xf]
        %v1610 = vld [vmem:[%s678 + $0x14] sm:$0xf]
        %v1611 = vld [vmem:[%s678 + $0x18] sm:$0xf]
        %v1612 = vld [vmem:[%s678 + $0x1c] sm:$0xf]
        %v1613 = vld [vmem:[%s678 + $0x20] sm:$0xf]
        %v1614 = vld [vmem:[%s678 + $0x24] sm:$0xf]
        %v1615 = vld [vmem:[%s678 + $0x28] sm:$0xf]
        %v1616 = vld [vmem:[%s678 + $0x2c] sm:$0xf]
        %v1617 = vld [vmem:[%s678 + $0x30] sm:$0xf]
        %v1618 = vld [vmem:[%s678 + $0x34] sm:$0xf]
        %v1619 = vld [vmem:[%s678 + $0x38] sm:$0xf]
        %v1620 = vld [vmem:[%s678 + $0x3c] sm:$0xf]
        %v1623 = vunpack.c.l.b16 %v1475
        %v1624 = vunpack.c.l.b16 %v1476
        %v1625 = vpack.c.b16 %v1624, %v1623
        %v1630 = vunpack.c.l.b16 %v1605
        %v1631 = vunpack.c.l.b16 %v1606
        %v1632 = vunpack.c.l.b16 %v1607
        %v1633 = vunpack.c.l.b16 %v1608
        %v1634 = vpack.c.b16 %v1631, %v1630
        %v1635 = vpack.c.b16 %v1633, %v1632
        %v1639 = vsel %vm805, %v1625, 0
        %1641 = vmatpush.bf16.msra.mxu0 0
        %1642 = vmatpush.bf16.msra.mxu0 0
        %1643 = vmatpush.bf16.msra.mxu0 0
        %1644 = vmatpush.bf16.msra.mxu0 0
        %1645 = vmatpush.bf16.msra.mxu0 0
        %1646 = vmatpush.bf16.msra.mxu0 0
        %1647 = vmatpush.bf16.msra.mxu0 %v1635
        %1648 = vmatpush.bf16.msra.mxu0 %v1634
        %1649 = vmatmul.bf16.gmra.mxu0 %v1639
        %v1650 = vpop.f32.mrf.mxu0
        %v1651 = vadd.f32 0.0, %v1650
        %v1652 = vpop.f32.mrf.mxu0
        %v1653 = vadd.f32 0.0, %v1652
        %1654 = vdwg.mxu0
        %v1659 = vunpack.c.l.b16 %v1609
        %v1660 = vunpack.c.l.b16 %v1610
        %v1661 = vunpack.c.l.b16 %v1611
        %v1662 = vunpack.c.l.b16 %v1612
        %v1663 = vpack.c.b16 %v1660, %v1659
        %v1664 = vpack.c.b16 %v1662, %v1661
        %1667 = vmatpush.bf16.msra.mxu0 0
        %1668 = vmatpush.bf16.msra.mxu0 0
        %1669 = vmatpush.bf16.msra.mxu0 0
        %1670 = vmatpush.bf16.msra.mxu0 0
        %1671 = vmatpush.bf16.msra.mxu0 0
        %1672 = vmatpush.bf16.msra.mxu0 0
        %1673 = vmatpush.bf16.msra.mxu0 %v1664
        %1674 = vmatpush.bf16.msra.mxu0 %v1663
        %1675 = vmatmul.bf16.gmra.mxu0 %v1639
        %v1676 = vpop.f32.mrf.mxu0
        %v1677 = vadd.f32 0.0, %v1676
        %v1678 = vpop.f32.mrf.mxu0
        %v1679 = vadd.f32 0.0, %v1678
        %1680 = vdwg.mxu0
        %v1685 = vunpack.c.l.b16 %v1613
        %v1686 = vunpack.c.l.b16 %v1614
        %v1687 = vunpack.c.l.b16 %v1615
        %v1688 = vunpack.c.l.b16 %v1616
        %v1689 = vpack.c.b16 %v1686, %v1685
        %v1690 = vpack.c.b16 %v1688, %v1687
        %1693 = vmatpush.bf16.msra.mxu0 0
        %1694 = vmatpush.bf16.msra.mxu0 0
        %1695 = vmatpush.bf16.msra.mxu0 0
        %1696 = vmatpush.bf16.msra.mxu0 0
        %1697 = vmatpush.bf16.msra.mxu0 0
        %1698 = vmatpush.bf16.msra.mxu0 0
        %1699 = vmatpush.bf16.msra.mxu0 %v1690
        %1700 = vmatpush.bf16.msra.mxu0 %v1689
        %1701 = vmatmul.bf16.gmra.mxu0 %v1639
        %v1702 = vpop.f32.mrf.mxu0
        %v1703 = vadd.f32 0.0, %v1702
        %v1704 = vpop.f32.mrf.mxu0
        %v1705 = vadd.f32 0.0, %v1704
        %1706 = vdwg.mxu0
        %v1711 = vunpack.c.l.b16 %v1617
        %v1712 = vunpack.c.l.b16 %v1618
        %v1713 = vunpack.c.l.b16 %v1619
        %v1714 = vunpack.c.l.b16 %v1620
        %v1715 = vpack.c.b16 %v1712, %v1711
        %v1716 = vpack.c.b16 %v1714, %v1713
        %1719 = vmatpush.bf16.msra.mxu0 0
        %1720 = vmatpush.bf16.msra.mxu0 0
        %1721 = vmatpush.bf16.msra.mxu0 0
        %1722 = vmatpush.bf16.msra.mxu0 0
        %1723 = vmatpush.bf16.msra.mxu0 0
        %1724 = vmatpush.bf16.msra.mxu0 0
        %1725 = vmatpush.bf16.msra.mxu0 %v1716
        %1726 = vmatpush.bf16.msra.mxu0 %v1715
        %1727 = vmatmul.bf16.gmra.mxu0 %v1639
        %v1728 = vpop.f32.mrf.mxu0
        %v1729 = vadd.f32 0.0, %v1728
        %v1730 = vpop.f32.mrf.mxu0
        %v1731 = vadd.f32 0.0, %v1730
        %1732 = vdwg.mxu0
        %v1733 = vld [vmem:[%s4] sm:$0xff]
        %v1734 = vld [vmem:[%s4 + $0x8] sm:$0xff]
        %v1735 = vpack.c.bf16 %v1523, %v1523
        %v1736 = vpack.c.bf16 %v1525, %v1525
        %v1737 = vpack.c.bf16 %v1549, %v1549
        %v1738 = vpack.c.bf16 %v1551, %v1551
        %v1739 = vpack.c.bf16 %v1575, %v1575
        %v1740 = vpack.c.bf16 %v1577, %v1577
        %v1741 = vpack.c.bf16 %v1601, %v1601
        %v1742 = vpack.c.bf16 %v1603, %v1603
        %v1743 = vpack.c.bf16 %v1651, %v1651
        %v1744 = vpack.c.bf16 %v1653, %v1653
        %v1745 = vpack.c.bf16 %v1677, %v1677
        %v1746 = vpack.c.bf16 %v1679, %v1679
        %v1747 = vpack.c.bf16 %v1703, %v1703
        %v1748 = vpack.c.bf16 %v1705, %v1705
        %v1749 = vpack.c.bf16 %v1729, %v1729
        %v1750 = vpack.c.bf16 %v1731, %v1731
        %v1753 = vunpack.c.l.b16 %v1735
        %v1754 = vunpack.c.l.b16 %v1736
        %v1755 = vpack.c.b16 %v1754, %v1753
        %v1758 = vunpack.c.l.b16 %v1743
        %v1759 = vunpack.c.l.b16 %v1744
        %v1760 = vpack.c.b16 %v1759, %v1758
        %v1762 = vsel %vm1003, %v1755, 0
        %v1765 = vsel %vm1003, %v1760, 0
        %1767 = vmatpush.bf16.xpose.msra.mxu0 0
        %1768 = vmatpush.bf16.xpose.msra.mxu0 0
        %1769 = vmatpush.bf16.xpose.msra.mxu0 0
        %1770 = vmatpush.bf16.xpose.msra.mxu0 0
        %1771 = vmatpush.bf16.xpose.msra.mxu0 0
        %1772 = vmatpush.bf16.xpose.msra.mxu0 0
        %1773 = vmatpush.bf16.xpose.msra.mxu0 0
        %1774 = vmatpush.bf16.xpose.msra.mxu0 %v1765
        %1775 = vmatmul.bf16.gmra.mxu0 %v1762
        %v1776 = vpop.f32.mrf.mxu0
        %v1777 = vadd.f32 %v1733, %v1776
        %v1778 = vpop.f32.mrf.mxu0
        %v1779 = vadd.f32 %v1734, %v1778
        %1780 = vdwg.mxu0
        %v1783 = vunpack.c.l.b16 %v1737
        %v1784 = vunpack.c.l.b16 %v1738
        %v1785 = vpack.c.b16 %v1784, %v1783
        %v1788 = vunpack.c.l.b16 %v1745
        %v1789 = vunpack.c.l.b16 %v1746
        %v1790 = vpack.c.b16 %v1789, %v1788
        %v1792 = vsel %vm1003, %v1785, 0
        %v1795 = vsel %vm1003, %v1790, 0
        %1797 = vmatpush.bf16.xpose.msra.mxu0 0
        %1798 = vmatpush.bf16.xpose.msra.mxu0 0
        %1799 = vmatpush.bf16.xpose.msra.mxu0 0
        %1800 = vmatpush.bf16.xpose.msra.mxu0 0
        %1801 = vmatpush.bf16.xpose.msra.mxu0 0
        %1802 = vmatpush.bf16.xpose.msra.mxu0 0
        %1803 = vmatpush.bf16.xpose.msra.mxu0 0
        %1804 = vmatpush.bf16.xpose.msra.mxu0 %v1795
        %1805 = vmatmul.bf16.gmra.mxu0 %v1792
        %v1806 = vpop.f32.mrf.mxu0
        %v1807 = vadd.f32 %v1733, %v1806
        %v1808 = vpop.f32.mrf.mxu0
        %v1809 = vadd.f32 %v1734, %v1808
        %1810 = vdwg.mxu0
        %v1813 = vunpack.c.l.b16 %v1739
        %v1814 = vunpack.c.l.b16 %v1740
        %v1815 = vpack.c.b16 %v1814, %v1813
        %v1818 = vunpack.c.l.b16 %v1747
        %v1819 = vunpack.c.l.b16 %v1748
        %v1820 = vpack.c.b16 %v1819, %v1818
        %v1822 = vsel %vm1003, %v1815, 0
        %v1825 = vsel %vm1003, %v1820, 0
        %1827 = vmatpush.bf16.xpose.msra.mxu0 0
        %1828 = vmatpush.bf16.xpose.msra.mxu0 0
        %1829 = vmatpush.bf16.xpose.msra.mxu0 0
        %1830 = vmatpush.bf16.xpose.msra.mxu0 0
        %1831 = vmatpush.bf16.xpose.msra.mxu0 0
        %1832 = vmatpush.bf16.xpose.msra.mxu0 0
        %1833 = vmatpush.bf16.xpose.msra.mxu0 0
        %1834 = vmatpush.bf16.xpose.msra.mxu0 %v1825
        %1835 = vmatmul.bf16.gmra.mxu0 %v1822
        %v1836 = vpop.f32.mrf.mxu0
        %v1837 = vadd.f32 %v1733, %v1836
        %v1838 = vpop.f32.mrf.mxu0
        %v1839 = vadd.f32 %v1734, %v1838
        %1840 = vdwg.mxu0
        %v1843 = vunpack.c.l.b16 %v1741
        %v1844 = vunpack.c.l.b16 %v1742
        %v1845 = vpack.c.b16 %v1844, %v1843
        %v1848 = vunpack.c.l.b16 %v1749
        %v1849 = vunpack.c.l.b16 %v1750
        %v1850 = vpack.c.b16 %v1849, %v1848
        %v1852 = vsel %vm1003, %v1845, 0
        %v1855 = vsel %vm1003, %v1850, 0
        %1857 = vmatpush.bf16.xpose.msra.mxu0 0
        %1858 = vmatpush.bf16.xpose.msra.mxu0 0
        %1859 = vmatpush.bf16.xpose.msra.mxu0 0
        %1860 = vmatpush.bf16.xpose.msra.mxu0 0
        %1861 = vmatpush.bf16.xpose.msra.mxu0 0
        %1862 = vmatpush.bf16.xpose.msra.mxu0 0
        %1863 = vmatpush.bf16.xpose.msra.mxu0 0
        %1864 = vmatpush.bf16.xpose.msra.mxu0 %v1855
        %1865 = vmatmul.bf16.gmra.mxu0 %v1852
        %v1866 = vpop.f32.mrf.mxu0
        %v1867 = vadd.f32 %v1733, %v1866
        %v1868 = vpop.f32.mrf.mxu0
        %v1869 = vadd.f32 %v1734, %v1868
        %1870 = vdwg.mxu0
        %v1871 = vsel %vm1105, %v1777, -inf
        %1872 = vmax.xlane.f32.xlu0 %v1871
        %v1873 = vpop.xlane.xlu0 %1872
        %v1874 = vsel %vm1105, %v1779, -inf
        %1875 = vmax.xlane.f32.xlu0 %v1874
        %v1876 = vpop.xlane.xlu0 %1875
        %v1877 = vsel %vm1105, %v1807, -inf
        %1878 = vmax.xlane.f32.xlu0 %v1877
        %v1879 = vpop.xlane.xlu0 %1878
        %v1880 = vsel %vm1105, %v1809, -inf
        %1881 = vmax.xlane.f32.xlu0 %v1880
        %v1882 = vpop.xlane.xlu0 %1881
        %v1883 = vsel %vm1105, %v1837, -inf
        %1884 = vmax.xlane.f32.xlu0 %v1883
        %v1885 = vpop.xlane.xlu0 %1884
        %v1886 = vsel %vm1105, %v1839, -inf
        %1887 = vmax.xlane.f32.xlu0 %v1886
        %v1888 = vpop.xlane.xlu0 %1887
        %v1889 = vsel %vm1105, %v1867, -inf
        %1890 = vmax.xlane.f32.xlu0 %v1889
        %v1891 = vpop.xlane.xlu0 %1890
        %v1892 = vsel %vm1105, %v1869, -inf
        %1893 = vmax.xlane.f32.xlu0 %v1892
        %v1894 = vpop.xlane.xlu0 %1893
        %v1895 = vsub.f32 %v1777, %v1873
        %v1896 = vsub.f32 %v1779, %v1876
        %v1897 = vsub.f32 %v1807, %v1879
        %v1898 = vsub.f32 %v1809, %v1882
        %v1899 = vsub.f32 %v1837, %v1885
        %v1900 = vsub.f32 %v1839, %v1888
        %v1901 = vsub.f32 %v1867, %v1891
        %v1902 = vsub.f32 %v1869, %v1894
        %v1903 = vmul.f32 %v1895, 1.442695
        %v1904 = vpow.pop %v1903
        %v1905 = vmul.f32 %v1896, 1.442695
        %v1906 = vpow.pop %v1905
        %v1907 = vmul.f32 %v1897, 1.442695
        %v1908 = vpow.pop %v1907
        %v1909 = vmul.f32 %v1898, 1.442695
        %v1910 = vpow.pop %v1909
        %v1911 = vmul.f32 %v1899, 1.442695
        %v1912 = vpow.pop %v1911
        %v1913 = vmul.f32 %v1900, 1.442695
        %v1914 = vpow.pop %v1913
        %v1915 = vmul.f32 %v1901, 1.442695
        %v1916 = vpow.pop %v1915
        %v1917 = vmul.f32 %v1902, 1.442695
        %v1918 = vpow.pop %v1917
        %v1919 = vsel %vm1105, %v1904, 0.0
        %1920 = vadd.xlane.f32.xlu0 %v1919
        %v1921 = vpop.xlane.xlu0 %1920
        %v1922 = vsel %vm1105, %v1906, 0.0
        %1923 = vadd.xlane.f32.xlu0 %v1922
        %v1924 = vpop.xlane.xlu0 %1923
        %v1925 = vsel %vm1105, %v1908, 0.0
        %1926 = vadd.xlane.f32.xlu0 %v1925
        %v1927 = vpop.xlane.xlu0 %1926
        %v1928 = vsel %vm1105, %v1910, 0.0
        %1929 = vadd.xlane.f32.xlu0 %v1928
        %v1930 = vpop.xlane.xlu0 %1929
        %v1931 = vsel %vm1105, %v1912, 0.0
        %1932 = vadd.xlane.f32.xlu0 %v1931
        %v1933 = vpop.xlane.xlu0 %1932
        %v1934 = vsel %vm1105, %v1914, 0.0
        %1935 = vadd.xlane.f32.xlu0 %v1934
        %v1936 = vpop.xlane.xlu0 %1935
        %v1937 = vsel %vm1105, %v1916, 0.0
        %1938 = vadd.xlane.f32.xlu0 %v1937
        %v1939 = vpop.xlane.xlu0 %1938
        %v1940 = vsel %vm1105, %v1918, 0.0
        %1941 = vadd.xlane.f32.xlu0 %v1940
        %v1942 = vpop.xlane.xlu0 %1941
        %v1943 = vrcp.pop %v1921
        %v1944 = vrcp.pop %v1924
        %v1945 = vrcp.pop %v1927
        %v1946 = vrcp.pop %v1930
        %v1947 = vrcp.pop %v1933
        %v1948 = vrcp.pop %v1936
        %v1949 = vrcp.pop %v1939
        %v1950 = vrcp.pop %v1942
        %v1951 = vmul.f32 %v1904, %v1943
        %v1952 = vmul.f32 %v1906, %v1944
        %v1953 = vmul.f32 %v1908, %v1945
        %v1954 = vmul.f32 %v1910, %v1946
        %v1955 = vmul.f32 %v1912, %v1947
        %v1956 = vmul.f32 %v1914, %v1948
        %v1957 = vmul.f32 %v1916, %v1949
        %v1958 = vmul.f32 %v1918, %v1950
        %v1959 = vpack.c.bf16 %v1951, %v1951
        %v1960 = vpack.c.bf16 %v1952, %v1952
        %v1961 = vpack.c.bf16 %v1953, %v1953
        %v1962 = vpack.c.bf16 %v1954, %v1954
        %v1963 = vpack.c.bf16 %v1955, %v1955
        %v1964 = vpack.c.bf16 %v1956, %v1956
        %v1965 = vpack.c.bf16 %v1957, %v1957
        %v1966 = vpack.c.bf16 %v1958, %v1958
        %v1969 = vunpack.c.l.b16 %v1959
        %v1970 = vunpack.c.l.b16 %v1960
        %v1971 = vpack.c.b16 %v1970, %v1969
        %1972 = vrot.lane.b32.xlu0 %v1760, 120
        %v1973 = vpop.permute.xlu0 %1972
        %v1976 = vsel %vm1105, %v1971, 0
        %1978 = vmatpush.bf16.msra.mxu0 0
        %1979 = vmatpush.bf16.msra.mxu0 0
        %1980 = vmatpush.bf16.msra.mxu0 0
        %1981 = vmatpush.bf16.msra.mxu0 0
        %1982 = vmatpush.bf16.msra.mxu0 0
        %1983 = vmatpush.bf16.msra.mxu0 0
        %1984 = vmatpush.bf16.msra.mxu0 0
        %1985 = vmatpush.bf16.msra.mxu0 %v1973
        %1986 = vmatmul.bf16.gmra.mxu0 %v1976
        %v1987 = vpop.f32.mrf.mxu0
        %v1988 = vadd.f32 0.0, %v1987
        %v1989 = vpop.f32.mrf.mxu0
        %v1990 = vadd.f32 0.0, %v1989
        %1991 = vdwg.mxu0
        %v1994 = vunpack.c.l.b16 %v1961
        %v1995 = vunpack.c.l.b16 %v1962
        %v1996 = vpack.c.b16 %v1995, %v1994
        %1997 = vrot.lane.b32.xlu0 %v1790, 120
        %v1998 = vpop.permute.xlu0 %1997
        %v2001 = vsel %vm1105, %v1996, 0
        %2003 = vmatpush.bf16.msra.mxu0 0
        %2004 = vmatpush.bf16.msra.mxu0 0
        %2005 = vmatpush.bf16.msra.mxu0 0
        %2006 = vmatpush.bf16.msra.mxu0 0
        %2007 = vmatpush.bf16.msra.mxu0 0
        %2008 = vmatpush.bf16.msra.mxu0 0
        %2009 = vmatpush.bf16.msra.mxu0 0
        %2010 = vmatpush.bf16.msra.mxu0 %v1998
        %2011 = vmatmul.bf16.gmra.mxu0 %v2001
        %v2012 = vpop.f32.mrf.mxu0
        %v2013 = vadd.f32 0.0, %v2012
        %v2014 = vpop.f32.mrf.mxu0
        %v2015 = vadd.f32 0.0, %v2014
        %2016 = vdwg.mxu0
        %v2019 = vunpack.c.l.b16 %v1963
        %v2020 = vunpack.c.l.b16 %v1964
        %v2021 = vpack.c.b16 %v2020, %v2019
        %2022 = vrot.lane.b32.xlu0 %v1820, 120
        %v2023 = vpop.permute.xlu0 %2022
        %v2026 = vsel %vm1105, %v2021, 0
        %2028 = vmatpush.bf16.msra.mxu0 0
        %2029 = vmatpush.bf16.msra.mxu0 0
        %2030 = vmatpush.bf16.msra.mxu0 0
        %2031 = vmatpush.bf16.msra.mxu0 0
        %2032 = vmatpush.bf16.msra.mxu0 0
        %2033 = vmatpush.bf16.msra.mxu0 0
        %2034 = vmatpush.bf16.msra.mxu0 0
        %2035 = vmatpush.bf16.msra.mxu0 %v2023
        %2036 = vmatmul.bf16.gmra.mxu0 %v2026
        %v2037 = vpop.f32.mrf.mxu0
        %v2038 = vadd.f32 0.0, %v2037
        %v2039 = vpop.f32.mrf.mxu0
        %v2040 = vadd.f32 0.0, %v2039
        %2041 = vdwg.mxu0
        %v2044 = vunpack.c.l.b16 %v1965
        %v2045 = vunpack.c.l.b16 %v1966
        %v2046 = vpack.c.b16 %v2045, %v2044
        %2047 = vrot.lane.b32.xlu0 %v1850, 120
        %v2048 = vpop.permute.xlu0 %2047
        %v2051 = vsel %vm1105, %v2046, 0
        %2053 = vmatpush.bf16.msra.mxu0 0
        %2054 = vmatpush.bf16.msra.mxu0 0
        %2055 = vmatpush.bf16.msra.mxu0 0
        %2056 = vmatpush.bf16.msra.mxu0 0
        %2057 = vmatpush.bf16.msra.mxu0 0
        %2058 = vmatpush.bf16.msra.mxu0 0
        %2059 = vmatpush.bf16.msra.mxu0 0
        %2060 = vmatpush.bf16.msra.mxu0 %v2048
        %2061 = vmatmul.bf16.gmra.mxu0 %v2051
        %v2062 = vpop.f32.mrf.mxu0
        %v2063 = vadd.f32 0.0, %v2062
        %v2064 = vpop.f32.mrf.mxu0
        %v2065 = vadd.f32 0.0, %v2064
        %2066 = vdwg.mxu0
        %v2067 = vld [vmem:[%s683] sm:$0xf]
        %v2068 = vld [vmem:[%s683 + $0x4] sm:$0xf]
        %v2069 = vld [vmem:[%s683 + $0x8] sm:$0xf]
        %v2070 = vld [vmem:[%s683 + $0xc] sm:$0xf]
        %v2071 = vpack.c.bf16 %v1988, %v1988
        %v2072 = vpack.c.bf16 %v1990, %v1990
        %v2073 = vpack.c.bf16 %v2013, %v2013
        %v2074 = vpack.c.bf16 %v2015, %v2015
        %v2075 = vpack.c.bf16 %v2038, %v2038
        %v2076 = vpack.c.bf16 %v2040, %v2040
        %v2077 = vpack.c.bf16 %v2063, %v2063
        %v2078 = vpack.c.bf16 %v2065, %v2065
        %v2081 = vunpack.c.l.b16 %v2071
        %v2082 = vunpack.c.l.b16 %v2072
        %v2083 = vpack.c.b16 %v2082, %v2081
        %v2085 = vsel %vm1003, %v2083, 0
        %v2088 = vsel %vm1322, %v2067, 0
        %2090 = vmatpush.bf16.msra.mxu0 0
        %2091 = vmatpush.bf16.msra.mxu0 0
        %2092 = vmatpush.bf16.msra.mxu0 0
        %2093 = vmatpush.bf16.msra.mxu0 0
        %2094 = vmatpush.bf16.msra.mxu0 0
        %2095 = vmatpush.bf16.msra.mxu0 0
        %2096 = vmatpush.bf16.msra.mxu0 0
        %2097 = vmatpush.bf16.msra.mxu0 %v2088
        %2098 = vmatmul.bf16.gmra.mxu0 %v2085
        %v2099 = vpop.f32.mrf.mxu0
        %v2100 = vadd.f32 0.0, %v2099
        %v2101 = vpop.f32.mrf.mxu0
        %v2102 = vadd.f32 0.0, %v2101
        %2103 = vdwg.mxu0
        %v2106 = vunpack.c.l.b16 %v2073
        %v2107 = vunpack.c.l.b16 %v2074
        %v2108 = vpack.c.b16 %v2107, %v2106
        %v2110 = vsel %vm1003, %v2108, 0
        %v2113 = vsel %vm1322, %v2068, 0
        %2115 = vmatpush.bf16.msra.mxu0 0
        %2116 = vmatpush.bf16.msra.mxu0 0
        %2117 = vmatpush.bf16.msra.mxu0 0
        %2118 = vmatpush.bf16.msra.mxu0 0
        %2119 = vmatpush.bf16.msra.mxu0 0
        %2120 = vmatpush.bf16.msra.mxu0 0
        %2121 = vmatpush.bf16.msra.mxu0 0
        %2122 = vmatpush.bf16.msra.mxu0 %v2113
        %2123 = vmatmul.bf16.gmra.mxu0 %v2110
        %v2124 = vpop.f32.mrf.mxu0
        %v2125 = vadd.f32 0.0, %v2124
        %v2126 = vpop.f32.mrf.mxu0
        %v2127 = vadd.f32 0.0, %v2126
        %2128 = vdwg.mxu0
        %v2131 = vunpack.c.l.b16 %v2075
        %v2132 = vunpack.c.l.b16 %v2076
        %v2133 = vpack.c.b16 %v2132, %v2131
        %v2135 = vsel %vm1003, %v2133, 0
        %v2138 = vsel %vm1322, %v2069, 0
        %2140 = vmatpush.bf16.msra.mxu0 0
        %2141 = vmatpush.bf16.msra.mxu0 0
        %2142 = vmatpush.bf16.msra.mxu0 0
        %2143 = vmatpush.bf16.msra.mxu0 0
        %2144 = vmatpush.bf16.msra.mxu0 0
        %2145 = vmatpush.bf16.msra.mxu0 0
        %2146 = vmatpush.bf16.msra.mxu0 0
        %2147 = vmatpush.bf16.msra.mxu0 %v2138
        %2148 = vmatmul.bf16.gmra.mxu0 %v2135
        %v2149 = vpop.f32.mrf.mxu0
        %v2150 = vadd.f32 0.0, %v2149
        %v2151 = vpop.f32.mrf.mxu0
        %v2152 = vadd.f32 0.0, %v2151
        %2153 = vdwg.mxu0
        %v2156 = vunpack.c.l.b16 %v2077
        %v2157 = vunpack.c.l.b16 %v2078
        %v2158 = vpack.c.b16 %v2157, %v2156
        %v2160 = vsel %vm1003, %v2158, 0
        %v2163 = vsel %vm1322, %v2070, 0
        %2165 = vmatpush.bf16.msra.mxu0 0
        %2166 = vmatpush.bf16.msra.mxu0 0
        %2167 = vmatpush.bf16.msra.mxu0 0
        %2168 = vmatpush.bf16.msra.mxu0 0
        %2169 = vmatpush.bf16.msra.mxu0 0
        %2170 = vmatpush.bf16.msra.mxu0 0
        %2171 = vmatpush.bf16.msra.mxu0 0
        %2172 = vmatpush.bf16.msra.mxu0 %v2163
        %2173 = vmatmul.bf16.gmra.mxu0 %v2160
        %v2174 = vpop.f32.mrf.mxu0
        %v2175 = vadd.f32 0.0, %v2174
        %v2176 = vpop.f32.mrf.mxu0
        %v2177 = vadd.f32 0.0, %v2176
        %2178 = vdwg.mxu0
        %v2179 = vsel %vm805, %v2100, 0.0
        %v2180 = vsel %vm805, %v2125, 0.0
        %v2181 = vadd.f32 %v2179, %v2180
        %v2182 = vsel %vm805, %v2150, 0.0
        %v2183 = vadd.f32 %v2181, %v2182
        %v2184 = vsel %vm805, %v2175, 0.0
        %v2185 = vadd.f32 %v2183, %v2184
        %v2186 = vsel %vm805, %v2102, 0.0
        %v2187 = vsel %vm805, %v2127, 0.0
        %v2188 = vadd.f32 %v2186, %v2187
        %v2189 = vsel %vm805, %v2152, 0.0
        %v2190 = vadd.f32 %v2188, %v2189
        %v2191 = vsel %vm805, %v2177, 0.0
        %v2192 = vadd.f32 %v2190, %v2191
        %v2193 = vadd.f32 %v1429, %v2185
        %v2194 = vadd.f32 %v1430, %v2192
        %v2195 = vld [vmem:[%s686] sm:$0x1]
        %v2196 = vmul.f32 %v2193, %v2193
        %v2197 = vmul.f32 %v2194, %v2194
        %v2198 = vsel %vm805, %v2196, 0.0
        %2199 = vadd.xlane.f32.xlu0 %v2198
        %v2200 = vpop.xlane.xlu0 %2199
        %v2201 = vsel %vm805, %v2197, 0.0
        %2202 = vadd.xlane.f32.xlu0 %v2201
        %v2203 = vpop.xlane.xlu0 %2202
        %v2204 = vmul.f32 %v2200, %v818
        %v2205 = vmul.f32 %v2203, %v818
        %v2206 = vadd.f32 %v2204, 1e-06
        %v2207 = vadd.f32 %v2205, 1e-06
        %v2208 = vrsqrt.pop %v2206
        %v2209 = vmul.f32 %v2208, %v2206
        %v2210 = vmul.f32 %v2209, %v2208
        %v2211 = vmul.f32 0.5, %v2210
        %v2212 = vsub.f32 1.5, %v2211
        %v2213 = vmul.f32 %v2208, %v2212
        %vm2214 = vweird.f32 %v2206
        %vm2215 = vweird.f32 %v2208
        %vm2216 = vmor %vm2214, %vm2215
        %v2217 = vsel %vm2216, %v2208, %v2213
        %v2218 = vrsqrt.pop %v2207
        %v2219 = vmul.f32 %v2218, %v2207
        %v2220 = vmul.f32 %v2219, %v2218
        %v2221 = vmul.f32 0.5, %v2220
        %v2222 = vsub.f32 1.5, %v2221
        %v2223 = vmul.f32 %v2218, %v2222
        %vm2224 = vweird.f32 %v2207
        %vm2225 = vweird.f32 %v2218
        %vm2226 = vmor %vm2224, %vm2225
        %v2227 = vsel %vm2226, %v2218, %v2223
        %v2228 = vmul.f32 %v2193, %v2217
        %v2229 = vmul.f32 %v2194, %v2227
        %v2231 = vperm.slane %v2195, 0
        %v2233 = vmul.f32 %v2228, %v2231
        %v2234 = vmul.f32 %v2229, %v2231
        %v2235 = vld [vmem:[%s691] sm:$0xf]
        %v2236 = vld [vmem:[%s691 + $0x4] sm:$0xf]
        %v2237 = vld [vmem:[%s691 + $0x8] sm:$0xf]
        %v2238 = vld [vmem:[%s691 + $0xc] sm:$0xf]
        %v2239 = vpack.c.bf16 %v2234, %v2233
        %v2244 = vunpack.c.l.b16 %v2235
        %v2245 = vunpack.c.l.b16 %v2236
        %v2246 = vunpack.c.l.b16 %v2237
        %v2247 = vunpack.c.l.b16 %v2238
        %v2248 = vpack.c.b16 %v2245, %v2244
        %v2249 = vpack.c.b16 %v2247, %v2246
        %v2253 = vsel %vm805, %v2239, 0
        %2255 = vmatpush.bf16.msra.mxu0 0
        %2256 = vmatpush.bf16.msra.mxu0 0
        %2257 = vmatpush.bf16.msra.mxu0 0
        %2258 = vmatpush.bf16.msra.mxu0 0
        %2259 = vmatpush.bf16.msra.mxu0 0
        %2260 = vmatpush.bf16.msra.mxu0 0
        %2261 = vmatpush.bf16.msra.mxu0 %v2249
        %2262 = vmatpush.bf16.msra.mxu0 %v2248
        %2263 = vmatmul.bf16.gmra.mxu0 %v2253
        %v2264 = vpop.f32.mrf.mxu0
        %v2265 = vadd.f32 0.0, %v2264
        %v2266 = vpop.f32.mrf.mxu0
        %v2267 = vadd.f32 0.0, %v2266
        %2268 = vdwg.mxu0
        %v2269 = vmax.f32 %v2265, 0.0
        %v2270 = vmax.f32 %v2267, 0.0
        %v2271 = vld [vmem:[%s696] sm:$0xf]
        %v2272 = vld [vmem:[%s696 + $0x4] sm:$0xf]
        %v2273 = vld [vmem:[%s696 + $0x8] sm:$0xf]
        %v2274 = vld [vmem:[%s696 + $0xc] sm:$0xf]
        %v2275 = vld [vmem:[%s696 + $0x10] sm:$0xf]
        %v2276 = vld [vmem:[%s696 + $0x14] sm:$0xf]
        %v2277 = vld [vmem:[%s696 + $0x18] sm:$0xf]
        %v2278 = vld [vmem:[%s696 + $0x1c] sm:$0xf]
        %v2279 = vpack.c.bf16 %v2270, %v2269
        %v2288 = vunpack.c.l.b16 %v2271
        %v2289 = vunpack.c.l.b16 %v2272
        %v2290 = vunpack.c.l.b16 %v2273
        %v2291 = vunpack.c.l.b16 %v2274
        %v2292 = vunpack.c.l.b16 %v2275
        %v2293 = vunpack.c.l.b16 %v2276
        %v2294 = vunpack.c.l.b16 %v2277
        %v2295 = vunpack.c.l.b16 %v2278
        %v2296 = vpack.c.b16 %v2289, %v2288
        %v2297 = vpack.c.b16 %v2291, %v2290
        %v2298 = vpack.c.b16 %v2293, %v2292
        %v2299 = vpack.c.b16 %v2295, %v2294
        %vm2304 = vcmask 523264
        %v2306 = vsel %vm2304, %v2279, 0
        %2308 = vmatpush.bf16.msra.mxu0 0
        %2309 = vmatpush.bf16.msra.mxu0 0
        %2310 = vmatpush.bf16.msra.mxu0 0
        %2311 = vmatpush.bf16.msra.mxu0 0
        %2312 = vmatpush.bf16.msra.mxu0 %v2299
        %2313 = vmatpush.bf16.msra.mxu0 %v2298
        %2314 = vmatpush.bf16.msra.mxu0 %v2297
        %2315 = vmatpush.bf16.msra.mxu0 %v2296
        %2316 = vmatmul.bf16.gmra.mxu0 %v2306
        %v2317 = vpop.f32.mrf.mxu0
        %v2318 = vadd.f32 0.0, %v2317
        %v2319 = vpop.f32.mrf.mxu0
        %v2320 = vadd.f32 0.0, %v2319
        %2321 = vdwg.mxu0
        %v2322 = vadd.f32 %v2193, %v2318
        %v2323 = vadd.f32 %v2194, %v2320
        %2324 = vst.msk [vmem:[#allocation2] sm:$0xff] %vm805, %v2322
        %2325 = vst.msk [vmem:[#allocation2 + $0x8] sm:$0xff] %vm805, %v2323
        %p2326 = scmp.eq.s32.totalorder %s29, 1
        // Predicated region
        $region93: #{merge_t5_forward.3} parent=87 // pred_check
          %p2327 = pneg %p2326
        $region94: #{merge_t5_forward.3} parent=87 // pred_check_branch
          %2329 = sbr.rel (%p2327) target = $region96
        $region95: #{merge_t5_forward.3} parent=87 // pred_region
          %v2330 = vld [vmem:[%s5] sm:$0x1]
          %v2331 = vmul.f32 %v2322, %v2322
          %v2332 = vmul.f32 %v2323, %v2323
          %v2333 = vsel %vm805, %v2331, 0.0
          %2334 = vadd.xlane.f32.xlu0 %v2333
          %v2335 = vpop.xlane.xlu0 %2334
          %v2336 = vsel %vm805, %v2332, 0.0
          %2337 = vadd.xlane.f32.xlu0 %v2336
          %v2338 = vpop.xlane.xlu0 %2337
          %v2339 = vmul.f32 %v2335, %v818
          %v2340 = vmul.f32 %v2338, %v818
          %v2341 = vadd.f32 %v2339, 1e-06
          %v2342 = vadd.f32 %v2340, 1e-06
          %v2343 = vrsqrt.pop %v2341
          %v2344 = vmul.f32 %v2343, %v2341
          %v2345 = vmul.f32 %v2344, %v2343
          %v2346 = vmul.f32 0.5, %v2345
          %v2347 = vsub.f32 1.5, %v2346
          %v2348 = vmul.f32 %v2343, %v2347
          %vm2349 = vweird.f32 %v2341
          %vm2350 = vweird.f32 %v2343
          %vm2351 = vmor %vm2349, %vm2350
          %v2352 = vsel %vm2351, %v2343, %v2348
          %v2353 = vrsqrt.pop %v2342
          %v2354 = vmul.f32 %v2353, %v2342
          %v2355 = vmul.f32 %v2354, %v2353
          %v2356 = vmul.f32 0.5, %v2355
          %v2357 = vsub.f32 1.5, %v2356
          %v2358 = vmul.f32 %v2353, %v2357
          %vm2359 = vweird.f32 %v2342
          %vm2360 = vweird.f32 %v2353
          %vm2361 = vmor %vm2359, %vm2360
          %v2362 = vsel %vm2361, %v2353, %v2358
          %v2363 = vmul.f32 %v2322, %v2352
          %v2364 = vmul.f32 %v2323, %v2362
          %v2366 = vperm.slane %v2330, 0
          %v2368 = vmul.f32 %v2363, %v2366
          %v2369 = vmul.f32 %v2364, %v2366
          %v2370 = vmul.f32 %v2368, 0.17677669
          %v2371 = vmul.f32 %v2369, 0.17677669
          %v2372 = vld [vmem:[%s6] sm:$0xf]
          %v2373 = vld [vmem:[%s6 + $0x4] sm:$0xf]
          %v2374 = vld [vmem:[%s6 + $0x8] sm:$0xf]
          %v2375 = vld [vmem:[%s6 + $0xc] sm:$0xf]
          %v2376 = vpack.c.bf16 %v2371, %v2370
          %v2381 = vunpack.c.l.b16 %v2372
          %v2382 = vunpack.c.l.b16 %v2373
          %v2383 = vunpack.c.l.b16 %v2374
          %v2384 = vunpack.c.l.b16 %v2375
          %v2385 = vpack.c.b16 %v2382, %v2381
          %v2386 = vpack.c.b16 %v2384, %v2383
          %v2390 = vsel %vm805, %v2376, 0
          %2392 = vmatpush.bf16.msra.mxu0 0
          %2393 = vmatpush.bf16.msra.mxu0 0
          %2394 = vmatpush.bf16.msra.mxu0 0
          %2395 = vmatpush.bf16.msra.mxu0 0
          %2396 = vmatpush.bf16.msra.mxu0 0
          %2397 = vmatpush.bf16.msra.mxu0 0
          %2398 = vmatpush.bf16.msra.mxu0 %v2386
          %2399 = vmatpush.bf16.msra.mxu0 %v2385
          %2400 = vmatmul.bf16.gmra.mxu0 %v2390
          %v2401 = vpop.f32.mrf.mxu0
          %v2402 = vadd.f32 0.0, %v2401
          %v2403 = vpop.f32.mrf.mxu0
          %v2404 = vadd.f32 0.0, %v2403
          %2405 = vdwg.mxu0
          %2406 = vst [vmem:[#allocation3] sm:$0xff] %v2402
          %2407 = vst [vmem:[#allocation3 + $0x8] sm:$0xff] %v2404
        $region96: #{merge_t5_forward.3} parent=87 // pred_fallthru
          _
        // Predicated region
        $region97: #{merge_t5_forward.3} parent=87 // pred_check
          %p2408 = pneg %p449
        $region98: #{merge_t5_forward.3} parent=87 // pred_check_branch
          %2410 = sbr.rel (%p2408) target = $region100
        $region99: #{merge_t5_forward.3} parent=87 // pred_region
          %2412 = vsyncadd [#allocation4], 0
          %s2413 = sshll.u32 [#allocation3], 4
          %s2414 = int_to_ptr.vmem [resolvable:$true] %s2413
          %s2415 = sshll.u32 %s17, 4
          %s2416 = int_to_ptr.hbm [resolvable:$true] %s2415
          %2421 = dma.vmem_to_hbm [thread:$0]  %s2414, 256, %s2416, [#allocation4], 128, 128, 8
        $region100: #{merge_t5_forward.3} parent=87 // pred_fallthru
          _
        // Predicated region
        $region101: #{merge_t5_forward.3} parent=87 // pred_check
          %p2422 = pneg %p449
        $region102: #{merge_t5_forward.3} parent=87 // pred_check_branch
          %2424 = sbr.rel (%p2422) target = $region104
        $region103: #{merge_t5_forward.3} parent=87 // pred_region
          %2426 = dma.done [#allocation4], 256
        $region104: #{merge_t5_forward.3} parent=87 // pred_fallthru
          _
      $region88: #{merge_t5_forward.3} parent=5 // pred_fallthru
        _
      %p2427 = scmp.le.s32.totalorder 2, %s24
      // Predicated region
      $region105: #{merge_t5_forward.3} parent=5 // pred_check
        %p2428 = pneg %p2427
      $region106: #{merge_t5_forward.3} parent=5 // pred_check_branch
        %2430 = sbr.rel (%p2428) target = $region108
      $region107: #{merge_t5_forward.3} parent=5 // pred_region
        %s2431 = ssub.s32 %s24, 2
      $region108: #{merge_t5_forward.3} parent=5 // pred_fallthru
        _
    $region6: #{merge_t5_forward.3} parent=1 // loop_footer
      %s28 = sadd.s32 1, %s24
    $region7: #{merge_t5_forward.3} parent=1 // loop_footer_branch
      %23 = sbr.rel target = $region3
    $region8: #{merge_t5_forward.3} parent=1 // loop_exit
      _
    %2432 = vsyncpa [#allocation4], 1
    %s2433 = scalar_lea.sflag [#allocation4], 1
    %2434 = vsyncpa %s2433, 1

</llo_original>
